<compile_context>
chip_gen: v6e
topology: v6e:2x2x1
jax: 0.10.0
libtpu: 0.0.40
codegen_flags: <defaults>
</compile_context>

<pallas_src>
import math

import jax
import jax.numpy as jnp
import numpy as np
from jax.experimental import pallas as pl
from jax.experimental.pallas import tpu as pltpu

_HP = jax.lax.Precision.HIGHEST  # host-side / reference matmul precision


def _mish(x):
    return x * jnp.tanh(jax.nn.softplus(x))


def _round_up(n, m):
    return ((n + m - 1) // m) * m


# ---------------------------------------------------------------------------
# Host-side helpers (trace-time glue)
# ---------------------------------------------------------------------------
def _pick_tiling(B, L, cap_lanes=1024):
    """Batch rows per grid step (Bt) such that N = Bt*L is a multiple of 128 and
    (when possible) <= cap_lanes.  Returns (Bt, B_pad) with Bt | B_pad."""
    g = 128 // math.gcd(L, 128)                  # min batch rows for 128-lane alignment
    bt = max(g, (cap_lanes // (g * L)) * g)      # as many aligned groups as fit the cap
    bt = min(bt, _round_up(B, g))                # never wider than the padded batch
    return bt, _round_up(B, bt)


def _build_slab(pieces, width, dtype):
    """Stack 2-D pieces into one [R, width] slab (single DMA, single VMEM buffer);
    every piece starts at a sublane offset that is a multiple of 8.
    Returns (slab, [(row0, rows, cols), ...]) for static in-kernel slicing."""
    offs, rows, row0 = [], [], 0
    for p in pieces:
        p = p.astype(jnp.float32)
        r, c = p.shape
        assert c <= width
        offs.append((row0, r, c))
        rp = _round_up(r, 8)
        rows.append(jnp.pad(p, ((0, rp - r), (0, width - c))))
        row0 += rp
    return jnp.concatenate(rows, axis=0).astype(dtype), offs


# ---------------------------------------------------------------------------
# Fused forward: single pallas_call, grid over batch tiles
# ---------------------------------------------------------------------------
def _fused_forward(params, xp, emb_b, *, B_pad, Bt, L, mxu_dtype):
    f32 = jnp.float32
    Cin0 = xp.shape[0]
    dim = emb_b.shape[1]
    num_tiles = B_pad // Bt
    N = Bt * L

    layers = params["layers"]
    couts = [lp["w1a"].shape[0] for (lp, _, _) in layers]
    c_last = couts[-1]

    # ---- time-path weights (stay f32; per-batch width, tiny matmuls) ----
    w1t = params["tmlp_w1"].T.astype(f32)                                   # [4*dim, dim]
    w2t = params["tmlp_w2"].T.astype(f32)                                   # [dim, 4*dim]
    wt_all = jnp.concatenate([lp["wt"] for (lp, _, _) in layers], 0).astype(f32)  # [sumC,dim]

    # ---- conv-weight slab (MXU operands; bf16 by default) ----
    #   per layer: [w1a; w1b; (wd)]  -> conv1 taps + fused 1x1 downsample, one MXU pass
    #              [w2a; w2b]        -> conv2 taps
    meta, wpieces = [], []
    for (lp, d, use_ds) in layers:
        cout, cin = lp["w1a"].shape
        taps = [lp["w1a"], lp["w1b"]] + ([lp["wd"]] if use_ds else [])
        wpieces.append(jnp.concatenate(taps, 0))                            # [(2|3)*cout, cin]
        wpieces.append(jnp.concatenate([lp["w2a"], lp["w2b"]], 0))          # [2*cout, cout]
        meta.append((cin, cout, d, use_ds))
    wmax = max(int(p.shape[1]) for p in wpieces)
    wslab, woffs = _build_slab(wpieces, wmax, mxu_dtype)

    # ---- folded final head: final_conv(1x1) + flatten('b h t->b (h t)') + Linear ----
    #   pred[b] = sum_{c,h} y[b][c,h] * M[c,h] + c0
    wl_mat = params["Wl"][0].reshape(L, -1).T                               # [dim, L]
    M = jnp.dot(params["wf"].T, wl_mat, precision=_HP)                      # [c_last, L]
    M_tiled = jnp.tile(M, (1, Bt))                                          # [c_last, N]
    c0 = (jnp.sum(params["bf"][:, 0] * jnp.sum(wl_mat, axis=1))
          + params["bl"][0]).reshape(1, 1)

    # ---- bias slab ([R, 1] f32, one DMA) ----
    bias_pieces = []

    def addb(p):
        bias_pieces.append(p.astype(f32))
        return len(bias_pieces) - 1

    i_tb1 = addb(params["tmlp_b1"].reshape(-1, 1))
    i_tb2 = addb(params["tmlp_b2"].reshape(-1, 1))
    i_bt = addb(jnp.concatenate([lp["bt"] for (lp, _, _) in layers], 0))    # [sumC, 1]
    per_layer_b = []
    for (lp, _, use_ds) in layers:
        per_layer_b.append((addb(lp["b1"]), addb(lp["b2"]),
                            addb(lp["bd"]) if use_ds else -1))
    i_c0 = addb(c0)
    bslab, boffs = _build_slab(bias_pieces, 1, f32)

    # ---- lane-wide constants slab ([*, N] f32, one DMA) ----
    lane = np.arange(N)
    lane_pieces = [M_tiled]                                                 # piece 0
    dil_piece = {}
    for (_, _, d, _) in meta:
        if d not in dil_piece:
            dil_piece[d] = len(lane_pieces)
            # zero lanes whose intra-batch position < d (causal zero-pad + batch boundary)
            lane_pieces.append(jnp.asarray(((lane % L) >= d).astype(np.float32)[None, :]))
    i_ett = len(lane_pieces)
    ett_np = (lane[None, :] // L == np.arange(Bt)[:, None]).astype(np.float32)   # [Bt, N]
    lane_pieces.append(jnp.asarray(ett_np))
    laneslab, loffs = _build_slab(lane_pieces, N, f32)
    et = jnp.asarray(ett_np.T)                                              # [N, Bt]

    ch_off = [0]
    for c in couts:
        ch_off.append(ch_off[-1] + c)

    def kernel(x_ref, e_ref, w_ref, w1t_ref, w2t_ref, wt_ref, b_ref, lane_ref,
               et_ref, out_ref):
        def bias(i):
            r0, r, _ = boffs[i]
            return b_ref[r0:r0 + r, :]

        def wblk(i):
            r0, r, c = woffs[i]
            return w_ref[r0:r0 + r, :c]

        def lblk(i):
            r0, r, _ = loffs[i]
            return lane_ref[r0:r0 + r, :]

        # Time path at per-batch width Bt (no per-lane redundancy):
        #   t = Linear(Mish(Linear(emb))); every block's bias = Linear(Mish(t)) stacked.
        e = e_ref[0]                                                        # [dim, Bt]
        h1 = jnp.dot(w1t_ref[...], e, preferred_element_type=f32) + bias(i_tb1)
        tv = jnp.dot(w2t_ref[...], _mish(h1), preferred_element_type=f32) + bias(i_tb2)
        tb = jnp.dot(wt_ref[...], _mish(tv), preferred_element_type=f32) + bias(i_bt)
        # broadcast batch columns -> lanes with one tiny matmul against the 0/1 indicator
        tb_lane = jnp.dot(tb, lblk(i_ett), preferred_element_type=f32)      # [sumC, N]

        y = x_ref[...]                                                      # [Cin0, N] f32
        for li, (cin, cout, d, use_ds) in enumerate(meta):
            mask = lblk(dil_piece[d])                                       # [1, N]
            ib1, ib2, ibd = per_layer_b[li]

            # conv1 taps (+ fused 1x1 downsample) in ONE stacked MXU pass
            q = jnp.dot(wblk(2 * li), y.astype(mxu_dtype),
                        preferred_element_type=f32)                         # [(2|3)*cout, N]
            # causal dilated shift: XLU roll + lane mask (== zero left-pad per batch block)
            h = pltpu.roll(q[:cout], d, 1) * mask + q[cout:2 * cout] + bias(ib1)
            h = jnp.maximum(h, 0.0) + tb_lane[ch_off[li]:ch_off[li + 1], :]  # net1(x)+time

            # conv2 (both taps stacked)
            r = jnp.dot(wblk(2 * li + 1), h.astype(mxu_dtype),
                        preferred_element_type=f32)                         # [2*cout, N]
            o = pltpu.roll(r[:cout], d, 1) * mask + r[cout:] + bias(ib2)
            o = jnp.maximum(o, 0.0)

            # residual (downsample rows came out of the conv1 stacked matmul)
            res = (q[2 * cout:] + bias(ibd)) if use_ds else y
            y = jnp.maximum(o + res, 0.0)

        # folded head: elementwise * M, per-batch lane reduction, channel reduction
        red = jnp.dot(y * lblk(0), et_ref[...], preferred_element_type=f32)  # [c_last, Bt]
        out_ref[0] = jnp.sum(red, axis=0, keepdims=True) + bias(i_c0)

    def grid_invariant(a):
        nd = len(a.shape)
        return pl.BlockSpec(a.shape, lambda i, _nd=nd: (0,) * _nd)

    in_specs = [
        pl.BlockSpec((Cin0, N), lambda i: (0, i)),         # activations: tiled along lanes
        pl.BlockSpec((1, dim, Bt), lambda i: (i, 0, 0)),   # per-batch time embedding
        grid_invariant(wslab),
        grid_invariant(w1t),
        grid_invariant(w2t),
        grid_invariant(wt_all),
        grid_invariant(bslab),
        grid_invariant(laneslab),
        grid_invariant(et),
    ]

    out = pl.pallas_call(
        kernel,
        out_shape=jax.ShapeDtypeStruct((num_tiles, 1, Bt), f32),
        grid=(num_tiles,),
        in_specs=in_specs,
        out_specs=pl.BlockSpec((1, 1, Bt), lambda i: (i, 0, 0)),
        compiler_params=pltpu.CompilerParams(dimension_semantics=("parallel",)),
    )(xp, emb_b, wslab, w1t, w2t, wt_all, bslab, laneslab, et)
    return out


# ---------------------------------------------------------------------------
# Full forward (host glue + fused kernel)
# ---------------------------------------------------------------------------
def temporal_value_net_forward(params, x, cond, time, *, dim,
                               mxu_dtype=jnp.bfloat16, cap_lanes=1024):
    # x: [B, horizon, transition_dim]; cond is unused by the reference forward.
    del cond
    B, L, T = x.shape
    Bt, B_pad = _pick_tiling(B, L, cap_lanes)
    num_tiles = B_pad // Bt

    # channel-major, batch packed into lanes (lane = b*L + h); pad batch with zero rows
    xc = jnp.transpose(x, (2, 0, 1)).astype(jnp.float32)                 # [T, B, L]
    if B_pad != B:
        xc = jnp.pad(xc, ((0, 0), (0, B_pad - B), (0, 0)))
    xp = xc.reshape(T, B_pad * L)

    # SinusoidalPosEmb (tiny host glue), PER BATCH (not per lane)
    half = dim // 2
    freqs = jnp.exp(jnp.arange(half, dtype=jnp.float32)
                    * -(math.log(10000.0) / (half - 1)))
    emb = time.astype(jnp.float32)[:, None] * freqs[None, :]
    emb = jnp.concatenate([jnp.sin(emb), jnp.cos(emb)], axis=-1)         # [B, dim]
    if B_pad != B:
        emb = jnp.pad(emb, ((0, B_pad - B), (0, 0)))
    emb_b = emb.reshape(num_tiles, Bt, dim).transpose(0, 2, 1)           # [tiles, dim, Bt]

    out = _fused_forward(params, xp, emb_b, B_pad=B_pad, Bt=Bt, L=L,
                         mxu_dtype=mxu_dtype)
    return out.reshape(B_pad, 1)[:B]


# ---------------------------------------------------------------------------
# Pure-JAX reference (same math, no Pallas) for the correctness check
# ---------------------------------------------------------------------------
def reference_forward(params, x, time, *, dim):
    B, H, T = x.shape
    xc = jnp.transpose(x, (0, 2, 1))                                     # [B, C, L]
    half = dim // 2
    freqs = jnp.exp(jnp.arange(half, dtype=jnp.float32)
                    * -(math.log(10000.0) / (half - 1)))
    emb = time[:, None] * freqs[None, :]
    emb = jnp.concatenate([jnp.sin(emb), jnp.cos(emb)], axis=-1)
    t = jnp.dot(_mish(jnp.dot(emb, params["tmlp_w1"], precision=_HP) + params["tmlp_b1"]),
                params["tmlp_w2"], precision=_HP) + params["tmlp_b2"]

    def shift(v, d):
        return jnp.pad(v, ((0, 0), (0, 0), (d, 0)))[:, :, :H]

    for (lp, d, use_ds) in params["layers"]:
        h = (jnp.einsum("oc,bcl->bol", lp["w1a"], shift(xc, d), precision=_HP)
             + jnp.einsum("oc,bcl->bol", lp["w1b"], xc, precision=_HP) + lp["b1"][None])
        h = jax.nn.relu(h)                                               # net1
        tb = jnp.dot(_mish(t), lp["wt"].T, precision=_HP) + lp["bt"][:, 0][None]
        h = h + tb[:, :, None]                                           # + time_mlp(t)
        out = (jnp.einsum("oc,bcl->bol", lp["w2a"], shift(h, d), precision=_HP)
               + jnp.einsum("oc,bcl->bol", lp["w2b"], h, precision=_HP) + lp["b2"][None])
        out = jax.nn.relu(out)                                           # net2
        res = xc if not use_ds else (jnp.einsum("oc,bcl->bol", lp["wd"], xc, precision=_HP)
                                     + lp["bd"][None])
        xc = jax.nn.relu(out + res)

    z = jnp.einsum("dc,bcl->bdl", params["wf"], xc, precision=_HP) + params["bf"][None]
    flat = jnp.transpose(z, (0, 2, 1)).reshape(B, -1)                    # 'b t h -> b (h t)'
    return jnp.dot(flat, params["Wl"].T, precision=_HP) + params["bl"][None]


# ---------------------------------------------------------------------------
# Deterministic synthetic parameters (shapes follow the module __init__)
# ---------------------------------------------------------------------------
def init_params(key, *, horizon, transition_dim, dim, dim_mults, out_dim):
    assert out_dim == 1, "final-head folding assumes out_dim == 1 (module default)"
    channels = [dim * m for m in dim_mults]
    keys = iter(jax.random.split(key, 16 + 16 * len(channels)))

    def n(shape, s=0.1):
        return jax.random.normal(next(keys), shape, jnp.float32) * s

    params = {
        "tmlp_w1": n((dim, dim * 4)), "tmlp_b1": n((1, dim * 4), 0.02),
        "tmlp_w2": n((dim * 4, dim)), "tmlp_b2": n((1, dim), 0.02),
        "layers": [],
    }
    for i, cout in enumerate(channels):
        cin = transition_dim if i == 0 else channels[i - 1]
        dilation = 2 ** (i // 2)
        use_ds = cin != cout
        lp = {
            # conv weight [Cout, Cin, 2] split into tap0 (past) and tap1 (current)
            "w1a": n((cout, cin)), "w1b": n((cout, cin)), "b1": n((cout, 1), 0.02),
            "wt": n((cout, dim)), "bt": n((cout, 1), 0.02),
            "w2a": n((cout, cout)), "w2b": n((cout, cout)), "b2": n((cout, 1), 0.02),
        }
        if use_ds:
            lp["wd"] = n((cout, cin))
            lp["bd"] = n((cout, 1), 0.02)
        params["layers"].append((lp, dilation, use_ds))

    params["wf"] = n((dim, channels[-1]))        # final_conv (1x1)
    params["bf"] = n((dim, 1), 0.02)
    params["Wl"] = n((out_dim, dim * horizon))   # nn.Linear(dim*horizon, out_dim)
    params["bl"] = n((out_dim,), 0.02)
    return params


if __name__ == "__main__":
    B, horizon, transition_dim = 2, 16, 4
    dim, dim_mults, out_dim = 32, (1, 2, 2, 1), 1

    key = jax.random.PRNGKey(0)
    kp, kx = jax.random.split(key, 2)
    params = init_params(kp, horizon=horizon, transition_dim=transition_dim,
                         dim=dim, dim_mults=dim_mults, out_dim=out_dim)

    x = jax.random.normal(kx, (B, horizon, transition_dim), jnp.float32)
    cond = None  # unused by the forward pass
    time_steps = jnp.array([3.0, 7.0], dtype=jnp.float32)

    ref = reference_forward(params, x, time_steps, dim=dim)

    # 1) f32 MXU operands: tight check against the pure-JAX reference.
    pred32 = temporal_value_net_forward(params, x, cond, time_steps, dim=dim,
                                        mxu_dtype=jnp.float32)
    pred32 = jax.block_until_ready(pred32)
    np.testing.assert_allclose(np.asarray(pred32), np.asarray(ref), rtol=1e-3, atol=1e-3)

    # 2) bf16 MXU operands / f32 accumulation (default perf config per review):
    #    looser tolerance because conv-weight + activation operands are rounded to bf16.
    pred = temporal_value_net_forward(params, x, cond, time_steps, dim=dim)
    pred = jax.block_until_ready(pred)
    np.testing.assert_allclose(np.asarray(pred), np.asarray(ref), rtol=3e-2, atol=3e-2)

    print("KERNEL_OK")
</pallas_src>

<mosaic_0001>
module attributes {stable_mosaic.version = 11 : i64} {
  func.func @kernel(%arg0: i32, %arg1: memref<4x128xf32, #tpu.memory_space<vmem>>, %arg2: memref<1x32x8xf32, #tpu.memory_space<vmem>>, %arg3: memref<896x64xf32, #tpu.memory_space<vmem>>, %arg4: memref<128x32xf32, #tpu.memory_space<vmem>>, %arg5: memref<32x128xf32, #tpu.memory_space<vmem>>, %arg6: memref<192x32xf32, #tpu.memory_space<vmem>>, %arg7: memref<872x1xf32, #tpu.memory_space<vmem>>, %arg8: memref<56x128xf32, #tpu.memory_space<vmem>>, %arg9: memref<128x8xf32, #tpu.memory_space<vmem>>, %arg10: memref<1x1x8xf32, #tpu.memory_space<vmem>>) attributes {dimension_semantics = [#tpu.dimension_semantics<parallel>], iteration_bounds = array<i64: 1>, scalar_prefetch = 0 : i64, scratch_operands = 0 : i64, tpu.core_type = #tpu.core_type<tc>, window_params = [{transform_indices = @transform_0, window_bounds = array<i64: 4, 128>}, {transform_indices = @transform_1, window_bounds = array<i64: 1, 32, 8>}, {pipeline_mode = #tpu.pipeline_mode<synchronous>, transform_indices = @transform_2, window_bounds = array<i64: 896, 64>}, {pipeline_mode = #tpu.pipeline_mode<synchronous>, transform_indices = @transform_3, window_bounds = array<i64: 128, 32>}, {pipeline_mode = #tpu.pipeline_mode<synchronous>, transform_indices = @transform_4, window_bounds = array<i64: 32, 128>}, {pipeline_mode = #tpu.pipeline_mode<synchronous>, transform_indices = @transform_5, window_bounds = array<i64: 192, 32>}, {pipeline_mode = #tpu.pipeline_mode<synchronous>, transform_indices = @transform_6, window_bounds = array<i64: 872, 1>}, {pipeline_mode = #tpu.pipeline_mode<synchronous>, transform_indices = @transform_7, window_bounds = array<i64: 56, 128>}, {pipeline_mode = #tpu.pipeline_mode<synchronous>, transform_indices = @transform_8, window_bounds = array<i64: 128, 8>}, {transform_indices = @transform_9, window_bounds = array<i64: 1, 1, 8>}]} {
    %c0 = arith.constant 0 : index
    %c0_0 = arith.constant 0 : index
    %c0_1 = arith.constant 0 : index
    %0 = vector.load %arg2[%c0, %c0_0, %c0_1] : memref<1x32x8xf32, #tpu.memory_space<vmem>>, vector<1x32x8xf32>
    %1 = vector.shape_cast %0 : vector<1x32x8xf32> to vector<32x8xf32>
    %c0_2 = arith.constant 0 : index
    %c0_3 = arith.constant 0 : index
    %2 = vector.load %arg4[%c0_2, %c0_3] : memref<128x32xf32, #tpu.memory_space<vmem>>, vector<128x32xf32>
    %cst = arith.constant dense<0.000000e+00> : vector<128x8xf32>
    %3 = tpu.matmul %2, %1, %cst {dimension_numbers = #tpu.dot_dimension_numbers<[1], [0], [0], [1], [0, 0, 1, 1], [], []>} : vector<128x32xf32>, vector<32x8xf32>, vector<128x8xf32> -> vector<128x8xf32>
    %c0_4 = arith.constant 0 : index
    %c0_5 = arith.constant 0 : index
    %4 = vector.load %arg7[%c0_4, %c0_5] : memref<872x1xf32, #tpu.memory_space<vmem>>, vector<128x1xf32>
    %5 = vector.broadcast %4 : vector<128x1xf32> to vector<128x8xf32>
    %6 = arith.addf %3, %5 : vector<128x8xf32>
    %c0_6 = arith.constant 0 : index
    %c0_7 = arith.constant 0 : index
    %7 = vector.load %arg5[%c0_6, %c0_7] : memref<32x128xf32, #tpu.memory_space<vmem>>, vector<32x128xf32>
    %cst_8 = arith.constant 0.000000e+00 : f32
    %8 = vector.broadcast %cst_8 : f32 to vector<128x8xf32>
    %9 = arith.maximumf %6, %8 : vector<128x8xf32>
    %10 = vector.broadcast %cst_8 : f32 to vector<128x8xf32>
    %11 = arith.subf %6, %10 : vector<128x8xf32>
    %12 = arith.cmpf one, %11, %11 : vector<128x8xf32>
    %13 = vector.broadcast %cst_8 : f32 to vector<128x8xf32>
    %14 = arith.addf %6, %13 : vector<128x8xf32>
    %15 = math.absf %11 : vector<128x8xf32>
    %cst_9 = arith.constant 0.000000e+00 : f32
    %16 = vector.broadcast %cst_9 : f32 to vector<128x8xf32>
    %17 = arith.subf %16, %15 : vector<128x8xf32>
    %18 = math.exp %17 : vector<128x8xf32>
    %19 = math.log1p %18 : vector<128x8xf32>
    %20 = arith.addf %9, %19 : vector<128x8xf32>
    %21 = arith.select %12, %14, %20 : vector<128x8xi1>, vector<128x8xf32>
    %22 = math.tanh %21 : vector<128x8xf32>
    %23 = arith.mulf %6, %22 : vector<128x8xf32>
    %cst_10 = arith.constant dense<0.000000e+00> : vector<32x8xf32>
    %24 = tpu.matmul %7, %23, %cst_10 {dimension_numbers = #tpu.dot_dimension_numbers<[1], [0], [0], [1], [0, 0, 1, 1], [], []>} : vector<32x128xf32>, vector<128x8xf32>, vector<32x8xf32> -> vector<32x8xf32>
    %c128 = arith.constant 128 : index
    %c0_11 = arith.constant 0 : index
    %25 = vector.load %arg7[%c128, %c0_11] : memref<872x1xf32, #tpu.memory_space<vmem>>, vector<32x1xf32>
    %26 = vector.broadcast %25 : vector<32x1xf32> to vector<32x8xf32>
    %27 = arith.addf %24, %26 : vector<32x8xf32>
    %c0_12 = arith.constant 0 : index
    %c0_13 = arith.constant 0 : index
    %28 = vector.load %arg6[%c0_12, %c0_13] : memref<192x32xf32, #tpu.memory_space<vmem>>, vector<192x32xf32>
    %cst_14 = arith.constant 0.000000e+00 : f32
    %29 = vector.broadcast %cst_14 : f32 to vector<32x8xf32>
    %30 = arith.maximumf %27, %29 : vector<32x8xf32>
    %31 = vector.broadcast %cst_14 : f32 to vector<32x8xf32>
    %32 = arith.subf %27, %31 : vector<32x8xf32>
    %33 = arith.cmpf one, %32, %32 : vector<32x8xf32>
    %34 = vector.broadcast %cst_14 : f32 to vector<32x8xf32>
    %35 = arith.addf %27, %34 : vector<32x8xf32>
    %36 = math.absf %32 : vector<32x8xf32>
    %cst_15 = arith.constant 0.000000e+00 : f32
    %37 = vector.broadcast %cst_15 : f32 to vector<32x8xf32>
    %38 = arith.subf %37, %36 : vector<32x8xf32>
    %39 = math.exp %38 : vector<32x8xf32>
    %40 = math.log1p %39 : vector<32x8xf32>
    %41 = arith.addf %30, %40 : vector<32x8xf32>
    %42 = arith.select %33, %35, %41 : vector<32x8xi1>, vector<32x8xf32>
    %43 = math.tanh %42 : vector<32x8xf32>
    %44 = arith.mulf %27, %43 : vector<32x8xf32>
    %cst_16 = arith.constant dense<0.000000e+00> : vector<192x8xf32>
    %45 = tpu.matmul %28, %44, %cst_16 {dimension_numbers = #tpu.dot_dimension_numbers<[1], [0], [0], [1], [0, 0, 1, 1], [], []>} : vector<192x32xf32>, vector<32x8xf32>, vector<192x8xf32> -> vector<192x8xf32>
    %c160 = arith.constant 160 : index
    %c0_17 = arith.constant 0 : index
    %46 = vector.load %arg7[%c160, %c0_17] : memref<872x1xf32, #tpu.memory_space<vmem>>, vector<192x1xf32>
    %47 = vector.broadcast %46 : vector<192x1xf32> to vector<192x8xf32>
    %48 = arith.addf %45, %47 : vector<192x8xf32>
    %c48 = arith.constant 48 : index
    %c0_18 = arith.constant 0 : index
    %49 = vector.load %arg8[%c48, %c0_18] : memref<56x128xf32, #tpu.memory_space<vmem>>, vector<8x128xf32>
    %cst_19 = arith.constant dense<0.000000e+00> : vector<192x128xf32>
    %50 = tpu.matmul %48, %49, %cst_19 {dimension_numbers = #tpu.dot_dimension_numbers<[1], [0], [0], [1], [0, 0, 1, 1], [], []>} : vector<192x8xf32>, vector<8x128xf32>, vector<192x128xf32> -> vector<192x128xf32>
    %c0_20 = arith.constant 0 : index
    %c0_21 = arith.constant 0 : index
    %51 = vector.load %arg1[%c0_20, %c0_21] : memref<4x128xf32, #tpu.memory_space<vmem>>, vector<4x128xf32>
    %c32 = arith.constant 32 : index
    %c0_22 = arith.constant 0 : index
    %52 = vector.load %arg8[%c32, %c0_22] : memref<56x128xf32, #tpu.memory_space<vmem>>, vector<1x128xf32>
    %c0_23 = arith.constant 0 : index
    %c0_24 = arith.constant 0 : index
    %53 = vector.load %arg3[%c0_23, %c0_24] : memref<896x64xf32, #tpu.memory_space<vmem>>, vector<96x4xf32>
    %cst_25 = arith.constant dense<0.000000e+00> : vector<96x128xf32>
    %54 = tpu.matmul %53, %51, %cst_25 {dimension_numbers = #tpu.dot_dimension_numbers<[1], [0], [0], [1], [0, 0, 1, 1], [], []>} : vector<96x4xf32>, vector<4x128xf32>, vector<96x128xf32> -> vector<96x128xf32>
    %55 = vector.extract_strided_slice %54 {offsets = [0, 0], sizes = [32, 128], strides = [1, 1]} : vector<96x128xf32> to vector<32x128xf32>
    %c1_i32 = arith.constant 1 : i32
    %56 = tpu.dynamic_rotate %55 by %c1_i32 dim 1 : vector<32x128xf32>, i32 -> vector<32x128xf32>
    %57 = vector.broadcast %52 : vector<1x128xf32> to vector<32x128xf32>
    %58 = arith.mulf %56, %57 : vector<32x128xf32>
    %59 = vector.extract_strided_slice %54 {offsets = [32, 0], sizes = [32, 128], strides = [1, 1]} : vector<96x128xf32> to vector<32x128xf32>
    %60 = arith.addf %58, %59 : vector<32x128xf32>
    %c352 = arith.constant 352 : index
    %c0_26 = arith.constant 0 : index
    %61 = vector.load %arg7[%c352, %c0_26] : memref<872x1xf32, #tpu.memory_space<vmem>>, vector<32x1xf32>
    %62 = vector.broadcast %61 : vector<32x1xf32> to vector<32x128xf32>
    %63 = arith.addf %60, %62 : vector<32x128xf32>
    %cst_27 = arith.constant 0.000000e+00 : f32
    %64 = vector.broadcast %cst_27 : f32 to vector<32x128xf32>
    %65 = arith.maximumf %63, %64 : vector<32x128xf32>
    %66 = vector.extract_strided_slice %50 {offsets = [0, 0], sizes = [32, 128], strides = [1, 1]} : vector<192x128xf32> to vector<32x128xf32>
    %67 = arith.addf %65, %66 : vector<32x128xf32>
    %c96 = arith.constant 96 : index
    %c0_28 = arith.constant 0 : index
    %68 = vector.load %arg3[%c96, %c0_28] : memref<896x64xf32, #tpu.memory_space<vmem>>, vector<64x32xf32>
    %cst_29 = arith.constant dense<0.000000e+00> : vector<64x128xf32>
    %69 = tpu.matmul %68, %67, %cst_29 {dimension_numbers = #tpu.dot_dimension_numbers<[1], [0], [0], [1], [0, 0, 1, 1], [], []>} : vector<64x32xf32>, vector<32x128xf32>, vector<64x128xf32> -> vector<64x128xf32>
    %70 = vector.extract_strided_slice %69 {offsets = [0, 0], sizes = [32, 128], strides = [1, 1]} : vector<64x128xf32> to vector<32x128xf32>
    %c1_i32_30 = arith.constant 1 : i32
    %71 = tpu.dynamic_rotate %70 by %c1_i32_30 dim 1 : vector<32x128xf32>, i32 -> vector<32x128xf32>
    %72 = vector.broadcast %52 : vector<1x128xf32> to vector<32x128xf32>
    %73 = arith.mulf %71, %72 : vector<32x128xf32>
    %74 = vector.extract_strided_slice %69 {offsets = [32, 0], sizes = [32, 128], strides = [1, 1]} : vector<64x128xf32> to vector<32x128xf32>
    %75 = arith.addf %73, %74 : vector<32x128xf32>
    %c384 = arith.constant 384 : index
    %c0_31 = arith.constant 0 : index
    %76 = vector.load %arg7[%c384, %c0_31] : memref<872x1xf32, #tpu.memory_space<vmem>>, vector<32x1xf32>
    %77 = vector.broadcast %76 : vector<32x1xf32> to vector<32x128xf32>
    %78 = arith.addf %75, %77 : vector<32x128xf32>
    %cst_32 = arith.constant 0.000000e+00 : f32
    %79 = vector.broadcast %cst_32 : f32 to vector<32x128xf32>
    %80 = arith.maximumf %78, %79 : vector<32x128xf32>
    %81 = vector.extract_strided_slice %54 {offsets = [64, 0], sizes = [32, 128], strides = [1, 1]} : vector<96x128xf32> to vector<32x128xf32>
    %c416 = arith.constant 416 : index
    %c0_33 = arith.constant 0 : index
    %82 = vector.load %arg7[%c416, %c0_33] : memref<872x1xf32, #tpu.memory_space<vmem>>, vector<32x1xf32>
    %83 = vector.broadcast %82 : vector<32x1xf32> to vector<32x128xf32>
    %84 = arith.addf %81, %83 : vector<32x128xf32>
    %85 = arith.addf %80, %84 : vector<32x128xf32>
    %cst_34 = arith.constant 0.000000e+00 : f32
    %86 = vector.broadcast %cst_34 : f32 to vector<32x128xf32>
    %87 = arith.maximumf %85, %86 : vector<32x128xf32>
    %c32_35 = arith.constant 32 : index
    %c0_36 = arith.constant 0 : index
    %88 = vector.load %arg8[%c32_35, %c0_36] : memref<56x128xf32, #tpu.memory_space<vmem>>, vector<1x128xf32>
    %c160_37 = arith.constant 160 : index
    %c0_38 = arith.constant 0 : index
    %89 = vector.load %arg3[%c160_37, %c0_38] : memref<896x64xf32, #tpu.memory_space<vmem>>, vector<192x32xf32>
    %cst_39 = arith.constant dense<0.000000e+00> : vector<192x128xf32>
    %90 = tpu.matmul %89, %87, %cst_39 {dimension_numbers = #tpu.dot_dimension_numbers<[1], [0], [0], [1], [0, 0, 1, 1], [], []>} : vector<192x32xf32>, vector<32x128xf32>, vector<192x128xf32> -> vector<192x128xf32>
    %91 = vector.extract_strided_slice %90 {offsets = [0, 0], sizes = [64, 128], strides = [1, 1]} : vector<192x128xf32> to vector<64x128xf32>
    %c1_i32_40 = arith.constant 1 : i32
    %92 = tpu.dynamic_rotate %91 by %c1_i32_40 dim 1 : vector<64x128xf32>, i32 -> vector<64x128xf32>
    %93 = vector.broadcast %88 : vector<1x128xf32> to vector<64x128xf32>
    %94 = arith.mulf %92, %93 : vector<64x128xf32>
    %95 = vector.extract_strided_slice %90 {offsets = [64, 0], sizes = [64, 128], strides = [1, 1]} : vector<192x128xf32> to vector<64x128xf32>
    %96 = arith.addf %94, %95 : vector<64x128xf32>
    %c448 = arith.constant 448 : index
    %c0_41 = arith.constant 0 : index
    %97 = vector.load %arg7[%c448, %c0_41] : memref<872x1xf32, #tpu.memory_space<vmem>>, vector<64x1xf32>
    %98 = vector.broadcast %97 : vector<64x1xf32> to vector<64x128xf32>
    %99 = arith.addf %96, %98 : vector<64x128xf32>
    %cst_42 = arith.constant 0.000000e+00 : f32
    %100 = vector.broadcast %cst_42 : f32 to vector<64x128xf32>
    %101 = arith.maximumf %99, %100 : vector<64x128xf32>
    %102 = vector.extract_strided_slice %50 {offsets = [32, 0], sizes = [64, 128], strides = [1, 1]} : vector<192x128xf32> to vector<64x128xf32>
    %103 = arith.addf %101, %102 : vector<64x128xf32>
    %c352_43 = arith.constant 352 : index
    %c0_44 = arith.constant 0 : index
    %104 = vector.load %arg3[%c352_43, %c0_44] : memref<896x64xf32, #tpu.memory_space<vmem>>, vector<128x64xf32>
    %cst_45 = arith.constant dense<0.000000e+00> : vector<128x128xf32>
    %105 = tpu.matmul %104, %103, %cst_45 {dimension_numbers = #tpu.dot_dimension_numbers<[1], [0], [0], [1], [0, 0, 1, 1], [], []>} : vector<128x64xf32>, vector<64x128xf32>, vector<128x128xf32> -> vector<128x128xf32>
    %106 = vector.extract_strided_slice %105 {offsets = [0, 0], sizes = [64, 128], strides = [1, 1]} : vector<128x128xf32> to vector<64x128xf32>
    %c1_i32_46 = arith.constant 1 : i32
    %107 = tpu.dynamic_rotate %106 by %c1_i32_46 dim 1 : vector<64x128xf32>, i32 -> vector<64x128xf32>
    %108 = vector.broadcast %88 : vector<1x128xf32> to vector<64x128xf32>
    %109 = arith.mulf %107, %108 : vector<64x128xf32>
    %110 = vector.extract_strided_slice %105 {offsets = [64, 0], sizes = [64, 128], strides = [1, 1]} : vector<128x128xf32> to vector<64x128xf32>
    %111 = arith.addf %109, %110 : vector<64x128xf32>
    %c512 = arith.constant 512 : index
    %c0_47 = arith.constant 0 : index
    %112 = vector.load %arg7[%c512, %c0_47] : memref<872x1xf32, #tpu.memory_space<vmem>>, vector<64x1xf32>
    %113 = vector.broadcast %112 : vector<64x1xf32> to vector<64x128xf32>
    %114 = arith.addf %111, %113 : vector<64x128xf32>
    %cst_48 = arith.constant 0.000000e+00 : f32
    %115 = vector.broadcast %cst_48 : f32 to vector<64x128xf32>
    %116 = arith.maximumf %114, %115 : vector<64x128xf32>
    %117 = vector.extract_strided_slice %90 {offsets = [128, 0], sizes = [64, 128], strides = [1, 1]} : vector<192x128xf32> to vector<64x128xf32>
    %c576 = arith.constant 576 : index
    %c0_49 = arith.constant 0 : index
    %118 = vector.load %arg7[%c576, %c0_49] : memref<872x1xf32, #tpu.memory_space<vmem>>, vector<64x1xf32>
    %119 = vector.broadcast %118 : vector<64x1xf32> to vector<64x128xf32>
    %120 = arith.addf %117, %119 : vector<64x128xf32>
    %121 = arith.addf %116, %120 : vector<64x128xf32>
    %cst_50 = arith.constant 0.000000e+00 : f32
    %122 = vector.broadcast %cst_50 : f32 to vector<64x128xf32>
    %123 = arith.maximumf %121, %122 : vector<64x128xf32>
    %c40 = arith.constant 40 : index
    %c0_51 = arith.constant 0 : index
    %124 = vector.load %arg8[%c40, %c0_51] : memref<56x128xf32, #tpu.memory_space<vmem>>, vector<1x128xf32>
    %c480 = arith.constant 480 : index
    %c0_52 = arith.constant 0 : index
    %125 = vector.load %arg3[%c480, %c0_52] : memref<896x64xf32, #tpu.memory_space<vmem>>, vector<128x64xf32>
    %cst_53 = arith.constant dense<0.000000e+00> : vector<128x128xf32>
    %126 = tpu.matmul %125, %123, %cst_53 {dimension_numbers = #tpu.dot_dimension_numbers<[1], [0], [0], [1], [0, 0, 1, 1], [], []>} : vector<128x64xf32>, vector<64x128xf32>, vector<128x128xf32> -> vector<128x128xf32>
    %127 = vector.extract_strided_slice %126 {offsets = [0, 0], sizes = [64, 128], strides = [1, 1]} : vector<128x128xf32> to vector<64x128xf32>
    %c2_i32 = arith.constant 2 : i32
    %128 = tpu.dynamic_rotate %127 by %c2_i32 dim 1 : vector<64x128xf32>, i32 -> vector<64x128xf32>
    %129 = vector.broadcast %124 : vector<1x128xf32> to vector<64x128xf32>
    %130 = arith.mulf %128, %129 : vector<64x128xf32>
    %131 = vector.extract_strided_slice %126 {offsets = [64, 0], sizes = [64, 128], strides = [1, 1]} : vector<128x128xf32> to vector<64x128xf32>
    %132 = arith.addf %130, %131 : vector<64x128xf32>
    %c640 = arith.constant 640 : index
    %c0_54 = arith.constant 0 : index
    %133 = vector.load %arg7[%c640, %c0_54] : memref<872x1xf32, #tpu.memory_space<vmem>>, vector<64x1xf32>
    %134 = vector.broadcast %133 : vector<64x1xf32> to vector<64x128xf32>
    %135 = arith.addf %132, %134 : vector<64x128xf32>
    %cst_55 = arith.constant 0.000000e+00 : f32
    %136 = vector.broadcast %cst_55 : f32 to vector<64x128xf32>
    %137 = arith.maximumf %135, %136 : vector<64x128xf32>
    %138 = vector.extract_strided_slice %50 {offsets = [96, 0], sizes = [64, 128], strides = [1, 1]} : vector<192x128xf32> to vector<64x128xf32>
    %139 = arith.addf %137, %138 : vector<64x128xf32>
    %c608 = arith.constant 608 : index
    %c0_56 = arith.constant 0 : index
    %140 = vector.load %arg3[%c608, %c0_56] : memref<896x64xf32, #tpu.memory_space<vmem>>, vector<128x64xf32>
    %cst_57 = arith.constant dense<0.000000e+00> : vector<128x128xf32>
    %141 = tpu.matmul %140, %139, %cst_57 {dimension_numbers = #tpu.dot_dimension_numbers<[1], [0], [0], [1], [0, 0, 1, 1], [], []>} : vector<128x64xf32>, vector<64x128xf32>, vector<128x128xf32> -> vector<128x128xf32>
    %142 = vector.extract_strided_slice %141 {offsets = [0, 0], sizes = [64, 128], strides = [1, 1]} : vector<128x128xf32> to vector<64x128xf32>
    %c2_i32_58 = arith.constant 2 : i32
    %143 = tpu.dynamic_rotate %142 by %c2_i32_58 dim 1 : vector<64x128xf32>, i32 -> vector<64x128xf32>
    %144 = vector.broadcast %124 : vector<1x128xf32> to vector<64x128xf32>
    %145 = arith.mulf %143, %144 : vector<64x128xf32>
    %146 = vector.extract_strided_slice %141 {offsets = [64, 0], sizes = [64, 128], strides = [1, 1]} : vector<128x128xf32> to vector<64x128xf32>
    %147 = arith.addf %145, %146 : vector<64x128xf32>
    %c704 = arith.constant 704 : index
    %c0_59 = arith.constant 0 : index
    %148 = vector.load %arg7[%c704, %c0_59] : memref<872x1xf32, #tpu.memory_space<vmem>>, vector<64x1xf32>
    %149 = vector.broadcast %148 : vector<64x1xf32> to vector<64x128xf32>
    %150 = arith.addf %147, %149 : vector<64x128xf32>
    %cst_60 = arith.constant 0.000000e+00 : f32
    %151 = vector.broadcast %cst_60 : f32 to vector<64x128xf32>
    %152 = arith.maximumf %150, %151 : vector<64x128xf32>
    %153 = arith.addf %152, %123 : vector<64x128xf32>
    %cst_61 = arith.constant 0.000000e+00 : f32
    %154 = vector.broadcast %cst_61 : f32 to vector<64x128xf32>
    %155 = arith.maximumf %153, %154 : vector<64x128xf32>
    %c40_62 = arith.constant 40 : index
    %c0_63 = arith.constant 0 : index
    %156 = vector.load %arg8[%c40_62, %c0_63] : memref<56x128xf32, #tpu.memory_space<vmem>>, vector<1x128xf32>
    %c736 = arith.constant 736 : index
    %c0_64 = arith.constant 0 : index
    %157 = vector.load %arg3[%c736, %c0_64] : memref<896x64xf32, #tpu.memory_space<vmem>>, vector<96x64xf32>
    %cst_65 = arith.constant dense<0.000000e+00> : vector<96x128xf32>
    %158 = tpu.matmul %157, %155, %cst_65 {dimension_numbers = #tpu.dot_dimension_numbers<[1], [0], [0], [1], [0, 0, 1, 1], [], []>} : vector<96x64xf32>, vector<64x128xf32>, vector<96x128xf32> -> vector<96x128xf32>
    %159 = vector.extract_strided_slice %158 {offsets = [0, 0], sizes = [32, 128], strides = [1, 1]} : vector<96x128xf32> to vector<32x128xf32>
    %c2_i32_66 = arith.constant 2 : i32
    %160 = tpu.dynamic_rotate %159 by %c2_i32_66 dim 1 : vector<32x128xf32>, i32 -> vector<32x128xf32>
    %161 = vector.broadcast %156 : vector<1x128xf32> to vector<32x128xf32>
    %162 = arith.mulf %160, %161 : vector<32x128xf32>
    %163 = vector.extract_strided_slice %158 {offsets = [32, 0], sizes = [32, 128], strides = [1, 1]} : vector<96x128xf32> to vector<32x128xf32>
    %164 = arith.addf %162, %163 : vector<32x128xf32>
    %c768 = arith.constant 768 : index
    %c0_67 = arith.constant 0 : index
    %165 = vector.load %arg7[%c768, %c0_67] : memref<872x1xf32, #tpu.memory_space<vmem>>, vector<32x1xf32>
    %166 = vector.broadcast %165 : vector<32x1xf32> to vector<32x128xf32>
    %167 = arith.addf %164, %166 : vector<32x128xf32>
    %cst_68 = arith.constant 0.000000e+00 : f32
    %168 = vector.broadcast %cst_68 : f32 to vector<32x128xf32>
    %169 = arith.maximumf %167, %168 : vector<32x128xf32>
    %170 = vector.extract_strided_slice %50 {offsets = [160, 0], sizes = [32, 128], strides = [1, 1]} : vector<192x128xf32> to vector<32x128xf32>
    %171 = arith.addf %169, %170 : vector<32x128xf32>
    %c832 = arith.constant 832 : index
    %c0_69 = arith.constant 0 : index
    %172 = vector.load %arg3[%c832, %c0_69] : memref<896x64xf32, #tpu.memory_space<vmem>>, vector<64x32xf32>
    %cst_70 = arith.constant dense<0.000000e+00> : vector<64x128xf32>
    %173 = tpu.matmul %172, %171, %cst_70 {dimension_numbers = #tpu.dot_dimension_numbers<[1], [0], [0], [1], [0, 0, 1, 1], [], []>} : vector<64x32xf32>, vector<32x128xf32>, vector<64x128xf32> -> vector<64x128xf32>
    %174 = vector.extract_strided_slice %173 {offsets = [0, 0], sizes = [32, 128], strides = [1, 1]} : vector<64x128xf32> to vector<32x128xf32>
    %c2_i32_71 = arith.constant 2 : i32
    %175 = tpu.dynamic_rotate %174 by %c2_i32_71 dim 1 : vector<32x128xf32>, i32 -> vector<32x128xf32>
    %176 = vector.broadcast %156 : vector<1x128xf32> to vector<32x128xf32>
    %177 = arith.mulf %175, %176 : vector<32x128xf32>
    %178 = vector.extract_strided_slice %173 {offsets = [32, 0], sizes = [32, 128], strides = [1, 1]} : vector<64x128xf32> to vector<32x128xf32>
    %179 = arith.addf %177, %178 : vector<32x128xf32>
    %c800 = arith.constant 800 : index
    %c0_72 = arith.constant 0 : index
    %180 = vector.load %arg7[%c800, %c0_72] : memref<872x1xf32, #tpu.memory_space<vmem>>, vector<32x1xf32>
    %181 = vector.broadcast %180 : vector<32x1xf32> to vector<32x128xf32>
    %182 = arith.addf %179, %181 : vector<32x128xf32>
    %cst_73 = arith.constant 0.000000e+00 : f32
    %183 = vector.broadcast %cst_73 : f32 to vector<32x128xf32>
    %184 = arith.maximumf %182, %183 : vector<32x128xf32>
    %185 = vector.extract_strided_slice %158 {offsets = [64, 0], sizes = [32, 128], strides = [1, 1]} : vector<96x128xf32> to vector<32x128xf32>
    %c832_74 = arith.constant 832 : index
    %c0_75 = arith.constant 0 : index
    %186 = vector.load %arg7[%c832_74, %c0_75] : memref<872x1xf32, #tpu.memory_space<vmem>>, vector<32x1xf32>
    %187 = vector.broadcast %186 : vector<32x1xf32> to vector<32x128xf32>
    %188 = arith.addf %185, %187 : vector<32x128xf32>
    %189 = arith.addf %184, %188 : vector<32x128xf32>
    %cst_76 = arith.constant 0.000000e+00 : f32
    %190 = vector.broadcast %cst_76 : f32 to vector<32x128xf32>
    %191 = arith.maximumf %189, %190 : vector<32x128xf32>
    %c0_77 = arith.constant 0 : index
    %c0_78 = arith.constant 0 : index
    %192 = vector.load %arg8[%c0_77, %c0_78] : memref<56x128xf32, #tpu.memory_space<vmem>>, vector<32x128xf32>
    %193 = arith.mulf %191, %192 : vector<32x128xf32>
    %c0_79 = arith.constant 0 : index
    %c0_80 = arith.constant 0 : index
    %194 = vector.load %arg9[%c0_79, %c0_80] : memref<128x8xf32, #tpu.memory_space<vmem>>, vector<128x8xf32>
    %cst_81 = arith.constant dense<0.000000e+00> : vector<32x8xf32>
    %195 = tpu.matmul %193, %194, %cst_81 {dimension_numbers = #tpu.dot_dimension_numbers<[1], [0], [0], [1], [0, 0, 1, 1], [], []>} : vector<32x128xf32>, vector<128x8xf32>, vector<32x8xf32> -> vector<32x8xf32>
    %cst_82 = arith.constant dense<0.000000e+00> : vector<8xf32>
    %196 = vector.multi_reduction <add>, %195, %cst_82 [0] : vector<32x8xf32> to vector<8xf32>
    %197 = vector.shape_cast %196 : vector<8xf32> to vector<1x8xf32>
    %c864 = arith.constant 864 : index
    %c0_83 = arith.constant 0 : index
    %198 = vector.load %arg7[%c864, %c0_83] : memref<872x1xf32, #tpu.memory_space<vmem>>, vector<1x1xf32>
    %199 = vector.broadcast %198 : vector<1x1xf32> to vector<1x8xf32>
    %200 = arith.addf %197, %199 : vector<1x8xf32>
    %c0_84 = arith.constant 0 : index
    %c0_85 = arith.constant 0 : index
    %c0_86 = arith.constant 0 : index
    %201 = vector.load %arg10[%c0_84, %c0_85, %c0_86] : memref<1x1x8xf32, #tpu.memory_space<vmem>>, vector<1x1x8xf32>
    %202 = vector.shape_cast %201 : vector<1x1x8xf32> to vector<1x8xf32>
    %203 = vector.shape_cast %200 : vector<1x8xf32> to vector<1x1x8xf32>
    tpu.vector_store %arg10[%c0_84, %c0_85, %c0_86], %203 {strides = array<i32>} : memref<1x1x8xf32, #tpu.memory_space<vmem>>, vector<1x1x8xf32>,
    return
  }
  func.func @transform_0(%arg0: i32) -> (i32, i32) {
    %c0_i32 = arith.constant 0 : i32
    %c0_i32_0 = arith.constant 0 : i32
    return %c0_i32, %arg0 : i32, i32
  }
  func.func @transform_1(%arg0: i32) -> (i32, i32, i32) {
    %c0_i32 = arith.constant 0 : i32
    %c0_i32_0 = arith.constant 0 : i32
    %c0_i32_1 = arith.constant 0 : i32
    return %arg0, %c0_i32, %c0_i32_0 : i32, i32, i32
  }
  func.func @transform_2(%arg0: i32) -> (i32, i32) {
    %c0_i32 = arith.constant 0 : i32
    %c0_i32_0 = arith.constant 0 : i32
    %c0_i32_1 = arith.constant 0 : i32
    return %c0_i32, %c0_i32_0 : i32, i32
  }
  func.func @transform_3(%arg0: i32) -> (i32, i32) {
    %c0_i32 = arith.constant 0 : i32
    %c0_i32_0 = arith.constant 0 : i32
    %c0_i32_1 = arith.constant 0 : i32
    return %c0_i32, %c0_i32_0 : i32, i32
  }
  func.func @transform_4(%arg0: i32) -> (i32, i32) {
    %c0_i32 = arith.constant 0 : i32
    %c0_i32_0 = arith.constant 0 : i32
    %c0_i32_1 = arith.constant 0 : i32
    return %c0_i32, %c0_i32_0 : i32, i32
  }
  func.func @transform_5(%arg0: i32) -> (i32, i32) {
    %c0_i32 = arith.constant 0 : i32
    %c0_i32_0 = arith.constant 0 : i32
    %c0_i32_1 = arith.constant 0 : i32
    return %c0_i32, %c0_i32_0 : i32, i32
  }
  func.func @transform_6(%arg0: i32) -> (i32, i32) {
    %c0_i32 = arith.constant 0 : i32
    %c0_i32_0 = arith.constant 0 : i32
    %c0_i32_1 = arith.constant 0 : i32
    return %c0_i32, %c0_i32_0 : i32, i32
  }
  func.func @transform_7(%arg0: i32) -> (i32, i32) {
    %c0_i32 = arith.constant 0 : i32
    %c0_i32_0 = arith.constant 0 : i32
    %c0_i32_1 = arith.constant 0 : i32
    return %c0_i32, %c0_i32_0 : i32, i32
  }
  func.func @transform_8(%arg0: i32) -> (i32, i32) {
    %c0_i32 = arith.constant 0 : i32
    %c0_i32_0 = arith.constant 0 : i32
    %c0_i32_1 = arith.constant 0 : i32
    return %c0_i32, %c0_i32_0 : i32, i32
  }
  func.func @transform_9(%arg0: i32) -> (i32, i32, i32) {
    %c0_i32 = arith.constant 0 : i32
    %c0_i32_0 = arith.constant 0 : i32
    %c0_i32_1 = arith.constant 0 : i32
    return %arg0, %c0_i32, %c0_i32_0 : i32, i32, i32
  }
}

</mosaic_0001>

<llo_original>
// kernel: tpu_custom_call.1
$region0: #{tpu_custom_call.1}
  #allocation0 [shape = 'u32[]', space=smem, size = 0x4, offset = 0x4, fixed_abs, tag = 'smem constant byte address 0x4 - core index']
  #allocation1 [shape = 'u32[144,128]{1,0:T(1,128)}', space=vmem, size = 0x12000, scoped, tag = 'internal scratch']
  %s0 = inlined_call_operand.vmem [shape: f32[4,128], index: 0, kind: input, shape index: {}]
  %s1 = inlined_call_operand.vmem [shape: f32[1,32,8], index: 1, kind: input, shape index: {}]
  %s2 = inlined_call_operand.vmem [shape: f32[896,64], index: 2, kind: input, shape index: {}]
  %s3 = inlined_call_operand.vmem [shape: f32[128,32], index: 3, kind: input, shape index: {}]
  %s4 = inlined_call_operand.vmem [shape: f32[32,128], index: 4, kind: input, shape index: {}]
  %s5 = inlined_call_operand.vmem [shape: f32[192,32], index: 5, kind: input, shape index: {}]
  %s6 = inlined_call_operand.vmem [shape: f32[872,1], index: 6, kind: input, shape index: {}]
  %s7 = inlined_call_operand.vmem [shape: f32[56,128], index: 7, kind: input, shape index: {}]
  %s8 = inlined_call_operand.vmem [shape: f32[128,8], index: 8, kind: input, shape index: {}]
  %s9 = inlined_call_operand.hbm [shape: f32[1,1,8], index: 9, kind: output, shape index: {}]
  %s10 = sld [smem:[#allocation0]]
  $region46: #{tpu_custom_call.1} parent=0
    _
  %s12 = ssub.s32 1, %s10
  %s13 = scalar_select 0, %s12, %s10
  $region1: #{tpu_custom_call.1} parent=0
    #allocation2 [shape = 'u8[512]{0}', space=vmem, size = 0x400, scoped, tag = 'output window, operand 0, single buffered']
    #allocation3 [shape = 's32[1]{0}', space=sflag, size = 0x4, scoped, tag = 'scoped memory for tpu_custom_call.1']
    %14 = vsyncpa [#allocation3], 0
    // Predicated region
    $region2: #{tpu_custom_call.1} parent=1 // pred_check
      _
    $region3: #{tpu_custom_call.1} parent=1 // pred_check_branch
      %16 = sbr.rel (0) target = $region5
    $region4: #{tpu_custom_call.1} parent=1 // pred_region
      _
    $region5: #{tpu_custom_call.1} parent=1 // pred_fallthru
      _
    // Predicated region
    $region6: #{tpu_custom_call.1} parent=1 // pred_check
      _
    $region7: #{tpu_custom_call.1} parent=1 // pred_check_branch
      %18 = sbr.rel (0) target = $region9
    $region8: #{tpu_custom_call.1} parent=1 // pred_region
      _
    $region9: #{tpu_custom_call.1} parent=1 // pred_fallthru
      _
    // Predicated region
    $region10: #{tpu_custom_call.1} parent=1 // pred_check
      _
    $region11: #{tpu_custom_call.1} parent=1 // pred_check_branch
      %20 = sbr.rel (0) target = $region13
    $region12: #{tpu_custom_call.1} parent=1 // pred_region
      _
    $region13: #{tpu_custom_call.1} parent=1 // pred_fallthru
      _
    // Predicated region
    $region14: #{tpu_custom_call.1} parent=1 // pred_check
      _
    $region15: #{tpu_custom_call.1} parent=1 // pred_check_branch
      %22 = sbr.rel (0) target = $region17
    $region16: #{tpu_custom_call.1} parent=1 // pred_region
      _
    $region17: #{tpu_custom_call.1} parent=1 // pred_fallthru
      _
    // Predicated region
    $region18: #{tpu_custom_call.1} parent=1 // pred_check
      _
    $region19: #{tpu_custom_call.1} parent=1 // pred_check_branch
      %24 = sbr.rel (0) target = $region21
    $region20: #{tpu_custom_call.1} parent=1 // pred_region
      _
    $region21: #{tpu_custom_call.1} parent=1 // pred_fallthru
      _
    // Predicated region
    $region22: #{tpu_custom_call.1} parent=1 // pred_check
      _
    $region23: #{tpu_custom_call.1} parent=1 // pred_check_branch
      %26 = sbr.rel (0) target = $region25
    $region24: #{tpu_custom_call.1} parent=1 // pred_region
      _
    $region25: #{tpu_custom_call.1} parent=1 // pred_fallthru
      _
    // Predicated region
    $region26: #{tpu_custom_call.1} parent=1 // pred_check
      _
    $region27: #{tpu_custom_call.1} parent=1 // pred_check_branch
      %28 = sbr.rel (0) target = $region29
    $region28: #{tpu_custom_call.1} parent=1 // pred_region
      _
    $region29: #{tpu_custom_call.1} parent=1 // pred_fallthru
      _
    // Predicated region
    $region30: #{tpu_custom_call.1} parent=1 // pred_check
      _
    $region31: #{tpu_custom_call.1} parent=1 // pred_check_branch
      %30 = sbr.rel (0) target = $region33
    $region32: #{tpu_custom_call.1} parent=1 // pred_region
      _
    $region33: #{tpu_custom_call.1} parent=1 // pred_fallthru
      _
    // Predicated region
    $region34: #{tpu_custom_call.1} parent=1 // pred_check
      _
    $region35: #{tpu_custom_call.1} parent=1 // pred_check_branch
      %32 = sbr.rel (0) target = $region37
    $region36: #{tpu_custom_call.1} parent=1 // pred_region
      _
    $region37: #{tpu_custom_call.1} parent=1 // pred_fallthru
      _
    %v33 = vld [vmem:[%s1] sm:$0xff]
    %v34 = vld [vmem:[%s1 + $0x8] sm:$0xff]
    %v35 = vld [vmem:[%s1 + $0x10] sm:$0xff]
    %v36 = vld [vmem:[%s1 + $0x18] sm:$0xff]
    %v37 = vld [vmem:[%s3] sm:$0xff]
    %v38 = vld [vmem:[%s3 + $0x8] sm:$0xff]
    %v39 = vld [vmem:[%s3 + $0x10] sm:$0xff]
    %v40 = vld [vmem:[%s3 + $0x18] sm:$0xff]
    %v41 = vld [vmem:[%s3 + $0x20] sm:$0xff]
    %v42 = vld [vmem:[%s3 + $0x28] sm:$0xff]
    %v43 = vld [vmem:[%s3 + $0x30] sm:$0xff]
    %v44 = vld [vmem:[%s3 + $0x38] sm:$0xff]
    %v45 = vld [vmem:[%s3 + $0x40] sm:$0xff]
    %v46 = vld [vmem:[%s3 + $0x48] sm:$0xff]
    %v47 = vld [vmem:[%s3 + $0x50] sm:$0xff]
    %v48 = vld [vmem:[%s3 + $0x58] sm:$0xff]
    %v49 = vld [vmem:[%s3 + $0x60] sm:$0xff]
    %v50 = vld [vmem:[%s3 + $0x68] sm:$0xff]
    %v51 = vld [vmem:[%s3 + $0x70] sm:$0xff]
    %v52 = vld [vmem:[%s3 + $0x78] sm:$0xff]
    %v53 = vld [vmem:[%s6] sm:$0xff]
    %v54 = vld [vmem:[%s6 + $0x8] sm:$0xff]
    %v55 = vld [vmem:[%s6 + $0x10] sm:$0xff]
    %v56 = vld [vmem:[%s6 + $0x18] sm:$0xff]
    %v57 = vld [vmem:[%s6 + $0x20] sm:$0xff]
    %v58 = vld [vmem:[%s6 + $0x28] sm:$0xff]
    %v59 = vld [vmem:[%s6 + $0x30] sm:$0xff]
    %v60 = vld [vmem:[%s6 + $0x38] sm:$0xff]
    %v61 = vld [vmem:[%s6 + $0x40] sm:$0xff]
    %v62 = vld [vmem:[%s6 + $0x48] sm:$0xff]
    %v63 = vld [vmem:[%s6 + $0x50] sm:$0xff]
    %v64 = vld [vmem:[%s6 + $0x58] sm:$0xff]
    %v65 = vld [vmem:[%s6 + $0x60] sm:$0xff]
    %v66 = vld [vmem:[%s6 + $0x68] sm:$0xff]
    %v67 = vld [vmem:[%s6 + $0x70] sm:$0xff]
    %v68 = vld [vmem:[%s6 + $0x78] sm:$0xff]
    %70 = vset.pattern.permute.xlu0 0
    %71 = vperm.xlu0 %70, %v53
    %v72 = vpop.permute.xlu0 %71
    %75 = vset.pattern.permute.xlu0 0
    %76 = vperm.xlu0 %75, %v54
    %v77 = vpop.permute.xlu0 %76
    %80 = vset.pattern.permute.xlu0 0
    %81 = vperm.xlu0 %80, %v55
    %v82 = vpop.permute.xlu0 %81
    %85 = vset.pattern.permute.xlu0 0
    %86 = vperm.xlu0 %85, %v56
    %v87 = vpop.permute.xlu0 %86
    %90 = vset.pattern.permute.xlu0 0
    %91 = vperm.xlu0 %90, %v57
    %v92 = vpop.permute.xlu0 %91
    %95 = vset.pattern.permute.xlu0 0
    %96 = vperm.xlu0 %95, %v58
    %v97 = vpop.permute.xlu0 %96
    %100 = vset.pattern.permute.xlu0 0
    %101 = vperm.xlu0 %100, %v59
    %v102 = vpop.permute.xlu0 %101
    %105 = vset.pattern.permute.xlu0 0
    %106 = vperm.xlu0 %105, %v60
    %v107 = vpop.permute.xlu0 %106
    %110 = vset.pattern.permute.xlu0 0
    %111 = vperm.xlu0 %110, %v61
    %v112 = vpop.permute.xlu0 %111
    %115 = vset.pattern.permute.xlu0 0
    %116 = vperm.xlu0 %115, %v62
    %v117 = vpop.permute.xlu0 %116
    %120 = vset.pattern.permute.xlu0 0
    %121 = vperm.xlu0 %120, %v63
    %v122 = vpop.permute.xlu0 %121
    %125 = vset.pattern.permute.xlu0 0
    %126 = vperm.xlu0 %125, %v64
    %v127 = vpop.permute.xlu0 %126
    %130 = vset.pattern.permute.xlu0 0
    %131 = vperm.xlu0 %130, %v65
    %v132 = vpop.permute.xlu0 %131
    %135 = vset.pattern.permute.xlu0 0
    %136 = vperm.xlu0 %135, %v66
    %v137 = vpop.permute.xlu0 %136
    %140 = vset.pattern.permute.xlu0 0
    %141 = vperm.xlu0 %140, %v67
    %v142 = vpop.permute.xlu0 %141
    %145 = vset.pattern.permute.xlu0 0
    %146 = vperm.xlu0 %145, %v68
    %v147 = vpop.permute.xlu0 %146
    %vm149 = vcmask 261120
    %v151 = vsel %vm149, %v37, 0
    %v154 = vsel %vm149, %v38, 0
    %v157 = vsel %vm149, %v39, 0
    %v160 = vsel %vm149, %v40, 0
    %v163 = vsel %vm149, %v41, 0
    %v166 = vsel %vm149, %v42, 0
    %v169 = vsel %vm149, %v43, 0
    %v172 = vsel %vm149, %v44, 0
    %v175 = vsel %vm149, %v45, 0
    %v178 = vsel %vm149, %v46, 0
    %v181 = vsel %vm149, %v47, 0
    %v184 = vsel %vm149, %v48, 0
    %v187 = vsel %vm149, %v49, 0
    %v190 = vsel %vm149, %v50, 0
    %v193 = vsel %vm149, %v51, 0
    %v196 = vsel %vm149, %v52, 0
    %198 = vmatprep.subr.mxu0 0.0
    %199 = vmatpush1.msra.mxu0 0.0
    %200 = vmatprep.subr.mxu0 0.0
    %201 = vmatpush1.msra.mxu0 0.0
    %202 = vmatprep.subr.mxu0 0.0
    %203 = vmatpush1.msra.mxu0 0.0
    %204 = vmatprep.subr.mxu0 0.0
    %205 = vmatpush1.msra.mxu0 0.0
    %206 = vmatprep.subr.mxu0 0.0
    %207 = vmatpush1.msra.mxu0 0.0
    %208 = vmatprep.subr.mxu0 0.0
    %209 = vmatpush1.msra.mxu0 0.0
    %210 = vmatprep.subr.mxu0 0.0
    %211 = vmatpush1.msra.mxu0 0.0
    %212 = vmatprep.subr.mxu0 0.0
    %213 = vmatpush1.msra.mxu0 0.0
    %214 = vmatprep.subr.mxu0 0.0
    %215 = vmatpush1.msra.mxu0 0.0
    %216 = vmatprep.subr.mxu0 0.0
    %217 = vmatpush1.msra.mxu0 0.0
    %218 = vmatprep.subr.mxu0 0.0
    %219 = vmatpush1.msra.mxu0 0.0
    %220 = vmatprep.subr.mxu0 0.0
    %221 = vmatpush1.msra.mxu0 0.0
    %222 = vmatprep.subr.mxu0 0.0
    %223 = vmatpush1.msra.mxu0 %v36
    %224 = vmatprep.subr.mxu0 0.0
    %225 = vmatpush1.msra.mxu0 %v35
    %226 = vmatprep.subr.mxu0 0.0
    %227 = vmatpush1.msra.mxu0 %v34
    %228 = vmatprep.subr.mxu0 0.0
    %229 = vmatpush1.msra.mxu0 %v33
    %230 = vmatprep.subr.mxu0 0.0
    %231 = vmatpush2.msra.mxu0 0.0
    %232 = vmatprep.subr.mxu0 0.0
    %233 = vmatpush2.msra.mxu0 0.0
    %234 = vmatprep.subr.mxu0 0.0
    %235 = vmatpush2.msra.mxu0 0.0
    %236 = vmatprep.subr.mxu0 0.0
    %237 = vmatpush2.msra.mxu0 0.0
    %238 = vmatprep.subr.mxu0 0.0
    %239 = vmatpush2.msra.mxu0 0.0
    %240 = vmatprep.subr.mxu0 0.0
    %241 = vmatpush2.msra.mxu0 0.0
    %242 = vmatprep.subr.mxu0 0.0
    %243 = vmatpush2.msra.mxu0 0.0
    %244 = vmatprep.subr.mxu0 0.0
    %245 = vmatpush2.msra.mxu0 0.0
    %246 = vmatprep.subr.mxu0 0.0
    %247 = vmatpush2.msra.mxu0 0.0
    %248 = vmatprep.subr.mxu0 0.0
    %249 = vmatpush2.msra.mxu0 0.0
    %250 = vmatprep.subr.mxu0 0.0
    %251 = vmatpush2.msra.mxu0 0.0
    %252 = vmatprep.subr.mxu0 0.0
    %253 = vmatpush2.msra.mxu0 0.0
    %254 = vmatprep.subr.mxu0 0.0
    %255 = vmatpush2.msra.mxu0 0.0
    %256 = vmatprep.subr.mxu0 0.0
    %257 = vmatpush2.msra.mxu0 0.0
    %258 = vmatprep.subr.mxu0 0.0
    %259 = vmatpush2.msra.mxu0 0.0
    %260 = vmatprep.subr.mxu0 0.0
    %261 = vmatpush2.msra.mxu0 0.0
    %262 = vmatprep.mubr.f32.mxu0 0.0
    %263 = vmatmul.mubr.f32.gmra.mxu0 %v151
    %v264 = vpop.f32.mrf.mxu0
    %v265 = vadd.f32 %v72, %v264
    %v266 = vpop.f32.mrf.mxu0
    %267 = vmatprep.mubr.f32.mxu0 0.0
    %268 = vmatmul.mubr.f32.gmra.mxu0 %v154
    %v269 = vpop.f32.mrf.mxu0
    %v270 = vadd.f32 %v77, %v269
    %v271 = vpop.f32.mrf.mxu0
    %272 = vmatprep.mubr.f32.mxu0 0.0
    %273 = vmatmul.mubr.f32.gmra.mxu0 %v157
    %v274 = vpop.f32.mrf.mxu0
    %v275 = vadd.f32 %v82, %v274
    %v276 = vpop.f32.mrf.mxu0
    %277 = vmatprep.mubr.f32.mxu0 0.0
    %278 = vmatmul.mubr.f32.gmra.mxu0 %v160
    %v279 = vpop.f32.mrf.mxu0
    %v280 = vadd.f32 %v87, %v279
    %v281 = vpop.f32.mrf.mxu0
    %282 = vmatprep.mubr.f32.mxu0 0.0
    %283 = vmatmul.mubr.f32.gmra.mxu0 %v163
    %v284 = vpop.f32.mrf.mxu0
    %v285 = vadd.f32 %v92, %v284
    %v286 = vpop.f32.mrf.mxu0
    %287 = vmatprep.mubr.f32.mxu0 0.0
    %288 = vmatmul.mubr.f32.gmra.mxu0 %v166
    %v289 = vpop.f32.mrf.mxu0
    %v290 = vadd.f32 %v97, %v289
    %v291 = vpop.f32.mrf.mxu0
    %292 = vmatprep.mubr.f32.mxu0 0.0
    %293 = vmatmul.mubr.f32.gmra.mxu0 %v169
    %v294 = vpop.f32.mrf.mxu0
    %v295 = vadd.f32 %v102, %v294
    %v296 = vpop.f32.mrf.mxu0
    %297 = vmatprep.mubr.f32.mxu0 0.0
    %298 = vmatmul.mubr.f32.gmra.mxu0 %v172
    %v299 = vpop.f32.mrf.mxu0
    %v300 = vadd.f32 %v107, %v299
    %v301 = vpop.f32.mrf.mxu0
    %302 = vmatprep.mubr.f32.mxu0 0.0
    %303 = vmatmul.mubr.f32.gmra.mxu0 %v175
    %v304 = vpop.f32.mrf.mxu0
    %v305 = vadd.f32 %v112, %v304
    %v306 = vpop.f32.mrf.mxu0
    %307 = vmatprep.mubr.f32.mxu0 0.0
    %308 = vmatmul.mubr.f32.gmra.mxu0 %v178
    %v309 = vpop.f32.mrf.mxu0
    %v310 = vadd.f32 %v117, %v309
    %v311 = vpop.f32.mrf.mxu0
    %312 = vmatprep.mubr.f32.mxu0 0.0
    %313 = vmatmul.mubr.f32.gmra.mxu0 %v181
    %v314 = vpop.f32.mrf.mxu0
    %v315 = vadd.f32 %v122, %v314
    %v316 = vpop.f32.mrf.mxu0
    %317 = vmatprep.mubr.f32.mxu0 0.0
    %318 = vmatmul.mubr.f32.gmra.mxu0 %v184
    %v319 = vpop.f32.mrf.mxu0
    %v320 = vadd.f32 %v127, %v319
    %v321 = vpop.f32.mrf.mxu0
    %322 = vmatprep.mubr.f32.mxu0 0.0
    %323 = vmatmul.mubr.f32.gmra.mxu0 %v187
    %v324 = vpop.f32.mrf.mxu0
    %v325 = vadd.f32 %v132, %v324
    %v326 = vpop.f32.mrf.mxu0
    %327 = vmatprep.mubr.f32.mxu0 0.0
    %328 = vmatmul.mubr.f32.gmra.mxu0 %v190
    %v329 = vpop.f32.mrf.mxu0
    %v330 = vadd.f32 %v137, %v329
    %v331 = vpop.f32.mrf.mxu0
    %332 = vmatprep.mubr.f32.mxu0 0.0
    %333 = vmatmul.mubr.f32.gmra.mxu0 %v193
    %v334 = vpop.f32.mrf.mxu0
    %v335 = vadd.f32 %v142, %v334
    %v336 = vpop.f32.mrf.mxu0
    %337 = vmatprep.mubr.f32.mxu0 0.0
    %338 = vmatmul.mubr.f32.gmra.mxu0 %v196
    %v339 = vpop.f32.mrf.mxu0
    %v340 = vadd.f32 %v147, %v339
    %v341 = vpop.f32.mrf.mxu0
    %342 = vdwg.mxu0
    %v343 = vld [vmem:[%s4] sm:$0xff]
    %v344 = vld [vmem:[%s4 + $0x8] sm:$0xff]
    %v345 = vld [vmem:[%s4 + $0x10] sm:$0xff]
    %v346 = vld [vmem:[%s4 + $0x18] sm:$0xff]
    %v347 = vmax.f32 %v265, 0.0
    %v348 = vmax.f32 %v270, 0.0
    %v349 = vmax.f32 %v275, 0.0
    %v350 = vmax.f32 %v280, 0.0
    %v351 = vmax.f32 %v285, 0.0
    %v352 = vmax.f32 %v290, 0.0
    %v353 = vmax.f32 %v295, 0.0
    %v354 = vmax.f32 %v300, 0.0
    %v355 = vmax.f32 %v305, 0.0
    %v356 = vmax.f32 %v310, 0.0
    %v357 = vmax.f32 %v315, 0.0
    %v358 = vmax.f32 %v320, 0.0
    %v359 = vmax.f32 %v325, 0.0
    %v360 = vmax.f32 %v330, 0.0
    %v361 = vmax.f32 %v335, 0.0
    %v362 = vmax.f32 %v340, 0.0
    %vm363 = vcmp.ne.f32.partialorder %v265, %v265
    %vm364 = vcmp.ne.f32.partialorder %v270, %v270
    %vm365 = vcmp.ne.f32.partialorder %v275, %v275
    %vm366 = vcmp.ne.f32.partialorder %v280, %v280
    %vm367 = vcmp.ne.f32.partialorder %v285, %v285
    %vm368 = vcmp.ne.f32.partialorder %v290, %v290
    %vm369 = vcmp.ne.f32.partialorder %v295, %v295
    %vm370 = vcmp.ne.f32.partialorder %v300, %v300
    %vm371 = vcmp.ne.f32.partialorder %v305, %v305
    %vm372 = vcmp.ne.f32.partialorder %v310, %v310
    %vm373 = vcmp.ne.f32.partialorder %v315, %v315
    %vm374 = vcmp.ne.f32.partialorder %v320, %v320
    %vm375 = vcmp.ne.f32.partialorder %v325, %v325
    %vm376 = vcmp.ne.f32.partialorder %v330, %v330
    %vm377 = vcmp.ne.f32.partialorder %v335, %v335
    %vm378 = vcmp.ne.f32.partialorder %v340, %v340
    %v379 = vadd.f32 %v265, 0.0
    %v380 = vadd.f32 %v270, 0.0
    %v381 = vadd.f32 %v275, 0.0
    %v382 = vadd.f32 %v280, 0.0
    %v383 = vadd.f32 %v285, 0.0
    %v384 = vadd.f32 %v290, 0.0
    %v385 = vadd.f32 %v295, 0.0
    %v386 = vadd.f32 %v300, 0.0
    %v387 = vadd.f32 %v305, 0.0
    %v388 = vadd.f32 %v310, 0.0
    %v389 = vadd.f32 %v315, 0.0
    %v390 = vadd.f32 %v320, 0.0
    %v391 = vadd.f32 %v325, 0.0
    %v392 = vadd.f32 %v330, 0.0
    %v393 = vadd.f32 %v335, 0.0
    %v394 = vadd.f32 %v340, 0.0
    %v395 = vand.u32 2147483647, %v265
    %v396 = vand.u32 2147483647, %v270
    %v397 = vand.u32 2147483647, %v275
    %v398 = vand.u32 2147483647, %v280
    %v399 = vand.u32 2147483647, %v285
    %v400 = vand.u32 2147483647, %v290
    %v401 = vand.u32 2147483647, %v295
    %v402 = vand.u32 2147483647, %v300
    %v403 = vand.u32 2147483647, %v305
    %v404 = vand.u32 2147483647, %v310
    %v405 = vand.u32 2147483647, %v315
    %v406 = vand.u32 2147483647, %v320
    %v407 = vand.u32 2147483647, %v325
    %v408 = vand.u32 2147483647, %v330
    %v409 = vand.u32 2147483647, %v335
    %v410 = vand.u32 2147483647, %v340
    %v411 = vsub.f32 0.0, %v395
    %v412 = vsub.f32 0.0, %v396
    %v413 = vsub.f32 0.0, %v397
    %v414 = vsub.f32 0.0, %v398
    %v415 = vsub.f32 0.0, %v399
    %v416 = vsub.f32 0.0, %v400
    %v417 = vsub.f32 0.0, %v401
    %v418 = vsub.f32 0.0, %v402
    %v419 = vsub.f32 0.0, %v403
    %v420 = vsub.f32 0.0, %v404
    %v421 = vsub.f32 0.0, %v405
    %v422 = vsub.f32 0.0, %v406
    %v423 = vsub.f32 0.0, %v407
    %v424 = vsub.f32 0.0, %v408
    %v425 = vsub.f32 0.0, %v409
    %v426 = vsub.f32 0.0, %v410
    %v427 = vmul.f32 %v411, 1.442695
    %v428 = vpow.pop %v427
    %v429 = vmul.f32 %v412, 1.442695
    %v430 = vpow.pop %v429
    %v431 = vmul.f32 %v413, 1.442695
    %v432 = vpow.pop %v431
    %v433 = vmul.f32 %v414, 1.442695
    %v434 = vpow.pop %v433
    %v435 = vmul.f32 %v415, 1.442695
    %v436 = vpow.pop %v435
    %v437 = vmul.f32 %v416, 1.442695
    %v438 = vpow.pop %v437
    %v439 = vmul.f32 %v417, 1.442695
    %v440 = vpow.pop %v439
    %v441 = vmul.f32 %v418, 1.442695
    %v442 = vpow.pop %v441
    %v443 = vmul.f32 %v419, 1.442695
    %v444 = vpow.pop %v443
    %v445 = vmul.f32 %v420, 1.442695
    %v446 = vpow.pop %v445
    %v447 = vmul.f32 %v421, 1.442695
    %v448 = vpow.pop %v447
    %v449 = vmul.f32 %v422, 1.442695
    %v450 = vpow.pop %v449
    %v451 = vmul.f32 %v423, 1.442695
    %v452 = vpow.pop %v451
    %v453 = vmul.f32 %v424, 1.442695
    %v454 = vpow.pop %v453
    %v455 = vmul.f32 %v425, 1.442695
    %v456 = vpow.pop %v455
    %v457 = vmul.f32 %v426, 1.442695
    %v458 = vpow.pop %v457
    %v459 = vadd.f32 %v428, 1.0
    %v460 = vlog2.pop %v459
    %v461 = vmul.f32 %v460, 0.6931472
    %v462 = vmul.f32 -0.5, %v428
    %v463 = vadd.f32 %v462, 1.0
    %v464 = vmul.f32 %v463, %v428
    %v465 = vand.u32 2147483647, %v428
    %vm466 = vcmp.lt.f32.partialorder %v465, 0.0004427343
    %v467 = vsel %vm466, %v464, %v461
    %v468 = vadd.f32 %v430, 1.0
    %v469 = vlog2.pop %v468
    %v470 = vmul.f32 %v469, 0.6931472
    %v471 = vmul.f32 -0.5, %v430
    %v472 = vadd.f32 %v471, 1.0
    %v473 = vmul.f32 %v472, %v430
    %v474 = vand.u32 2147483647, %v430
    %vm475 = vcmp.lt.f32.partialorder %v474, 0.0004427343
    %v476 = vsel %vm475, %v473, %v470
    %v477 = vadd.f32 %v432, 1.0
    %v478 = vlog2.pop %v477
    %v479 = vmul.f32 %v478, 0.6931472
    %v480 = vmul.f32 -0.5, %v432
    %v481 = vadd.f32 %v480, 1.0
    %v482 = vmul.f32 %v481, %v432
    %v483 = vand.u32 2147483647, %v432
    %vm484 = vcmp.lt.f32.partialorder %v483, 0.0004427343
    %v485 = vsel %vm484, %v482, %v479
    %v486 = vadd.f32 %v434, 1.0
    %v487 = vlog2.pop %v486
    %v488 = vmul.f32 %v487, 0.6931472
    %v489 = vmul.f32 -0.5, %v434
    %v490 = vadd.f32 %v489, 1.0
    %v491 = vmul.f32 %v490, %v434
    %v492 = vand.u32 2147483647, %v434
    %vm493 = vcmp.lt.f32.partialorder %v492, 0.0004427343
    %v494 = vsel %vm493, %v491, %v488
    %v495 = vadd.f32 %v436, 1.0
    %v496 = vlog2.pop %v495
    %v497 = vmul.f32 %v496, 0.6931472
    %v498 = vmul.f32 -0.5, %v436
    %v499 = vadd.f32 %v498, 1.0
    %v500 = vmul.f32 %v499, %v436
    %v501 = vand.u32 2147483647, %v436
    %vm502 = vcmp.lt.f32.partialorder %v501, 0.0004427343
    %v503 = vsel %vm502, %v500, %v497
    %v504 = vadd.f32 %v438, 1.0
    %v505 = vlog2.pop %v504
    %v506 = vmul.f32 %v505, 0.6931472
    %v507 = vmul.f32 -0.5, %v438
    %v508 = vadd.f32 %v507, 1.0
    %v509 = vmul.f32 %v508, %v438
    %v510 = vand.u32 2147483647, %v438
    %vm511 = vcmp.lt.f32.partialorder %v510, 0.0004427343
    %v512 = vsel %vm511, %v509, %v506
    %v513 = vadd.f32 %v440, 1.0
    %v514 = vlog2.pop %v513
    %v515 = vmul.f32 %v514, 0.6931472
    %v516 = vmul.f32 -0.5, %v440
    %v517 = vadd.f32 %v516, 1.0
    %v518 = vmul.f32 %v517, %v440
    %v519 = vand.u32 2147483647, %v440
    %vm520 = vcmp.lt.f32.partialorder %v519, 0.0004427343
    %v521 = vsel %vm520, %v518, %v515
    %v522 = vadd.f32 %v442, 1.0
    %v523 = vlog2.pop %v522
    %v524 = vmul.f32 %v523, 0.6931472
    %v525 = vmul.f32 -0.5, %v442
    %v526 = vadd.f32 %v525, 1.0
    %v527 = vmul.f32 %v526, %v442
    %v528 = vand.u32 2147483647, %v442
    %vm529 = vcmp.lt.f32.partialorder %v528, 0.0004427343
    %v530 = vsel %vm529, %v527, %v524
    %v531 = vadd.f32 %v444, 1.0
    %v532 = vlog2.pop %v531
    %v533 = vmul.f32 %v532, 0.6931472
    %v534 = vmul.f32 -0.5, %v444
    %v535 = vadd.f32 %v534, 1.0
    %v536 = vmul.f32 %v535, %v444
    %v537 = vand.u32 2147483647, %v444
    %vm538 = vcmp.lt.f32.partialorder %v537, 0.0004427343
    %v539 = vsel %vm538, %v536, %v533
    %v540 = vadd.f32 %v446, 1.0
    %v541 = vlog2.pop %v540
    %v542 = vmul.f32 %v541, 0.6931472
    %v543 = vmul.f32 -0.5, %v446
    %v544 = vadd.f32 %v543, 1.0
    %v545 = vmul.f32 %v544, %v446
    %v546 = vand.u32 2147483647, %v446
    %vm547 = vcmp.lt.f32.partialorder %v546, 0.0004427343
    %v548 = vsel %vm547, %v545, %v542
    %v549 = vadd.f32 %v448, 1.0
    %v550 = vlog2.pop %v549
    %v551 = vmul.f32 %v550, 0.6931472
    %v552 = vmul.f32 -0.5, %v448
    %v553 = vadd.f32 %v552, 1.0
    %v554 = vmul.f32 %v553, %v448
    %v555 = vand.u32 2147483647, %v448
    %vm556 = vcmp.lt.f32.partialorder %v555, 0.0004427343
    %v557 = vsel %vm556, %v554, %v551
    %v558 = vadd.f32 %v450, 1.0
    %v559 = vlog2.pop %v558
    %v560 = vmul.f32 %v559, 0.6931472
    %v561 = vmul.f32 -0.5, %v450
    %v562 = vadd.f32 %v561, 1.0
    %v563 = vmul.f32 %v562, %v450
    %v564 = vand.u32 2147483647, %v450
    %vm565 = vcmp.lt.f32.partialorder %v564, 0.0004427343
    %v566 = vsel %vm565, %v563, %v560
    %v567 = vadd.f32 %v452, 1.0
    %v568 = vlog2.pop %v567
    %v569 = vmul.f32 %v568, 0.6931472
    %v570 = vmul.f32 -0.5, %v452
    %v571 = vadd.f32 %v570, 1.0
    %v572 = vmul.f32 %v571, %v452
    %v573 = vand.u32 2147483647, %v452
    %vm574 = vcmp.lt.f32.partialorder %v573, 0.0004427343
    %v575 = vsel %vm574, %v572, %v569
    %v576 = vadd.f32 %v454, 1.0
    %v577 = vlog2.pop %v576
    %v578 = vmul.f32 %v577, 0.6931472
    %v579 = vmul.f32 -0.5, %v454
    %v580 = vadd.f32 %v579, 1.0
    %v581 = vmul.f32 %v580, %v454
    %v582 = vand.u32 2147483647, %v454
    %vm583 = vcmp.lt.f32.partialorder %v582, 0.0004427343
    %v584 = vsel %vm583, %v581, %v578
    %v585 = vadd.f32 %v456, 1.0
    %v586 = vlog2.pop %v585
    %v587 = vmul.f32 %v586, 0.6931472
    %v588 = vmul.f32 -0.5, %v456
    %v589 = vadd.f32 %v588, 1.0
    %v590 = vmul.f32 %v589, %v456
    %v591 = vand.u32 2147483647, %v456
    %vm592 = vcmp.lt.f32.partialorder %v591, 0.0004427343
    %v593 = vsel %vm592, %v590, %v587
    %v594 = vadd.f32 %v458, 1.0
    %v595 = vlog2.pop %v594
    %v596 = vmul.f32 %v595, 0.6931472
    %v597 = vmul.f32 -0.5, %v458
    %v598 = vadd.f32 %v597, 1.0
    %v599 = vmul.f32 %v598, %v458
    %v600 = vand.u32 2147483647, %v458
    %vm601 = vcmp.lt.f32.partialorder %v600, 0.0004427343
    %v602 = vsel %vm601, %v599, %v596
    %v603 = vadd.f32 %v347, %v467
    %v604 = vadd.f32 %v348, %v476
    %v605 = vadd.f32 %v349, %v485
    %v606 = vadd.f32 %v350, %v494
    %v607 = vadd.f32 %v351, %v503
    %v608 = vadd.f32 %v352, %v512
    %v609 = vadd.f32 %v353, %v521
    %v610 = vadd.f32 %v354, %v530
    %v611 = vadd.f32 %v355, %v539
    %v612 = vadd.f32 %v356, %v548
    %v613 = vadd.f32 %v357, %v557
    %v614 = vadd.f32 %v358, %v566
    %v615 = vadd.f32 %v359, %v575
    %v616 = vadd.f32 %v360, %v584
    %v617 = vadd.f32 %v361, %v593
    %v618 = vadd.f32 %v362, %v602
    %v619 = vsel %vm363, %v379, %v603
    %v620 = vsel %vm364, %v380, %v604
    %v621 = vsel %vm365, %v381, %v605
    %v622 = vsel %vm366, %v382, %v606
    %v623 = vsel %vm367, %v383, %v607
    %v624 = vsel %vm368, %v384, %v608
    %v625 = vsel %vm369, %v385, %v609
    %v626 = vsel %vm370, %v386, %v610
    %v627 = vsel %vm371, %v387, %v611
    %v628 = vsel %vm372, %v388, %v612
    %v629 = vsel %vm373, %v389, %v613
    %v630 = vsel %vm374, %v390, %v614
    %v631 = vsel %vm375, %v391, %v615
    %v632 = vsel %vm376, %v392, %v616
    %v633 = vsel %vm377, %v393, %v617
    %v634 = vsel %vm378, %v394, %v618
    %v635 = vtanh.pop %v619
    %v636 = vtanh.pop %v620
    %v637 = vtanh.pop %v621
    %v638 = vtanh.pop %v622
    %v639 = vtanh.pop %v623
    %v640 = vtanh.pop %v624
    %v641 = vtanh.pop %v625
    %v642 = vtanh.pop %v626
    %v643 = vtanh.pop %v627
    %v644 = vtanh.pop %v628
    %v645 = vtanh.pop %v629
    %v646 = vtanh.pop %v630
    %v647 = vtanh.pop %v631
    %v648 = vtanh.pop %v632
    %v649 = vtanh.pop %v633
    %v650 = vtanh.pop %v634
    %v651 = vmul.f32 %v265, %v635
    %v652 = vmul.f32 %v270, %v636
    %v653 = vmul.f32 %v275, %v637
    %v654 = vmul.f32 %v280, %v638
    %v655 = vmul.f32 %v285, %v639
    %v656 = vmul.f32 %v290, %v640
    %v657 = vmul.f32 %v295, %v641
    %v658 = vmul.f32 %v300, %v642
    %v659 = vmul.f32 %v305, %v643
    %v660 = vmul.f32 %v310, %v644
    %v661 = vmul.f32 %v315, %v645
    %v662 = vmul.f32 %v320, %v646
    %v663 = vmul.f32 %v325, %v647
    %v664 = vmul.f32 %v330, %v648
    %v665 = vmul.f32 %v335, %v649
    %v666 = vmul.f32 %v340, %v650
    %v667 = vld [vmem:[%s6 + $0x80] sm:$0xff]
    %v668 = vld [vmem:[%s6 + $0x88] sm:$0xff]
    %v669 = vld [vmem:[%s6 + $0x90] sm:$0xff]
    %v670 = vld [vmem:[%s6 + $0x98] sm:$0xff]
    %672 = vset.pattern.permute.xlu0 0
    %673 = vperm.xlu0 %672, %v667
    %v674 = vpop.permute.xlu0 %673
    %677 = vset.pattern.permute.xlu0 0
    %678 = vperm.xlu0 %677, %v668
    %v679 = vpop.permute.xlu0 %678
    %682 = vset.pattern.permute.xlu0 0
    %683 = vperm.xlu0 %682, %v669
    %v684 = vpop.permute.xlu0 %683
    %687 = vset.pattern.permute.xlu0 0
    %688 = vperm.xlu0 %687, %v670
    %v689 = vpop.permute.xlu0 %688
    %691 = vmatprep.subr.mxu0 0.0
    %692 = vmatpush1.msra.mxu0 %v666
    %693 = vmatprep.subr.mxu0 0.0
    %694 = vmatpush1.msra.mxu0 %v665
    %695 = vmatprep.subr.mxu0 0.0
    %696 = vmatpush1.msra.mxu0 %v664
    %697 = vmatprep.subr.mxu0 0.0
    %698 = vmatpush1.msra.mxu0 %v663
    %699 = vmatprep.subr.mxu0 0.0
    %700 = vmatpush1.msra.mxu0 %v662
    %701 = vmatprep.subr.mxu0 0.0
    %702 = vmatpush1.msra.mxu0 %v661
    %703 = vmatprep.subr.mxu0 0.0
    %704 = vmatpush1.msra.mxu0 %v660
    %705 = vmatprep.subr.mxu0 0.0
    %706 = vmatpush1.msra.mxu0 %v659
    %707 = vmatprep.subr.mxu0 0.0
    %708 = vmatpush1.msra.mxu0 %v658
    %709 = vmatprep.subr.mxu0 0.0
    %710 = vmatpush1.msra.mxu0 %v657
    %711 = vmatprep.subr.mxu0 0.0
    %712 = vmatpush1.msra.mxu0 %v656
    %713 = vmatprep.subr.mxu0 0.0
    %714 = vmatpush1.msra.mxu0 %v655
    %715 = vmatprep.subr.mxu0 0.0
    %716 = vmatpush1.msra.mxu0 %v654
    %717 = vmatprep.subr.mxu0 0.0
    %718 = vmatpush1.msra.mxu0 %v653
    %719 = vmatprep.subr.mxu0 0.0
    %720 = vmatpush1.msra.mxu0 %v652
    %721 = vmatprep.subr.mxu0 0.0
    %722 = vmatpush1.msra.mxu0 %v651
    %723 = vmatprep.subr.mxu0 0.0
    %724 = vmatpush2.msra.mxu0 0.0
    %725 = vmatprep.subr.mxu0 0.0
    %726 = vmatpush2.msra.mxu0 0.0
    %727 = vmatprep.subr.mxu0 0.0
    %728 = vmatpush2.msra.mxu0 0.0
    %729 = vmatprep.subr.mxu0 0.0
    %730 = vmatpush2.msra.mxu0 0.0
    %731 = vmatprep.subr.mxu0 0.0
    %732 = vmatpush2.msra.mxu0 0.0
    %733 = vmatprep.subr.mxu0 0.0
    %734 = vmatpush2.msra.mxu0 0.0
    %735 = vmatprep.subr.mxu0 0.0
    %736 = vmatpush2.msra.mxu0 0.0
    %737 = vmatprep.subr.mxu0 0.0
    %738 = vmatpush2.msra.mxu0 0.0
    %739 = vmatprep.subr.mxu0 0.0
    %740 = vmatpush2.msra.mxu0 0.0
    %741 = vmatprep.subr.mxu0 0.0
    %742 = vmatpush2.msra.mxu0 0.0
    %743 = vmatprep.subr.mxu0 0.0
    %744 = vmatpush2.msra.mxu0 0.0
    %745 = vmatprep.subr.mxu0 0.0
    %746 = vmatpush2.msra.mxu0 0.0
    %747 = vmatprep.subr.mxu0 0.0
    %748 = vmatpush2.msra.mxu0 0.0
    %749 = vmatprep.subr.mxu0 0.0
    %750 = vmatpush2.msra.mxu0 0.0
    %751 = vmatprep.subr.mxu0 0.0
    %752 = vmatpush2.msra.mxu0 0.0
    %753 = vmatprep.subr.mxu0 0.0
    %754 = vmatpush2.msra.mxu0 0.0
    %755 = vmatprep.mubr.f32.mxu0 0.0
    %756 = vmatmul.mubr.f32.gmra.mxu0 %v343
    %v757 = vpop.f32.mrf.mxu0
    %v758 = vadd.f32 %v674, %v757
    %v759 = vpop.f32.mrf.mxu0
    %760 = vmatprep.mubr.f32.mxu0 0.0
    %761 = vmatmul.mubr.f32.gmra.mxu0 %v344
    %v762 = vpop.f32.mrf.mxu0
    %v763 = vadd.f32 %v679, %v762
    %v764 = vpop.f32.mrf.mxu0
    %765 = vmatprep.mubr.f32.mxu0 0.0
    %766 = vmatmul.mubr.f32.gmra.mxu0 %v345
    %v767 = vpop.f32.mrf.mxu0
    %v768 = vadd.f32 %v684, %v767
    %v769 = vpop.f32.mrf.mxu0
    %770 = vmatprep.mubr.f32.mxu0 0.0
    %771 = vmatmul.mubr.f32.gmra.mxu0 %v346
    %v772 = vpop.f32.mrf.mxu0
    %v773 = vadd.f32 %v689, %v772
    %v774 = vpop.f32.mrf.mxu0
    %775 = vdwg.mxu0
    %v776 = vld [vmem:[%s5] sm:$0xff]
    %v777 = vld [vmem:[%s5 + $0x8] sm:$0xff]
    %v778 = vld [vmem:[%s5 + $0x10] sm:$0xff]
    %v779 = vld [vmem:[%s5 + $0x18] sm:$0xff]
    %v780 = vld [vmem:[%s5 + $0x20] sm:$0xff]
    %v781 = vld [vmem:[%s5 + $0x28] sm:$0xff]
    %v782 = vld [vmem:[%s5 + $0x30] sm:$0xff]
    %v783 = vld [vmem:[%s5 + $0x38] sm:$0xff]
    %v784 = vld [vmem:[%s5 + $0x40] sm:$0xff]
    %v785 = vld [vmem:[%s5 + $0x48] sm:$0xff]
    %v786 = vld [vmem:[%s5 + $0x50] sm:$0xff]
    %v787 = vld [vmem:[%s5 + $0x58] sm:$0xff]
    %v788 = vld [vmem:[%s5 + $0x60] sm:$0xff]
    %v789 = vld [vmem:[%s5 + $0x68] sm:$0xff]
    %v790 = vld [vmem:[%s5 + $0x70] sm:$0xff]
    %v791 = vld [vmem:[%s5 + $0x78] sm:$0xff]
    %v792 = vld [vmem:[%s5 + $0x80] sm:$0xff]
    %v793 = vld [vmem:[%s5 + $0x88] sm:$0xff]
    %v794 = vld [vmem:[%s5 + $0x90] sm:$0xff]
    %v795 = vld [vmem:[%s5 + $0x98] sm:$0xff]
    %v796 = vld [vmem:[%s5 + $0xa0] sm:$0xff]
    %v797 = vld [vmem:[%s5 + $0xa8] sm:$0xff]
    %v798 = vld [vmem:[%s5 + $0xb0] sm:$0xff]
    %v799 = vld [vmem:[%s5 + $0xb8] sm:$0xff]
    %v800 = vmax.f32 %v758, 0.0
    %v801 = vmax.f32 %v763, 0.0
    %v802 = vmax.f32 %v768, 0.0
    %v803 = vmax.f32 %v773, 0.0
    %vm804 = vcmp.ne.f32.partialorder %v758, %v758
    %vm805 = vcmp.ne.f32.partialorder %v763, %v763
    %vm806 = vcmp.ne.f32.partialorder %v768, %v768
    %vm807 = vcmp.ne.f32.partialorder %v773, %v773
    %v808 = vadd.f32 %v758, 0.0
    %v809 = vadd.f32 %v763, 0.0
    %v810 = vadd.f32 %v768, 0.0
    %v811 = vadd.f32 %v773, 0.0
    %v812 = vand.u32 2147483647, %v758
    %v813 = vand.u32 2147483647, %v763
    %v814 = vand.u32 2147483647, %v768
    %v815 = vand.u32 2147483647, %v773
    %v816 = vsub.f32 0.0, %v812
    %v817 = vsub.f32 0.0, %v813
    %v818 = vsub.f32 0.0, %v814
    %v819 = vsub.f32 0.0, %v815
    %v820 = vmul.f32 %v816, 1.442695
    %v821 = vpow.pop %v820
    %v822 = vmul.f32 %v817, 1.442695
    %v823 = vpow.pop %v822
    %v824 = vmul.f32 %v818, 1.442695
    %v825 = vpow.pop %v824
    %v826 = vmul.f32 %v819, 1.442695
    %v827 = vpow.pop %v826
    %v828 = vadd.f32 %v821, 1.0
    %v829 = vlog2.pop %v828
    %v830 = vmul.f32 %v829, 0.6931472
    %v831 = vmul.f32 -0.5, %v821
    %v832 = vadd.f32 %v831, 1.0
    %v833 = vmul.f32 %v832, %v821
    %v834 = vand.u32 2147483647, %v821
    %vm835 = vcmp.lt.f32.partialorder %v834, 0.0004427343
    %v836 = vsel %vm835, %v833, %v830
    %v837 = vadd.f32 %v823, 1.0
    %v838 = vlog2.pop %v837
    %v839 = vmul.f32 %v838, 0.6931472
    %v840 = vmul.f32 -0.5, %v823
    %v841 = vadd.f32 %v840, 1.0
    %v842 = vmul.f32 %v841, %v823
    %v843 = vand.u32 2147483647, %v823
    %vm844 = vcmp.lt.f32.partialorder %v843, 0.0004427343
    %v845 = vsel %vm844, %v842, %v839
    %v846 = vadd.f32 %v825, 1.0
    %v847 = vlog2.pop %v846
    %v848 = vmul.f32 %v847, 0.6931472
    %v849 = vmul.f32 -0.5, %v825
    %v850 = vadd.f32 %v849, 1.0
    %v851 = vmul.f32 %v850, %v825
    %v852 = vand.u32 2147483647, %v825
    %vm853 = vcmp.lt.f32.partialorder %v852, 0.0004427343
    %v854 = vsel %vm853, %v851, %v848
    %v855 = vadd.f32 %v827, 1.0
    %v856 = vlog2.pop %v855
    %v857 = vmul.f32 %v856, 0.6931472
    %v858 = vmul.f32 -0.5, %v827
    %v859 = vadd.f32 %v858, 1.0
    %v860 = vmul.f32 %v859, %v827
    %v861 = vand.u32 2147483647, %v827
    %vm862 = vcmp.lt.f32.partialorder %v861, 0.0004427343
    %v863 = vsel %vm862, %v860, %v857
    %v864 = vadd.f32 %v800, %v836
    %v865 = vadd.f32 %v801, %v845
    %v866 = vadd.f32 %v802, %v854
    %v867 = vadd.f32 %v803, %v863
    %v868 = vsel %vm804, %v808, %v864
    %v869 = vsel %vm805, %v809, %v865
    %v870 = vsel %vm806, %v810, %v866
    %v871 = vsel %vm807, %v811, %v867
    %v872 = vtanh.pop %v868
    %v873 = vtanh.pop %v869
    %v874 = vtanh.pop %v870
    %v875 = vtanh.pop %v871
    %v876 = vmul.f32 %v758, %v872
    %v877 = vmul.f32 %v763, %v873
    %v878 = vmul.f32 %v768, %v874
    %v879 = vmul.f32 %v773, %v875
    %v880 = vld [vmem:[%s6 + $0xa0] sm:$0xff]
    %v881 = vld [vmem:[%s6 + $0xa8] sm:$0xff]
    %v882 = vld [vmem:[%s6 + $0xb0] sm:$0xff]
    %v883 = vld [vmem:[%s6 + $0xb8] sm:$0xff]
    %v884 = vld [vmem:[%s6 + $0xc0] sm:$0xff]
    %v885 = vld [vmem:[%s6 + $0xc8] sm:$0xff]
    %v886 = vld [vmem:[%s6 + $0xd0] sm:$0xff]
    %v887 = vld [vmem:[%s6 + $0xd8] sm:$0xff]
    %v888 = vld [vmem:[%s6 + $0xe0] sm:$0xff]
    %v889 = vld [vmem:[%s6 + $0xe8] sm:$0xff]
    %v890 = vld [vmem:[%s6 + $0xf0] sm:$0xff]
    %v891 = vld [vmem:[%s6 + $0xf8] sm:$0xff]
    %v892 = vld [vmem:[%s6 + $0x100] sm:$0xff]
    %v893 = vld [vmem:[%s6 + $0x108] sm:$0xff]
    %v894 = vld [vmem:[%s6 + $0x110] sm:$0xff]
    %v895 = vld [vmem:[%s6 + $0x118] sm:$0xff]
    %v896 = vld [vmem:[%s6 + $0x120] sm:$0xff]
    %v897 = vld [vmem:[%s6 + $0x128] sm:$0xff]
    %v898 = vld [vmem:[%s6 + $0x130] sm:$0xff]
    %v899 = vld [vmem:[%s6 + $0x138] sm:$0xff]
    %v900 = vld [vmem:[%s6 + $0x140] sm:$0xff]
    %v901 = vld [vmem:[%s6 + $0x148] sm:$0xff]
    %v902 = vld [vmem:[%s6 + $0x150] sm:$0xff]
    %v903 = vld [vmem:[%s6 + $0x158] sm:$0xff]
    %905 = vset.pattern.permute.xlu0 0
    %906 = vperm.xlu0 %905, %v880
    %v907 = vpop.permute.xlu0 %906
    %910 = vset.pattern.permute.xlu0 0
    %911 = vperm.xlu0 %910, %v881
    %v912 = vpop.permute.xlu0 %911
    %915 = vset.pattern.permute.xlu0 0
    %916 = vperm.xlu0 %915, %v882
    %v917 = vpop.permute.xlu0 %916
    %920 = vset.pattern.permute.xlu0 0
    %921 = vperm.xlu0 %920, %v883
    %v922 = vpop.permute.xlu0 %921
    %925 = vset.pattern.permute.xlu0 0
    %926 = vperm.xlu0 %925, %v884
    %v927 = vpop.permute.xlu0 %926
    %930 = vset.pattern.permute.xlu0 0
    %931 = vperm.xlu0 %930, %v885
    %v932 = vpop.permute.xlu0 %931
    %935 = vset.pattern.permute.xlu0 0
    %936 = vperm.xlu0 %935, %v886
    %v937 = vpop.permute.xlu0 %936
    %940 = vset.pattern.permute.xlu0 0
    %941 = vperm.xlu0 %940, %v887
    %v942 = vpop.permute.xlu0 %941
    %945 = vset.pattern.permute.xlu0 0
    %946 = vperm.xlu0 %945, %v888
    %v947 = vpop.permute.xlu0 %946
    %950 = vset.pattern.permute.xlu0 0
    %951 = vperm.xlu0 %950, %v889
    %v952 = vpop.permute.xlu0 %951
    %955 = vset.pattern.permute.xlu0 0
    %956 = vperm.xlu0 %955, %v890
    %v957 = vpop.permute.xlu0 %956
    %960 = vset.pattern.permute.xlu0 0
    %961 = vperm.xlu0 %960, %v891
    %v962 = vpop.permute.xlu0 %961
    %965 = vset.pattern.permute.xlu0 0
    %966 = vperm.xlu0 %965, %v892
    %v967 = vpop.permute.xlu0 %966
    %970 = vset.pattern.permute.xlu0 0
    %971 = vperm.xlu0 %970, %v893
    %v972 = vpop.permute.xlu0 %971
    %975 = vset.pattern.permute.xlu0 0
    %976 = vperm.xlu0 %975, %v894
    %v977 = vpop.permute.xlu0 %976
    %980 = vset.pattern.permute.xlu0 0
    %981 = vperm.xlu0 %980, %v895
    %v982 = vpop.permute.xlu0 %981
    %985 = vset.pattern.permute.xlu0 0
    %986 = vperm.xlu0 %985, %v896
    %v987 = vpop.permute.xlu0 %986
    %990 = vset.pattern.permute.xlu0 0
    %991 = vperm.xlu0 %990, %v897
    %v992 = vpop.permute.xlu0 %991
    %995 = vset.pattern.permute.xlu0 0
    %996 = vperm.xlu0 %995, %v898
    %v997 = vpop.permute.xlu0 %996
    %1000 = vset.pattern.permute.xlu0 0
    %1001 = vperm.xlu0 %1000, %v899
    %v1002 = vpop.permute.xlu0 %1001
    %1005 = vset.pattern.permute.xlu0 0
    %1006 = vperm.xlu0 %1005, %v900
    %v1007 = vpop.permute.xlu0 %1006
    %1010 = vset.pattern.permute.xlu0 0
    %1011 = vperm.xlu0 %1010, %v901
    %v1012 = vpop.permute.xlu0 %1011
    %1015 = vset.pattern.permute.xlu0 0
    %1016 = vperm.xlu0 %1015, %v902
    %v1017 = vpop.permute.xlu0 %1016
    %1020 = vset.pattern.permute.xlu0 0
    %1021 = vperm.xlu0 %1020, %v903
    %v1022 = vpop.permute.xlu0 %1021
    %v1025 = vsel %vm149, %v776, 0
    %v1028 = vsel %vm149, %v777, 0
    %v1031 = vsel %vm149, %v778, 0
    %v1034 = vsel %vm149, %v779, 0
    %v1037 = vsel %vm149, %v780, 0
    %v1040 = vsel %vm149, %v781, 0
    %v1043 = vsel %vm149, %v782, 0
    %v1046 = vsel %vm149, %v783, 0
    %v1049 = vsel %vm149, %v784, 0
    %v1052 = vsel %vm149, %v785, 0
    %v1055 = vsel %vm149, %v786, 0
    %v1058 = vsel %vm149, %v787, 0
    %v1061 = vsel %vm149, %v788, 0
    %v1064 = vsel %vm149, %v789, 0
    %v1067 = vsel %vm149, %v790, 0
    %v1070 = vsel %vm149, %v791, 0
    %v1073 = vsel %vm149, %v792, 0
    %v1076 = vsel %vm149, %v793, 0
    %v1079 = vsel %vm149, %v794, 0
    %v1082 = vsel %vm149, %v795, 0
    %v1085 = vsel %vm149, %v796, 0
    %v1088 = vsel %vm149, %v797, 0
    %v1091 = vsel %vm149, %v798, 0
    %v1094 = vsel %vm149, %v799, 0
    %1096 = vmatprep.subr.mxu0 0.0
    %1097 = vmatpush1.msra.mxu0 0.0
    %1098 = vmatprep.subr.mxu0 0.0
    %1099 = vmatpush1.msra.mxu0 0.0
    %1100 = vmatprep.subr.mxu0 0.0
    %1101 = vmatpush1.msra.mxu0 0.0
    %1102 = vmatprep.subr.mxu0 0.0
    %1103 = vmatpush1.msra.mxu0 0.0
    %1104 = vmatprep.subr.mxu0 0.0
    %1105 = vmatpush1.msra.mxu0 0.0
    %1106 = vmatprep.subr.mxu0 0.0
    %1107 = vmatpush1.msra.mxu0 0.0
    %1108 = vmatprep.subr.mxu0 0.0
    %1109 = vmatpush1.msra.mxu0 0.0
    %1110 = vmatprep.subr.mxu0 0.0
    %1111 = vmatpush1.msra.mxu0 0.0
    %1112 = vmatprep.subr.mxu0 0.0
    %1113 = vmatpush1.msra.mxu0 0.0
    %1114 = vmatprep.subr.mxu0 0.0
    %1115 = vmatpush1.msra.mxu0 0.0
    %1116 = vmatprep.subr.mxu0 0.0
    %1117 = vmatpush1.msra.mxu0 0.0
    %1118 = vmatprep.subr.mxu0 0.0
    %1119 = vmatpush1.msra.mxu0 0.0
    %1120 = vmatprep.subr.mxu0 0.0
    %1121 = vmatpush1.msra.mxu0 %v879
    %1122 = vmatprep.subr.mxu0 0.0
    %1123 = vmatpush1.msra.mxu0 %v878
    %1124 = vmatprep.subr.mxu0 0.0
    %1125 = vmatpush1.msra.mxu0 %v877
    %1126 = vmatprep.subr.mxu0 0.0
    %1127 = vmatpush1.msra.mxu0 %v876
    %1128 = vmatprep.subr.mxu0 0.0
    %1129 = vmatpush2.msra.mxu0 0.0
    %1130 = vmatprep.subr.mxu0 0.0
    %1131 = vmatpush2.msra.mxu0 0.0
    %1132 = vmatprep.subr.mxu0 0.0
    %1133 = vmatpush2.msra.mxu0 0.0
    %1134 = vmatprep.subr.mxu0 0.0
    %1135 = vmatpush2.msra.mxu0 0.0
    %1136 = vmatprep.subr.mxu0 0.0
    %1137 = vmatpush2.msra.mxu0 0.0
    %1138 = vmatprep.subr.mxu0 0.0
    %1139 = vmatpush2.msra.mxu0 0.0
    %1140 = vmatprep.subr.mxu0 0.0
    %1141 = vmatpush2.msra.mxu0 0.0
    %1142 = vmatprep.subr.mxu0 0.0
    %1143 = vmatpush2.msra.mxu0 0.0
    %1144 = vmatprep.subr.mxu0 0.0
    %1145 = vmatpush2.msra.mxu0 0.0
    %1146 = vmatprep.subr.mxu0 0.0
    %1147 = vmatpush2.msra.mxu0 0.0
    %1148 = vmatprep.subr.mxu0 0.0
    %1149 = vmatpush2.msra.mxu0 0.0
    %1150 = vmatprep.subr.mxu0 0.0
    %1151 = vmatpush2.msra.mxu0 0.0
    %1152 = vmatprep.subr.mxu0 0.0
    %1153 = vmatpush2.msra.mxu0 0.0
    %1154 = vmatprep.subr.mxu0 0.0
    %1155 = vmatpush2.msra.mxu0 0.0
    %1156 = vmatprep.subr.mxu0 0.0
    %1157 = vmatpush2.msra.mxu0 0.0
    %1158 = vmatprep.subr.mxu0 0.0
    %1159 = vmatpush2.msra.mxu0 0.0
    %1160 = vmatprep.mubr.f32.mxu0 0.0
    %1161 = vmatmul.mubr.f32.gmra.mxu0 %v1025
    %v1162 = vpop.f32.mrf.mxu0
    %v1163 = vadd.f32 %v907, %v1162
    %v1164 = vpop.f32.mrf.mxu0
    %1165 = vmatprep.mubr.f32.mxu0 0.0
    %1166 = vmatmul.mubr.f32.gmra.mxu0 %v1028
    %v1167 = vpop.f32.mrf.mxu0
    %v1168 = vadd.f32 %v912, %v1167
    %v1169 = vpop.f32.mrf.mxu0
    %1170 = vmatprep.mubr.f32.mxu0 0.0
    %1171 = vmatmul.mubr.f32.gmra.mxu0 %v1031
    %v1172 = vpop.f32.mrf.mxu0
    %v1173 = vadd.f32 %v917, %v1172
    %v1174 = vpop.f32.mrf.mxu0
    %1175 = vmatprep.mubr.f32.mxu0 0.0
    %1176 = vmatmul.mubr.f32.gmra.mxu0 %v1034
    %v1177 = vpop.f32.mrf.mxu0
    %v1178 = vadd.f32 %v922, %v1177
    %v1179 = vpop.f32.mrf.mxu0
    %1180 = vmatprep.mubr.f32.mxu0 0.0
    %1181 = vmatmul.mubr.f32.gmra.mxu0 %v1037
    %v1182 = vpop.f32.mrf.mxu0
    %v1183 = vadd.f32 %v927, %v1182
    %v1184 = vpop.f32.mrf.mxu0
    %1185 = vmatprep.mubr.f32.mxu0 0.0
    %1186 = vmatmul.mubr.f32.gmra.mxu0 %v1040
    %v1187 = vpop.f32.mrf.mxu0
    %v1188 = vadd.f32 %v932, %v1187
    %v1189 = vpop.f32.mrf.mxu0
    %1190 = vmatprep.mubr.f32.mxu0 0.0
    %1191 = vmatmul.mubr.f32.gmra.mxu0 %v1043
    %v1192 = vpop.f32.mrf.mxu0
    %v1193 = vadd.f32 %v937, %v1192
    %v1194 = vpop.f32.mrf.mxu0
    %1195 = vmatprep.mubr.f32.mxu0 0.0
    %1196 = vmatmul.mubr.f32.gmra.mxu0 %v1046
    %v1197 = vpop.f32.mrf.mxu0
    %v1198 = vadd.f32 %v942, %v1197
    %v1199 = vpop.f32.mrf.mxu0
    %1200 = vmatprep.mubr.f32.mxu0 0.0
    %1201 = vmatmul.mubr.f32.gmra.mxu0 %v1049
    %v1202 = vpop.f32.mrf.mxu0
    %v1203 = vadd.f32 %v947, %v1202
    %v1204 = vpop.f32.mrf.mxu0
    %1205 = vmatprep.mubr.f32.mxu0 0.0
    %1206 = vmatmul.mubr.f32.gmra.mxu0 %v1052
    %v1207 = vpop.f32.mrf.mxu0
    %v1208 = vadd.f32 %v952, %v1207
    %v1209 = vpop.f32.mrf.mxu0
    %1210 = vmatprep.mubr.f32.mxu0 0.0
    %1211 = vmatmul.mubr.f32.gmra.mxu0 %v1055
    %v1212 = vpop.f32.mrf.mxu0
    %v1213 = vadd.f32 %v957, %v1212
    %v1214 = vpop.f32.mrf.mxu0
    %1215 = vmatprep.mubr.f32.mxu0 0.0
    %1216 = vmatmul.mubr.f32.gmra.mxu0 %v1058
    %v1217 = vpop.f32.mrf.mxu0
    %v1218 = vadd.f32 %v962, %v1217
    %v1219 = vpop.f32.mrf.mxu0
    %1220 = vmatprep.mubr.f32.mxu0 0.0
    %1221 = vmatmul.mubr.f32.gmra.mxu0 %v1061
    %v1222 = vpop.f32.mrf.mxu0
    %v1223 = vadd.f32 %v967, %v1222
    %v1224 = vpop.f32.mrf.mxu0
    %1225 = vmatprep.mubr.f32.mxu0 0.0
    %1226 = vmatmul.mubr.f32.gmra.mxu0 %v1064
    %v1227 = vpop.f32.mrf.mxu0
    %v1228 = vadd.f32 %v972, %v1227
    %v1229 = vpop.f32.mrf.mxu0
    %1230 = vmatprep.mubr.f32.mxu0 0.0
    %1231 = vmatmul.mubr.f32.gmra.mxu0 %v1067
    %v1232 = vpop.f32.mrf.mxu0
    %v1233 = vadd.f32 %v977, %v1232
    %v1234 = vpop.f32.mrf.mxu0
    %1235 = vmatprep.mubr.f32.mxu0 0.0
    %1236 = vmatmul.mubr.f32.gmra.mxu0 %v1070
    %v1237 = vpop.f32.mrf.mxu0
    %v1238 = vadd.f32 %v982, %v1237
    %v1239 = vpop.f32.mrf.mxu0
    %1240 = vmatprep.mubr.f32.mxu0 0.0
    %1241 = vmatmul.mubr.f32.gmra.mxu0 %v1073
    %v1242 = vpop.f32.mrf.mxu0
    %v1243 = vadd.f32 %v987, %v1242
    %v1244 = vpop.f32.mrf.mxu0
    %1245 = vmatprep.mubr.f32.mxu0 0.0
    %1246 = vmatmul.mubr.f32.gmra.mxu0 %v1076
    %v1247 = vpop.f32.mrf.mxu0
    %v1248 = vadd.f32 %v992, %v1247
    %v1249 = vpop.f32.mrf.mxu0
    %1250 = vmatprep.mubr.f32.mxu0 0.0
    %1251 = vmatmul.mubr.f32.gmra.mxu0 %v1079
    %v1252 = vpop.f32.mrf.mxu0
    %v1253 = vadd.f32 %v997, %v1252
    %v1254 = vpop.f32.mrf.mxu0
    %1255 = vmatprep.mubr.f32.mxu0 0.0
    %1256 = vmatmul.mubr.f32.gmra.mxu0 %v1082
    %v1257 = vpop.f32.mrf.mxu0
    %v1258 = vadd.f32 %v1002, %v1257
    %v1259 = vpop.f32.mrf.mxu0
    %1260 = vmatprep.mubr.f32.mxu0 0.0
    %1261 = vmatmul.mubr.f32.gmra.mxu0 %v1085
    %v1262 = vpop.f32.mrf.mxu0
    %v1263 = vadd.f32 %v1007, %v1262
    %v1264 = vpop.f32.mrf.mxu0
    %1265 = vmatprep.mubr.f32.mxu0 0.0
    %1266 = vmatmul.mubr.f32.gmra.mxu0 %v1088
    %v1267 = vpop.f32.mrf.mxu0
    %v1268 = vadd.f32 %v1012, %v1267
    %v1269 = vpop.f32.mrf.mxu0
    %1270 = vmatprep.mubr.f32.mxu0 0.0
    %1271 = vmatmul.mubr.f32.gmra.mxu0 %v1091
    %v1272 = vpop.f32.mrf.mxu0
    %v1273 = vadd.f32 %v1017, %v1272
    %v1274 = vpop.f32.mrf.mxu0
    %1275 = vmatprep.mubr.f32.mxu0 0.0
    %1276 = vmatmul.mubr.f32.gmra.mxu0 %v1094
    %v1277 = vpop.f32.mrf.mxu0
    %v1278 = vadd.f32 %v1022, %v1277
    %v1279 = vpop.f32.mrf.mxu0
    %1280 = vdwg.mxu0
    %v1281 = vld [vmem:[%s7 + $0x30] sm:$0xff]
    %vm1282 = vcmask 64512
    %v1284 = vsel %vm1282, %v1163, 0
    %v1287 = vsel %vm1282, %v1168, 0
    %v1290 = vsel %vm1282, %v1173, 0
    %v1293 = vsel %vm1282, %v1178, 0
    %v1296 = vsel %vm1282, %v1183, 0
    %v1299 = vsel %vm1282, %v1188, 0
    %v1302 = vsel %vm1282, %v1193, 0
    %v1305 = vsel %vm1282, %v1198, 0
    %v1308 = vsel %vm1282, %v1203, 0
    %v1311 = vsel %vm1282, %v1208, 0
    %v1314 = vsel %vm1282, %v1213, 0
    %v1317 = vsel %vm1282, %v1218, 0
    %v1320 = vsel %vm1282, %v1223, 0
    %v1323 = vsel %vm1282, %v1228, 0
    %v1326 = vsel %vm1282, %v1233, 0
    %v1329 = vsel %vm1282, %v1238, 0
    %v1332 = vsel %vm1282, %v1243, 0
    %v1335 = vsel %vm1282, %v1248, 0
    %v1338 = vsel %vm1282, %v1253, 0
    %v1341 = vsel %vm1282, %v1258, 0
    %v1344 = vsel %vm1282, %v1263, 0
    %v1347 = vsel %vm1282, %v1268, 0
    %v1350 = vsel %vm1282, %v1273, 0
    %v1353 = vsel %vm1282, %v1278, 0
    %1355 = vmatprep.subr.mxu0 0.0
    %1356 = vmatpush1.msra.mxu0 0.0
    %1357 = vmatprep.subr.mxu0 0.0
    %1358 = vmatpush1.msra.mxu0 0.0
    %1359 = vmatprep.subr.mxu0 0.0
    %1360 = vmatpush1.msra.mxu0 0.0
    %1361 = vmatprep.subr.mxu0 0.0
    %1362 = vmatpush1.msra.mxu0 0.0
    %1363 = vmatprep.subr.mxu0 0.0
    %1364 = vmatpush1.msra.mxu0 0.0
    %1365 = vmatprep.subr.mxu0 0.0
    %1366 = vmatpush1.msra.mxu0 0.0
    %1367 = vmatprep.subr.mxu0 0.0
    %1368 = vmatpush1.msra.mxu0 0.0
    %1369 = vmatprep.subr.mxu0 0.0
    %1370 = vmatpush1.msra.mxu0 0.0
    %1371 = vmatprep.subr.mxu0 0.0
    %1372 = vmatpush1.msra.mxu0 0.0
    %1373 = vmatprep.subr.mxu0 0.0
    %1374 = vmatpush1.msra.mxu0 0.0
    %1375 = vmatprep.subr.mxu0 0.0
    %1376 = vmatpush1.msra.mxu0 0.0
    %1377 = vmatprep.subr.mxu0 0.0
    %1378 = vmatpush1.msra.mxu0 0.0
    %1379 = vmatprep.subr.mxu0 0.0
    %1380 = vmatpush1.msra.mxu0 0.0
    %1381 = vmatprep.subr.mxu0 0.0
    %1382 = vmatpush1.msra.mxu0 0.0
    %1383 = vmatprep.subr.mxu0 0.0
    %1384 = vmatpush1.msra.mxu0 0.0
    %1385 = vmatprep.subr.mxu0 0.0
    %1386 = vmatpush1.msra.mxu0 %v1281
    %1387 = vmatprep.subr.mxu0 0.0
    %1388 = vmatpush2.msra.mxu0 0.0
    %1389 = vmatprep.subr.mxu0 0.0
    %1390 = vmatpush2.msra.mxu0 0.0
    %1391 = vmatprep.subr.mxu0 0.0
    %1392 = vmatpush2.msra.mxu0 0.0
    %1393 = vmatprep.subr.mxu0 0.0
    %1394 = vmatpush2.msra.mxu0 0.0
    %1395 = vmatprep.subr.mxu0 0.0
    %1396 = vmatpush2.msra.mxu0 0.0
    %1397 = vmatprep.subr.mxu0 0.0
    %1398 = vmatpush2.msra.mxu0 0.0
    %1399 = vmatprep.subr.mxu0 0.0
    %1400 = vmatpush2.msra.mxu0 0.0
    %1401 = vmatprep.subr.mxu0 0.0
    %1402 = vmatpush2.msra.mxu0 0.0
    %1403 = vmatprep.subr.mxu0 0.0
    %1404 = vmatpush2.msra.mxu0 0.0
    %1405 = vmatprep.subr.mxu0 0.0
    %1406 = vmatpush2.msra.mxu0 0.0
    %1407 = vmatprep.subr.mxu0 0.0
    %1408 = vmatpush2.msra.mxu0 0.0
    %1409 = vmatprep.subr.mxu0 0.0
    %1410 = vmatpush2.msra.mxu0 0.0
    %1411 = vmatprep.subr.mxu0 0.0
    %1412 = vmatpush2.msra.mxu0 0.0
    %1413 = vmatprep.subr.mxu0 0.0
    %1414 = vmatpush2.msra.mxu0 0.0
    %1415 = vmatprep.subr.mxu0 0.0
    %1416 = vmatpush2.msra.mxu0 0.0
    %1417 = vmatprep.subr.mxu0 0.0
    %1418 = vmatpush2.msra.mxu0 0.0
    %1419 = vmatprep.mubr.f32.mxu0 0.0
    %1420 = vmatmul.mubr.f32.gmra.mxu0 %v1284
    %v1421 = vpop.f32.mrf.mxu0
    %v1422 = vadd.f32 0.0, %v1421
    %v1423 = vpop.f32.mrf.mxu0
    %1424 = vmatprep.mubr.f32.mxu0 0.0
    %1425 = vmatmul.mubr.f32.gmra.mxu0 %v1287
    %v1426 = vpop.f32.mrf.mxu0
    %v1427 = vadd.f32 0.0, %v1426
    %v1428 = vpop.f32.mrf.mxu0
    %1429 = vmatprep.mubr.f32.mxu0 0.0
    %1430 = vmatmul.mubr.f32.gmra.mxu0 %v1290
    %v1431 = vpop.f32.mrf.mxu0
    %v1432 = vadd.f32 0.0, %v1431
    %v1433 = vpop.f32.mrf.mxu0
    %1434 = vmatprep.mubr.f32.mxu0 0.0
    %1435 = vmatmul.mubr.f32.gmra.mxu0 %v1293
    %v1436 = vpop.f32.mrf.mxu0
    %v1437 = vadd.f32 0.0, %v1436
    %v1438 = vpop.f32.mrf.mxu0
    %1439 = vmatprep.mubr.f32.mxu0 0.0
    %1440 = vmatmul.mubr.f32.gmra.mxu0 %v1296
    %v1441 = vpop.f32.mrf.mxu0
    %v1442 = vadd.f32 0.0, %v1441
    %v1443 = vpop.f32.mrf.mxu0
    %1444 = vmatprep.mubr.f32.mxu0 0.0
    %1445 = vmatmul.mubr.f32.gmra.mxu0 %v1299
    %v1446 = vpop.f32.mrf.mxu0
    %v1447 = vadd.f32 0.0, %v1446
    %v1448 = vpop.f32.mrf.mxu0
    %1449 = vmatprep.mubr.f32.mxu0 0.0
    %1450 = vmatmul.mubr.f32.gmra.mxu0 %v1302
    %v1451 = vpop.f32.mrf.mxu0
    %v1452 = vadd.f32 0.0, %v1451
    %v1453 = vpop.f32.mrf.mxu0
    %1454 = vmatprep.mubr.f32.mxu0 0.0
    %1455 = vmatmul.mubr.f32.gmra.mxu0 %v1305
    %v1456 = vpop.f32.mrf.mxu0
    %v1457 = vadd.f32 0.0, %v1456
    %v1458 = vpop.f32.mrf.mxu0
    %1459 = vmatprep.mubr.f32.mxu0 0.0
    %1460 = vmatmul.mubr.f32.gmra.mxu0 %v1308
    %v1461 = vpop.f32.mrf.mxu0
    %v1462 = vadd.f32 0.0, %v1461
    %v1463 = vpop.f32.mrf.mxu0
    %1464 = vmatprep.mubr.f32.mxu0 0.0
    %1465 = vmatmul.mubr.f32.gmra.mxu0 %v1311
    %v1466 = vpop.f32.mrf.mxu0
    %v1467 = vadd.f32 0.0, %v1466
    %v1468 = vpop.f32.mrf.mxu0
    %1469 = vmatprep.mubr.f32.mxu0 0.0
    %1470 = vmatmul.mubr.f32.gmra.mxu0 %v1314
    %v1471 = vpop.f32.mrf.mxu0
    %v1472 = vadd.f32 0.0, %v1471
    %v1473 = vpop.f32.mrf.mxu0
    %1474 = vmatprep.mubr.f32.mxu0 0.0
    %1475 = vmatmul.mubr.f32.gmra.mxu0 %v1317
    %v1476 = vpop.f32.mrf.mxu0
    %v1477 = vadd.f32 0.0, %v1476
    %v1478 = vpop.f32.mrf.mxu0
    %1479 = vmatprep.mubr.f32.mxu0 0.0
    %1480 = vmatmul.mubr.f32.gmra.mxu0 %v1320
    %v1481 = vpop.f32.mrf.mxu0
    %v1482 = vadd.f32 0.0, %v1481
    %v1483 = vpop.f32.mrf.mxu0
    %1484 = vmatprep.mubr.f32.mxu0 0.0
    %1485 = vmatmul.mubr.f32.gmra.mxu0 %v1323
    %v1486 = vpop.f32.mrf.mxu0
    %v1487 = vadd.f32 0.0, %v1486
    %v1488 = vpop.f32.mrf.mxu0
    %1489 = vmatprep.mubr.f32.mxu0 0.0
    %1490 = vmatmul.mubr.f32.gmra.mxu0 %v1326
    %v1491 = vpop.f32.mrf.mxu0
    %v1492 = vadd.f32 0.0, %v1491
    %v1493 = vpop.f32.mrf.mxu0
    %1494 = vmatprep.mubr.f32.mxu0 0.0
    %1495 = vmatmul.mubr.f32.gmra.mxu0 %v1329
    %v1496 = vpop.f32.mrf.mxu0
    %v1497 = vadd.f32 0.0, %v1496
    %v1498 = vpop.f32.mrf.mxu0
    %1499 = vmatprep.mubr.f32.mxu0 0.0
    %1500 = vmatmul.mubr.f32.gmra.mxu0 %v1332
    %v1501 = vpop.f32.mrf.mxu0
    %v1502 = vadd.f32 0.0, %v1501
    %v1503 = vpop.f32.mrf.mxu0
    %1504 = vmatprep.mubr.f32.mxu0 0.0
    %1505 = vmatmul.mubr.f32.gmra.mxu0 %v1335
    %v1506 = vpop.f32.mrf.mxu0
    %v1507 = vadd.f32 0.0, %v1506
    %v1508 = vpop.f32.mrf.mxu0
    %1509 = vmatprep.mubr.f32.mxu0 0.0
    %1510 = vmatmul.mubr.f32.gmra.mxu0 %v1338
    %v1511 = vpop.f32.mrf.mxu0
    %v1512 = vadd.f32 0.0, %v1511
    %v1513 = vpop.f32.mrf.mxu0
    %1514 = vmatprep.mubr.f32.mxu0 0.0
    %1515 = vmatmul.mubr.f32.gmra.mxu0 %v1341
    %v1516 = vpop.f32.mrf.mxu0
    %v1517 = vadd.f32 0.0, %v1516
    %v1518 = vpop.f32.mrf.mxu0
    %1519 = vmatprep.mubr.f32.mxu0 0.0
    %1520 = vmatmul.mubr.f32.gmra.mxu0 %v1344
    %v1521 = vpop.f32.mrf.mxu0
    %v1522 = vadd.f32 0.0, %v1521
    %v1523 = vpop.f32.mrf.mxu0
    %1524 = vmatprep.mubr.f32.mxu0 0.0
    %1525 = vmatmul.mubr.f32.gmra.mxu0 %v1347
    %v1526 = vpop.f32.mrf.mxu0
    %v1527 = vadd.f32 0.0, %v1526
    %v1528 = vpop.f32.mrf.mxu0
    %1529 = vmatprep.mubr.f32.mxu0 0.0
    %1530 = vmatmul.mubr.f32.gmra.mxu0 %v1350
    %v1531 = vpop.f32.mrf.mxu0
    %v1532 = vadd.f32 0.0, %v1531
    %v1533 = vpop.f32.mrf.mxu0
    %1534 = vmatprep.mubr.f32.mxu0 0.0
    %1535 = vmatmul.mubr.f32.gmra.mxu0 %v1353
    %v1536 = vpop.f32.mrf.mxu0
    %v1537 = vadd.f32 0.0, %v1536
    %v1538 = vpop.f32.mrf.mxu0
    %1539 = vdwg.mxu0
    %v1540 = vld [vmem:[%s0] sm:$0xf]
    %v1541 = vld [vmem:[%s7 + $0x20] sm:$0x1]
    %v1542 = vld [vmem:[%s2] sm:$0xff]
    %v1543 = vld [vmem:[%s2 + $0x8] sm:$0xff]
    %v1544 = vld [vmem:[%s2 + $0x10] sm:$0xff]
    %v1545 = vld [vmem:[%s2 + $0x18] sm:$0xff]
    %v1546 = vld [vmem:[%s2 + $0x20] sm:$0xff]
    %v1547 = vld [vmem:[%s2 + $0x28] sm:$0xff]
    %v1548 = vld [vmem:[%s2 + $0x30] sm:$0xff]
    %v1549 = vld [vmem:[%s2 + $0x38] sm:$0xff]
    %v1550 = vld [vmem:[%s2 + $0x40] sm:$0xff]
    %v1551 = vld [vmem:[%s2 + $0x48] sm:$0xff]
    %v1552 = vld [vmem:[%s2 + $0x50] sm:$0xff]
    %v1553 = vld [vmem:[%s2 + $0x58] sm:$0xff]
    %vm1554 = vcmask 31744
    %v1556 = vsel %vm1554, %v1542, 0
    %v1559 = vsel %vm1554, %v1543, 0
    %v1562 = vsel %vm1554, %v1544, 0
    %v1565 = vsel %vm1554, %v1545, 0
    %v1568 = vsel %vm1554, %v1546, 0
    %v1571 = vsel %vm1554, %v1547, 0
    %v1574 = vsel %vm1554, %v1548, 0
    %v1577 = vsel %vm1554, %v1549, 0
    %v1580 = vsel %vm1554, %v1550, 0
    %v1583 = vsel %vm1554, %v1551, 0
    %v1586 = vsel %vm1554, %v1552, 0
    %v1589 = vsel %vm1554, %v1553, 0
    %vm1591 = vcmask 1043456
    %v1593 = vsel %vm1591, %v1540, 0
    %1595 = vmatprep.subr.mxu0 0.0
    %1596 = vmatpush1.msra.mxu0 0.0
    %1597 = vmatprep.subr.mxu0 0.0
    %1598 = vmatpush1.msra.mxu0 0.0
    %1599 = vmatprep.subr.mxu0 0.0
    %1600 = vmatpush1.msra.mxu0 0.0
    %1601 = vmatprep.subr.mxu0 0.0
    %1602 = vmatpush1.msra.mxu0 0.0
    %1603 = vmatprep.subr.mxu0 0.0
    %1604 = vmatpush1.msra.mxu0 0.0
    %1605 = vmatprep.subr.mxu0 0.0
    %1606 = vmatpush1.msra.mxu0 0.0
    %1607 = vmatprep.subr.mxu0 0.0
    %1608 = vmatpush1.msra.mxu0 0.0
    %1609 = vmatprep.subr.mxu0 0.0
    %1610 = vmatpush1.msra.mxu0 0.0
    %1611 = vmatprep.subr.mxu0 0.0
    %1612 = vmatpush1.msra.mxu0 0.0
    %1613 = vmatprep.subr.mxu0 0.0
    %1614 = vmatpush1.msra.mxu0 0.0
    %1615 = vmatprep.subr.mxu0 0.0
    %1616 = vmatpush1.msra.mxu0 0.0
    %1617 = vmatprep.subr.mxu0 0.0
    %1618 = vmatpush1.msra.mxu0 0.0
    %1619 = vmatprep.subr.mxu0 0.0
    %1620 = vmatpush1.msra.mxu0 0.0
    %1621 = vmatprep.subr.mxu0 0.0
    %1622 = vmatpush1.msra.mxu0 0.0
    %1623 = vmatprep.subr.mxu0 0.0
    %1624 = vmatpush1.msra.mxu0 0.0
    %1625 = vmatprep.subr.mxu0 0.0
    %1626 = vmatpush1.msra.mxu0 %v1593
    %1627 = vmatprep.subr.mxu0 0.0
    %1628 = vmatpush2.msra.mxu0 0.0
    %1629 = vmatprep.subr.mxu0 0.0
    %1630 = vmatpush2.msra.mxu0 0.0
    %1631 = vmatprep.subr.mxu0 0.0
    %1632 = vmatpush2.msra.mxu0 0.0
    %1633 = vmatprep.subr.mxu0 0.0
    %1634 = vmatpush2.msra.mxu0 0.0
    %1635 = vmatprep.subr.mxu0 0.0
    %1636 = vmatpush2.msra.mxu0 0.0
    %1637 = vmatprep.subr.mxu0 0.0
    %1638 = vmatpush2.msra.mxu0 0.0
    %1639 = vmatprep.subr.mxu0 0.0
    %1640 = vmatpush2.msra.mxu0 0.0
    %1641 = vmatprep.subr.mxu0 0.0
    %1642 = vmatpush2.msra.mxu0 0.0
    %1643 = vmatprep.subr.mxu0 0.0
    %1644 = vmatpush2.msra.mxu0 0.0
    %1645 = vmatprep.subr.mxu0 0.0
    %1646 = vmatpush2.msra.mxu0 0.0
    %1647 = vmatprep.subr.mxu0 0.0
    %1648 = vmatpush2.msra.mxu0 0.0
    %1649 = vmatprep.subr.mxu0 0.0
    %1650 = vmatpush2.msra.mxu0 0.0
    %1651 = vmatprep.subr.mxu0 0.0
    %1652 = vmatpush2.msra.mxu0 0.0
    %1653 = vmatprep.subr.mxu0 0.0
    %1654 = vmatpush2.msra.mxu0 0.0
    %1655 = vmatprep.subr.mxu0 0.0
    %1656 = vmatpush2.msra.mxu0 0.0
    %1657 = vmatprep.subr.mxu0 0.0
    %1658 = vmatpush2.msra.mxu0 0.0
    %1659 = vmatprep.mubr.f32.mxu0 0.0
    %1660 = vmatmul.mubr.f32.gmra.mxu0 %v1556
    %v1661 = vpop.f32.mrf.mxu0
    %v1662 = vadd.f32 0.0, %v1661
    %v1663 = vpop.f32.mrf.mxu0
    %1664 = vmatprep.mubr.f32.mxu0 0.0
    %1665 = vmatmul.mubr.f32.gmra.mxu0 %v1559
    %v1666 = vpop.f32.mrf.mxu0
    %v1667 = vadd.f32 0.0, %v1666
    %v1668 = vpop.f32.mrf.mxu0
    %1669 = vmatprep.mubr.f32.mxu0 0.0
    %1670 = vmatmul.mubr.f32.gmra.mxu0 %v1562
    %v1671 = vpop.f32.mrf.mxu0
    %v1672 = vadd.f32 0.0, %v1671
    %v1673 = vpop.f32.mrf.mxu0
    %1674 = vmatprep.mubr.f32.mxu0 0.0
    %1675 = vmatmul.mubr.f32.gmra.mxu0 %v1565
    %v1676 = vpop.f32.mrf.mxu0
    %v1677 = vadd.f32 0.0, %v1676
    %v1678 = vpop.f32.mrf.mxu0
    %1679 = vmatprep.mubr.f32.mxu0 0.0
    %1680 = vmatmul.mubr.f32.gmra.mxu0 %v1568
    %v1681 = vpop.f32.mrf.mxu0
    %v1682 = vadd.f32 0.0, %v1681
    %v1683 = vpop.f32.mrf.mxu0
    %1684 = vmatprep.mubr.f32.mxu0 0.0
    %1685 = vmatmul.mubr.f32.gmra.mxu0 %v1571
    %v1686 = vpop.f32.mrf.mxu0
    %v1687 = vadd.f32 0.0, %v1686
    %v1688 = vpop.f32.mrf.mxu0
    %1689 = vmatprep.mubr.f32.mxu0 0.0
    %1690 = vmatmul.mubr.f32.gmra.mxu0 %v1574
    %v1691 = vpop.f32.mrf.mxu0
    %v1692 = vadd.f32 0.0, %v1691
    %v1693 = vpop.f32.mrf.mxu0
    %1694 = vmatprep.mubr.f32.mxu0 0.0
    %1695 = vmatmul.mubr.f32.gmra.mxu0 %v1577
    %v1696 = vpop.f32.mrf.mxu0
    %v1697 = vadd.f32 0.0, %v1696
    %v1698 = vpop.f32.mrf.mxu0
    %1699 = vmatprep.mubr.f32.mxu0 0.0
    %1700 = vmatmul.mubr.f32.gmra.mxu0 %v1580
    %v1701 = vpop.f32.mrf.mxu0
    %v1702 = vadd.f32 0.0, %v1701
    %v1703 = vpop.f32.mrf.mxu0
    %1704 = vmatprep.mubr.f32.mxu0 0.0
    %1705 = vmatmul.mubr.f32.gmra.mxu0 %v1583
    %v1706 = vpop.f32.mrf.mxu0
    %v1707 = vadd.f32 0.0, %v1706
    %v1708 = vpop.f32.mrf.mxu0
    %1709 = vmatprep.mubr.f32.mxu0 0.0
    %1710 = vmatmul.mubr.f32.gmra.mxu0 %v1586
    %v1711 = vpop.f32.mrf.mxu0
    %v1712 = vadd.f32 0.0, %v1711
    %v1713 = vpop.f32.mrf.mxu0
    %1714 = vmatprep.mubr.f32.mxu0 0.0
    %1715 = vmatmul.mubr.f32.gmra.mxu0 %v1589
    %v1716 = vpop.f32.mrf.mxu0
    %v1717 = vadd.f32 0.0, %v1716
    %v1718 = vpop.f32.mrf.mxu0
    %1719 = vdwg.mxu0
    %1720 = vrot.lane.b32.xlu0 %v1662, 1
    %v1721 = vpop.permute.xlu0 %1720
    %1722 = vrot.lane.b32.xlu0 %v1667, 1
    %v1723 = vpop.permute.xlu0 %1722
    %1724 = vrot.lane.b32.xlu0 %v1672, 1
    %v1725 = vpop.permute.xlu0 %1724
    %1726 = vrot.lane.b32.xlu0 %v1677, 1
    %v1727 = vpop.permute.xlu0 %1726
    %v1728 = vlaneseq
    %v1729 = vshrl.u32 %v1728, 7
    %v1730 = vsub.s32 0, %v1729
    %v1731 = vrot.slane %v1541, %v1730
    %v1732 = vmul.f32 %v1721, %v1731
    %v1733 = vmul.f32 %v1723, %v1731
    %v1734 = vmul.f32 %v1725, %v1731
    %v1735 = vmul.f32 %v1727, %v1731
    %v1736 = vadd.f32 %v1732, %v1682
    %v1737 = vadd.f32 %v1733, %v1687
    %v1738 = vadd.f32 %v1734, %v1692
    %v1739 = vadd.f32 %v1735, %v1697
    %v1740 = vld [vmem:[%s6 + $0x160] sm:$0xff]
    %v1741 = vld [vmem:[%s6 + $0x168] sm:$0xff]
    %v1742 = vld [vmem:[%s6 + $0x170] sm:$0xff]
    %v1743 = vld [vmem:[%s6 + $0x178] sm:$0xff]
    %1745 = vset.pattern.permute.xlu0 0
    %1746 = vperm.xlu0 %1745, %v1740
    %v1747 = vpop.permute.xlu0 %1746
    %1750 = vset.pattern.permute.xlu0 0
    %1751 = vperm.xlu0 %1750, %v1741
    %v1752 = vpop.permute.xlu0 %1751
    %1755 = vset.pattern.permute.xlu0 0
    %1756 = vperm.xlu0 %1755, %v1742
    %v1757 = vpop.permute.xlu0 %1756
    %1760 = vset.pattern.permute.xlu0 0
    %1761 = vperm.xlu0 %1760, %v1743
    %v1762 = vpop.permute.xlu0 %1761
    %v1764 = vadd.f32 %v1736, %v1747
    %v1765 = vadd.f32 %v1737, %v1752
    %v1766 = vadd.f32 %v1738, %v1757
    %v1767 = vadd.f32 %v1739, %v1762
    %v1768 = vmax.f32 %v1764, 0.0
    %v1769 = vmax.f32 %v1765, 0.0
    %v1770 = vmax.f32 %v1766, 0.0
    %v1771 = vmax.f32 %v1767, 0.0
    %v1772 = vadd.f32 %v1768, %v1422
    %v1773 = vadd.f32 %v1769, %v1427
    %v1774 = vadd.f32 %v1770, %v1432
    %v1775 = vadd.f32 %v1771, %v1437
    %v1776 = vld [vmem:[%s2 + $0x60] sm:$0xff]
    %v1777 = vld [vmem:[%s2 + $0x68] sm:$0xff]
    %v1778 = vld [vmem:[%s2 + $0x70] sm:$0xff]
    %v1779 = vld [vmem:[%s2 + $0x78] sm:$0xff]
    %v1780 = vld [vmem:[%s2 + $0x80] sm:$0xff]
    %v1781 = vld [vmem:[%s2 + $0x88] sm:$0xff]
    %v1782 = vld [vmem:[%s2 + $0x90] sm:$0xff]
    %v1783 = vld [vmem:[%s2 + $0x98] sm:$0xff]
    %v1785 = vsel %vm149, %v1776, 0
    %v1788 = vsel %vm149, %v1777, 0
    %v1791 = vsel %vm149, %v1778, 0
    %v1794 = vsel %vm149, %v1779, 0
    %v1797 = vsel %vm149, %v1780, 0
    %v1800 = vsel %vm149, %v1781, 0
    %v1803 = vsel %vm149, %v1782, 0
    %v1806 = vsel %vm149, %v1783, 0
    %1808 = vmatprep.subr.mxu0 0.0
    %1809 = vmatpush1.msra.mxu0 0.0
    %1810 = vmatprep.subr.mxu0 0.0
    %1811 = vmatpush1.msra.mxu0 0.0
    %1812 = vmatprep.subr.mxu0 0.0
    %1813 = vmatpush1.msra.mxu0 0.0
    %1814 = vmatprep.subr.mxu0 0.0
    %1815 = vmatpush1.msra.mxu0 0.0
    %1816 = vmatprep.subr.mxu0 0.0
    %1817 = vmatpush1.msra.mxu0 0.0
    %1818 = vmatprep.subr.mxu0 0.0
    %1819 = vmatpush1.msra.mxu0 0.0
    %1820 = vmatprep.subr.mxu0 0.0
    %1821 = vmatpush1.msra.mxu0 0.0
    %1822 = vmatprep.subr.mxu0 0.0
    %1823 = vmatpush1.msra.mxu0 0.0
    %1824 = vmatprep.subr.mxu0 0.0
    %1825 = vmatpush1.msra.mxu0 0.0
    %1826 = vmatprep.subr.mxu0 0.0
    %1827 = vmatpush1.msra.mxu0 0.0
    %1828 = vmatprep.subr.mxu0 0.0
    %1829 = vmatpush1.msra.mxu0 0.0
    %1830 = vmatprep.subr.mxu0 0.0
    %1831 = vmatpush1.msra.mxu0 0.0
    %1832 = vmatprep.subr.mxu0 0.0
    %1833 = vmatpush1.msra.mxu0 %v1775
    %1834 = vmatprep.subr.mxu0 0.0
    %1835 = vmatpush1.msra.mxu0 %v1774
    %1836 = vmatprep.subr.mxu0 0.0
    %1837 = vmatpush1.msra.mxu0 %v1773
    %1838 = vmatprep.subr.mxu0 0.0
    %1839 = vmatpush1.msra.mxu0 %v1772
    %1840 = vmatprep.subr.mxu0 0.0
    %1841 = vmatpush2.msra.mxu0 0.0
    %1842 = vmatprep.subr.mxu0 0.0
    %1843 = vmatpush2.msra.mxu0 0.0
    %1844 = vmatprep.subr.mxu0 0.0
    %1845 = vmatpush2.msra.mxu0 0.0
    %1846 = vmatprep.subr.mxu0 0.0
    %1847 = vmatpush2.msra.mxu0 0.0
    %1848 = vmatprep.subr.mxu0 0.0
    %1849 = vmatpush2.msra.mxu0 0.0
    %1850 = vmatprep.subr.mxu0 0.0
    %1851 = vmatpush2.msra.mxu0 0.0
    %1852 = vmatprep.subr.mxu0 0.0
    %1853 = vmatpush2.msra.mxu0 0.0
    %1854 = vmatprep.subr.mxu0 0.0
    %1855 = vmatpush2.msra.mxu0 0.0
    %1856 = vmatprep.subr.mxu0 0.0
    %1857 = vmatpush2.msra.mxu0 0.0
    %1858 = vmatprep.subr.mxu0 0.0
    %1859 = vmatpush2.msra.mxu0 0.0
    %1860 = vmatprep.subr.mxu0 0.0
    %1861 = vmatpush2.msra.mxu0 0.0
    %1862 = vmatprep.subr.mxu0 0.0
    %1863 = vmatpush2.msra.mxu0 0.0
    %1864 = vmatprep.subr.mxu0 0.0
    %1865 = vmatpush2.msra.mxu0 0.0
    %1866 = vmatprep.subr.mxu0 0.0
    %1867 = vmatpush2.msra.mxu0 0.0
    %1868 = vmatprep.subr.mxu0 0.0
    %1869 = vmatpush2.msra.mxu0 0.0
    %1870 = vmatprep.subr.mxu0 0.0
    %1871 = vmatpush2.msra.mxu0 0.0
    %1872 = vmatprep.mubr.f32.mxu0 0.0
    %1873 = vmatmul.mubr.f32.gmra.mxu0 %v1785
    %v1874 = vpop.f32.mrf.mxu0
    %v1875 = vadd.f32 0.0, %v1874
    %v1876 = vpop.f32.mrf.mxu0
    %1877 = vmatprep.mubr.f32.mxu0 0.0
    %1878 = vmatmul.mubr.f32.gmra.mxu0 %v1788
    %v1879 = vpop.f32.mrf.mxu0
    %v1880 = vadd.f32 0.0, %v1879
    %v1881 = vpop.f32.mrf.mxu0
    %1882 = vmatprep.mubr.f32.mxu0 0.0
    %1883 = vmatmul.mubr.f32.gmra.mxu0 %v1791
    %v1884 = vpop.f32.mrf.mxu0
    %v1885 = vadd.f32 0.0, %v1884
    %v1886 = vpop.f32.mrf.mxu0
    %1887 = vmatprep.mubr.f32.mxu0 0.0
    %1888 = vmatmul.mubr.f32.gmra.mxu0 %v1794
    %v1889 = vpop.f32.mrf.mxu0
    %v1890 = vadd.f32 0.0, %v1889
    %v1891 = vpop.f32.mrf.mxu0
    %1892 = vmatprep.mubr.f32.mxu0 0.0
    %1893 = vmatmul.mubr.f32.gmra.mxu0 %v1797
    %v1894 = vpop.f32.mrf.mxu0
    %v1895 = vadd.f32 0.0, %v1894
    %v1896 = vpop.f32.mrf.mxu0
    %1897 = vmatprep.mubr.f32.mxu0 0.0
    %1898 = vmatmul.mubr.f32.gmra.mxu0 %v1800
    %v1899 = vpop.f32.mrf.mxu0
    %v1900 = vadd.f32 0.0, %v1899
    %v1901 = vpop.f32.mrf.mxu0
    %1902 = vmatprep.mubr.f32.mxu0 0.0
    %1903 = vmatmul.mubr.f32.gmra.mxu0 %v1803
    %v1904 = vpop.f32.mrf.mxu0
    %v1905 = vadd.f32 0.0, %v1904
    %v1906 = vpop.f32.mrf.mxu0
    %1907 = vmatprep.mubr.f32.mxu0 0.0
    %1908 = vmatmul.mubr.f32.gmra.mxu0 %v1806
    %v1909 = vpop.f32.mrf.mxu0
    %v1910 = vadd.f32 0.0, %v1909
    %v1911 = vpop.f32.mrf.mxu0
    %1912 = vdwg.mxu0
    %1913 = vrot.lane.b32.xlu0 %v1875, 1
    %v1914 = vpop.permute.xlu0 %1913
    %1915 = vrot.lane.b32.xlu0 %v1880, 1
    %v1916 = vpop.permute.xlu0 %1915
    %1917 = vrot.lane.b32.xlu0 %v1885, 1
    %v1918 = vpop.permute.xlu0 %1917
    %1919 = vrot.lane.b32.xlu0 %v1890, 1
    %v1920 = vpop.permute.xlu0 %1919
    %v1921 = vmul.f32 %v1914, %v1731
    %v1922 = vmul.f32 %v1916, %v1731
    %v1923 = vmul.f32 %v1918, %v1731
    %v1924 = vmul.f32 %v1920, %v1731
    %v1925 = vadd.f32 %v1921, %v1895
    %v1926 = vadd.f32 %v1922, %v1900
    %v1927 = vadd.f32 %v1923, %v1905
    %v1928 = vadd.f32 %v1924, %v1910
    %v1929 = vld [vmem:[%s6 + $0x180] sm:$0xff]
    %v1930 = vld [vmem:[%s6 + $0x188] sm:$0xff]
    %v1931 = vld [vmem:[%s6 + $0x190] sm:$0xff]
    %v1932 = vld [vmem:[%s6 + $0x198] sm:$0xff]
    %1934 = vset.pattern.permute.xlu0 0
    %1935 = vperm.xlu0 %1934, %v1929
    %v1936 = vpop.permute.xlu0 %1935
    %1939 = vset.pattern.permute.xlu0 0
    %1940 = vperm.xlu0 %1939, %v1930
    %v1941 = vpop.permute.xlu0 %1940
    %1944 = vset.pattern.permute.xlu0 0
    %1945 = vperm.xlu0 %1944, %v1931
    %v1946 = vpop.permute.xlu0 %1945
    %1949 = vset.pattern.permute.xlu0 0
    %1950 = vperm.xlu0 %1949, %v1932
    %v1951 = vpop.permute.xlu0 %1950
    %v1953 = vadd.f32 %v1925, %v1936
    %v1954 = vadd.f32 %v1926, %v1941
    %v1955 = vadd.f32 %v1927, %v1946
    %v1956 = vadd.f32 %v1928, %v1951
    %v1957 = vmax.f32 %v1953, 0.0
    %v1958 = vmax.f32 %v1954, 0.0
    %v1959 = vmax.f32 %v1955, 0.0
    %v1960 = vmax.f32 %v1956, 0.0
    %v1961 = vld [vmem:[%s6 + $0x1a0] sm:$0xff]
    %v1962 = vld [vmem:[%s6 + $0x1a8] sm:$0xff]
    %v1963 = vld [vmem:[%s6 + $0x1b0] sm:$0xff]
    %v1964 = vld [vmem:[%s6 + $0x1b8] sm:$0xff]
    %1966 = vset.pattern.permute.xlu0 0
    %1967 = vperm.xlu0 %1966, %v1961
    %v1968 = vpop.permute.xlu0 %1967
    %1971 = vset.pattern.permute.xlu0 0
    %1972 = vperm.xlu0 %1971, %v1962
    %v1973 = vpop.permute.xlu0 %1972
    %1976 = vset.pattern.permute.xlu0 0
    %1977 = vperm.xlu0 %1976, %v1963
    %v1978 = vpop.permute.xlu0 %1977
    %1981 = vset.pattern.permute.xlu0 0
    %1982 = vperm.xlu0 %1981, %v1964
    %v1983 = vpop.permute.xlu0 %1982
    %v1985 = vadd.f32 %v1702, %v1968
    %v1986 = vadd.f32 %v1707, %v1973
    %v1987 = vadd.f32 %v1712, %v1978
    %v1988 = vadd.f32 %v1717, %v1983
    %v1989 = vadd.f32 %v1957, %v1985
    %v1990 = vadd.f32 %v1958, %v1986
    %v1991 = vadd.f32 %v1959, %v1987
    %v1992 = vadd.f32 %v1960, %v1988
    %v1993 = vmax.f32 %v1989, 0.0
    %v1994 = vmax.f32 %v1990, 0.0
    %v1995 = vmax.f32 %v1991, 0.0
    %v1996 = vmax.f32 %v1992, 0.0
    %v1997 = vld [vmem:[%s2 + $0xa0] sm:$0xff]
    %v1998 = vld [vmem:[%s2 + $0xa8] sm:$0xff]
    %v1999 = vld [vmem:[%s2 + $0xb0] sm:$0xff]
    %v2000 = vld [vmem:[%s2 + $0xb8] sm:$0xff]
    %v2001 = vld [vmem:[%s2 + $0xc0] sm:$0xff]
    %v2002 = vld [vmem:[%s2 + $0xc8] sm:$0xff]
    %v2003 = vld [vmem:[%s2 + $0xd0] sm:$0xff]
    %v2004 = vld [vmem:[%s2 + $0xd8] sm:$0xff]
    %v2005 = vld [vmem:[%s2 + $0xe0] sm:$0xff]
    %v2006 = vld [vmem:[%s2 + $0xe8] sm:$0xff]
    %v2007 = vld [vmem:[%s2 + $0xf0] sm:$0xff]
    %v2008 = vld [vmem:[%s2 + $0xf8] sm:$0xff]
    %v2009 = vld [vmem:[%s2 + $0x100] sm:$0xff]
    %v2010 = vld [vmem:[%s2 + $0x108] sm:$0xff]
    %v2011 = vld [vmem:[%s2 + $0x110] sm:$0xff]
    %v2012 = vld [vmem:[%s2 + $0x118] sm:$0xff]
    %v2013 = vld [vmem:[%s2 + $0x120] sm:$0xff]
    %v2014 = vld [vmem:[%s2 + $0x128] sm:$0xff]
    %v2015 = vld [vmem:[%s2 + $0x130] sm:$0xff]
    %v2016 = vld [vmem:[%s2 + $0x138] sm:$0xff]
    %v2017 = vld [vmem:[%s2 + $0x140] sm:$0xff]
    %v2018 = vld [vmem:[%s2 + $0x148] sm:$0xff]
    %v2019 = vld [vmem:[%s2 + $0x150] sm:$0xff]
    %v2020 = vld [vmem:[%s2 + $0x158] sm:$0xff]
    %v2022 = vsel %vm149, %v1997, 0
    %v2025 = vsel %vm149, %v1998, 0
    %v2028 = vsel %vm149, %v1999, 0
    %v2031 = vsel %vm149, %v2000, 0
    %v2034 = vsel %vm149, %v2001, 0
    %v2037 = vsel %vm149, %v2002, 0
    %v2040 = vsel %vm149, %v2003, 0
    %v2043 = vsel %vm149, %v2004, 0
    %v2046 = vsel %vm149, %v2005, 0
    %v2049 = vsel %vm149, %v2006, 0
    %v2052 = vsel %vm149, %v2007, 0
    %v2055 = vsel %vm149, %v2008, 0
    %v2058 = vsel %vm149, %v2009, 0
    %v2061 = vsel %vm149, %v2010, 0
    %v2064 = vsel %vm149, %v2011, 0
    %v2067 = vsel %vm149, %v2012, 0
    %v2070 = vsel %vm149, %v2013, 0
    %v2073 = vsel %vm149, %v2014, 0
    %v2076 = vsel %vm149, %v2015, 0
    %v2079 = vsel %vm149, %v2016, 0
    %v2082 = vsel %vm149, %v2017, 0
    %v2085 = vsel %vm149, %v2018, 0
    %v2088 = vsel %vm149, %v2019, 0
    %v2091 = vsel %vm149, %v2020, 0
    %2093 = vmatprep.subr.mxu0 0.0
    %2094 = vmatpush1.msra.mxu0 0.0
    %2095 = vmatprep.subr.mxu0 0.0
    %2096 = vmatpush1.msra.mxu0 0.0
    %2097 = vmatprep.subr.mxu0 0.0
    %2098 = vmatpush1.msra.mxu0 0.0
    %2099 = vmatprep.subr.mxu0 0.0
    %2100 = vmatpush1.msra.mxu0 0.0
    %2101 = vmatprep.subr.mxu0 0.0
    %2102 = vmatpush1.msra.mxu0 0.0
    %2103 = vmatprep.subr.mxu0 0.0
    %2104 = vmatpush1.msra.mxu0 0.0
    %2105 = vmatprep.subr.mxu0 0.0
    %2106 = vmatpush1.msra.mxu0 0.0
    %2107 = vmatprep.subr.mxu0 0.0
    %2108 = vmatpush1.msra.mxu0 0.0
    %2109 = vmatprep.subr.mxu0 0.0
    %2110 = vmatpush1.msra.mxu0 0.0
    %2111 = vmatprep.subr.mxu0 0.0
    %2112 = vmatpush1.msra.mxu0 0.0
    %2113 = vmatprep.subr.mxu0 0.0
    %2114 = vmatpush1.msra.mxu0 0.0
    %2115 = vmatprep.subr.mxu0 0.0
    %2116 = vmatpush1.msra.mxu0 0.0
    %2117 = vmatprep.subr.mxu0 0.0
    %2118 = vmatpush1.msra.mxu0 %v1996
    %2119 = vmatprep.subr.mxu0 0.0
    %2120 = vmatpush1.msra.mxu0 %v1995
    %2121 = vmatprep.subr.mxu0 0.0
    %2122 = vmatpush1.msra.mxu0 %v1994
    %2123 = vmatprep.subr.mxu0 0.0
    %2124 = vmatpush1.msra.mxu0 %v1993
    %2125 = vmatprep.subr.mxu0 0.0
    %2126 = vmatpush2.msra.mxu0 0.0
    %2127 = vmatprep.subr.mxu0 0.0
    %2128 = vmatpush2.msra.mxu0 0.0
    %2129 = vmatprep.subr.mxu0 0.0
    %2130 = vmatpush2.msra.mxu0 0.0
    %2131 = vmatprep.subr.mxu0 0.0
    %2132 = vmatpush2.msra.mxu0 0.0
    %2133 = vmatprep.subr.mxu0 0.0
    %2134 = vmatpush2.msra.mxu0 0.0
    %2135 = vmatprep.subr.mxu0 0.0
    %2136 = vmatpush2.msra.mxu0 0.0
    %2137 = vmatprep.subr.mxu0 0.0
    %2138 = vmatpush2.msra.mxu0 0.0
    %2139 = vmatprep.subr.mxu0 0.0
    %2140 = vmatpush2.msra.mxu0 0.0
    %2141 = vmatprep.subr.mxu0 0.0
    %2142 = vmatpush2.msra.mxu0 0.0
    %2143 = vmatprep.subr.mxu0 0.0
    %2144 = vmatpush2.msra.mxu0 0.0
    %2145 = vmatprep.subr.mxu0 0.0
    %2146 = vmatpush2.msra.mxu0 0.0
    %2147 = vmatprep.subr.mxu0 0.0
    %2148 = vmatpush2.msra.mxu0 0.0
    %2149 = vmatprep.subr.mxu0 0.0
    %2150 = vmatpush2.msra.mxu0 0.0
    %2151 = vmatprep.subr.mxu0 0.0
    %2152 = vmatpush2.msra.mxu0 0.0
    %2153 = vmatprep.subr.mxu0 0.0
    %2154 = vmatpush2.msra.mxu0 0.0
    %2155 = vmatprep.subr.mxu0 0.0
    %2156 = vmatpush2.msra.mxu0 0.0
    %2157 = vmatprep.mubr.f32.mxu0 0.0
    %2158 = vmatmul.mubr.f32.gmra.mxu0 %v2022
    %v2159 = vpop.f32.mrf.mxu0
    %v2160 = vadd.f32 0.0, %v2159
    %v2161 = vpop.f32.mrf.mxu0
    %2162 = vmatprep.mubr.f32.mxu0 0.0
    %2163 = vmatmul.mubr.f32.gmra.mxu0 %v2025
    %v2164 = vpop.f32.mrf.mxu0
    %v2165 = vadd.f32 0.0, %v2164
    %v2166 = vpop.f32.mrf.mxu0
    %2167 = vmatprep.mubr.f32.mxu0 0.0
    %2168 = vmatmul.mubr.f32.gmra.mxu0 %v2028
    %v2169 = vpop.f32.mrf.mxu0
    %v2170 = vadd.f32 0.0, %v2169
    %v2171 = vpop.f32.mrf.mxu0
    %2172 = vmatprep.mubr.f32.mxu0 0.0
    %2173 = vmatmul.mubr.f32.gmra.mxu0 %v2031
    %v2174 = vpop.f32.mrf.mxu0
    %v2175 = vadd.f32 0.0, %v2174
    %v2176 = vpop.f32.mrf.mxu0
    %2177 = vmatprep.mubr.f32.mxu0 0.0
    %2178 = vmatmul.mubr.f32.gmra.mxu0 %v2034
    %v2179 = vpop.f32.mrf.mxu0
    %v2180 = vadd.f32 0.0, %v2179
    %v2181 = vpop.f32.mrf.mxu0
    %2182 = vmatprep.mubr.f32.mxu0 0.0
    %2183 = vmatmul.mubr.f32.gmra.mxu0 %v2037
    %v2184 = vpop.f32.mrf.mxu0
    %v2185 = vadd.f32 0.0, %v2184
    %v2186 = vpop.f32.mrf.mxu0
    %2187 = vmatprep.mubr.f32.mxu0 0.0
    %2188 = vmatmul.mubr.f32.gmra.mxu0 %v2040
    %v2189 = vpop.f32.mrf.mxu0
    %v2190 = vadd.f32 0.0, %v2189
    %v2191 = vpop.f32.mrf.mxu0
    %2192 = vmatprep.mubr.f32.mxu0 0.0
    %2193 = vmatmul.mubr.f32.gmra.mxu0 %v2043
    %v2194 = vpop.f32.mrf.mxu0
    %v2195 = vadd.f32 0.0, %v2194
    %v2196 = vpop.f32.mrf.mxu0
    %2197 = vmatprep.mubr.f32.mxu0 0.0
    %2198 = vmatmul.mubr.f32.gmra.mxu0 %v2046
    %v2199 = vpop.f32.mrf.mxu0
    %v2200 = vadd.f32 0.0, %v2199
    %v2201 = vpop.f32.mrf.mxu0
    %2202 = vmatprep.mubr.f32.mxu0 0.0
    %2203 = vmatmul.mubr.f32.gmra.mxu0 %v2049
    %v2204 = vpop.f32.mrf.mxu0
    %v2205 = vadd.f32 0.0, %v2204
    %v2206 = vpop.f32.mrf.mxu0
    %2207 = vmatprep.mubr.f32.mxu0 0.0
    %2208 = vmatmul.mubr.f32.gmra.mxu0 %v2052
    %v2209 = vpop.f32.mrf.mxu0
    %v2210 = vadd.f32 0.0, %v2209
    %v2211 = vpop.f32.mrf.mxu0
    %2212 = vmatprep.mubr.f32.mxu0 0.0
    %2213 = vmatmul.mubr.f32.gmra.mxu0 %v2055
    %v2214 = vpop.f32.mrf.mxu0
    %v2215 = vadd.f32 0.0, %v2214
    %v2216 = vpop.f32.mrf.mxu0
    %2217 = vmatprep.mubr.f32.mxu0 0.0
    %2218 = vmatmul.mubr.f32.gmra.mxu0 %v2058
    %v2219 = vpop.f32.mrf.mxu0
    %v2220 = vadd.f32 0.0, %v2219
    %v2221 = vpop.f32.mrf.mxu0
    %2222 = vmatprep.mubr.f32.mxu0 0.0
    %2223 = vmatmul.mubr.f32.gmra.mxu0 %v2061
    %v2224 = vpop.f32.mrf.mxu0
    %v2225 = vadd.f32 0.0, %v2224
    %v2226 = vpop.f32.mrf.mxu0
    %2227 = vmatprep.mubr.f32.mxu0 0.0
    %2228 = vmatmul.mubr.f32.gmra.mxu0 %v2064
    %v2229 = vpop.f32.mrf.mxu0
    %v2230 = vadd.f32 0.0, %v2229
    %v2231 = vpop.f32.mrf.mxu0
    %2232 = vmatprep.mubr.f32.mxu0 0.0
    %2233 = vmatmul.mubr.f32.gmra.mxu0 %v2067
    %v2234 = vpop.f32.mrf.mxu0
    %v2235 = vadd.f32 0.0, %v2234
    %v2236 = vpop.f32.mrf.mxu0
    %2237 = vmatprep.mubr.f32.mxu0 0.0
    %2238 = vmatmul.mubr.f32.gmra.mxu0 %v2070
    %v2239 = vpop.f32.mrf.mxu0
    %v2240 = vadd.f32 0.0, %v2239
    %v2241 = vpop.f32.mrf.mxu0
    %2242 = vmatprep.mubr.f32.mxu0 0.0
    %2243 = vmatmul.mubr.f32.gmra.mxu0 %v2073
    %v2244 = vpop.f32.mrf.mxu0
    %v2245 = vadd.f32 0.0, %v2244
    %v2246 = vpop.f32.mrf.mxu0
    %2247 = vmatprep.mubr.f32.mxu0 0.0
    %2248 = vmatmul.mubr.f32.gmra.mxu0 %v2076
    %v2249 = vpop.f32.mrf.mxu0
    %v2250 = vadd.f32 0.0, %v2249
    %v2251 = vpop.f32.mrf.mxu0
    %2252 = vmatprep.mubr.f32.mxu0 0.0
    %2253 = vmatmul.mubr.f32.gmra.mxu0 %v2079
    %v2254 = vpop.f32.mrf.mxu0
    %v2255 = vadd.f32 0.0, %v2254
    %v2256 = vpop.f32.mrf.mxu0
    %2257 = vmatprep.mubr.f32.mxu0 0.0
    %2258 = vmatmul.mubr.f32.gmra.mxu0 %v2082
    %v2259 = vpop.f32.mrf.mxu0
    %v2260 = vadd.f32 0.0, %v2259
    %v2261 = vpop.f32.mrf.mxu0
    %2262 = vmatprep.mubr.f32.mxu0 0.0
    %2263 = vmatmul.mubr.f32.gmra.mxu0 %v2085
    %v2264 = vpop.f32.mrf.mxu0
    %v2265 = vadd.f32 0.0, %v2264
    %v2266 = vpop.f32.mrf.mxu0
    %2267 = vmatprep.mubr.f32.mxu0 0.0
    %2268 = vmatmul.mubr.f32.gmra.mxu0 %v2088
    %v2269 = vpop.f32.mrf.mxu0
    %v2270 = vadd.f32 0.0, %v2269
    %v2271 = vpop.f32.mrf.mxu0
    %2272 = vmatprep.mubr.f32.mxu0 0.0
    %2273 = vmatmul.mubr.f32.gmra.mxu0 %v2091
    %v2274 = vpop.f32.mrf.mxu0
    %v2275 = vadd.f32 0.0, %v2274
    %v2276 = vpop.f32.mrf.mxu0
    %2277 = vdwg.mxu0
    %2278 = vrot.lane.b32.xlu0 %v2160, 1
    %v2279 = vpop.permute.xlu0 %2278
    %2280 = vrot.lane.b32.xlu0 %v2165, 1
    %v2281 = vpop.permute.xlu0 %2280
    %2282 = vrot.lane.b32.xlu0 %v2170, 1
    %v2283 = vpop.permute.xlu0 %2282
    %2284 = vrot.lane.b32.xlu0 %v2175, 1
    %v2285 = vpop.permute.xlu0 %2284
    %2286 = vrot.lane.b32.xlu0 %v2180, 1
    %v2287 = vpop.permute.xlu0 %2286
    %2288 = vrot.lane.b32.xlu0 %v2185, 1
    %v2289 = vpop.permute.xlu0 %2288
    %2290 = vrot.lane.b32.xlu0 %v2190, 1
    %v2291 = vpop.permute.xlu0 %2290
    %2292 = vrot.lane.b32.xlu0 %v2195, 1
    %v2293 = vpop.permute.xlu0 %2292
    %v2294 = vmul.f32 %v2279, %v1731
    %v2295 = vmul.f32 %v2281, %v1731
    %v2296 = vmul.f32 %v2283, %v1731
    %v2297 = vmul.f32 %v2285, %v1731
    %v2298 = vmul.f32 %v2287, %v1731
    %v2299 = vmul.f32 %v2289, %v1731
    %v2300 = vmul.f32 %v2291, %v1731
    %v2301 = vmul.f32 %v2293, %v1731
    %v2302 = vadd.f32 %v2294, %v2200
    %v2303 = vadd.f32 %v2295, %v2205
    %v2304 = vadd.f32 %v2296, %v2210
    %v2305 = vadd.f32 %v2297, %v2215
    %v2306 = vadd.f32 %v2298, %v2220
    %v2307 = vadd.f32 %v2299, %v2225
    %v2308 = vadd.f32 %v2300, %v2230
    %v2309 = vadd.f32 %v2301, %v2235
    %v2310 = vld [vmem:[%s6 + $0x1c0] sm:$0xff]
    %v2311 = vld [vmem:[%s6 + $0x1c8] sm:$0xff]
    %v2312 = vld [vmem:[%s6 + $0x1d0] sm:$0xff]
    %v2313 = vld [vmem:[%s6 + $0x1d8] sm:$0xff]
    %v2314 = vld [vmem:[%s6 + $0x1e0] sm:$0xff]
    %v2315 = vld [vmem:[%s6 + $0x1e8] sm:$0xff]
    %v2316 = vld [vmem:[%s6 + $0x1f0] sm:$0xff]
    %v2317 = vld [vmem:[%s6 + $0x1f8] sm:$0xff]
    %2319 = vset.pattern.permute.xlu0 0
    %2320 = vperm.xlu0 %2319, %v2310
    %v2321 = vpop.permute.xlu0 %2320
    %2324 = vset.pattern.permute.xlu0 0
    %2325 = vperm.xlu0 %2324, %v2311
    %v2326 = vpop.permute.xlu0 %2325
    %2329 = vset.pattern.permute.xlu0 0
    %2330 = vperm.xlu0 %2329, %v2312
    %v2331 = vpop.permute.xlu0 %2330
    %2334 = vset.pattern.permute.xlu0 0
    %2335 = vperm.xlu0 %2334, %v2313
    %v2336 = vpop.permute.xlu0 %2335
    %2339 = vset.pattern.permute.xlu0 0
    %2340 = vperm.xlu0 %2339, %v2314
    %v2341 = vpop.permute.xlu0 %2340
    %2344 = vset.pattern.permute.xlu0 0
    %2345 = vperm.xlu0 %2344, %v2315
    %v2346 = vpop.permute.xlu0 %2345
    %2349 = vset.pattern.permute.xlu0 0
    %2350 = vperm.xlu0 %2349, %v2316
    %v2351 = vpop.permute.xlu0 %2350
    %2354 = vset.pattern.permute.xlu0 0
    %2355 = vperm.xlu0 %2354, %v2317
    %v2356 = vpop.permute.xlu0 %2355
    %v2358 = vadd.f32 %v2302, %v2321
    %v2359 = vadd.f32 %v2303, %v2326
    %v2360 = vadd.f32 %v2304, %v2331
    %v2361 = vadd.f32 %v2305, %v2336
    %v2362 = vadd.f32 %v2306, %v2341
    %v2363 = vadd.f32 %v2307, %v2346
    %v2364 = vadd.f32 %v2308, %v2351
    %v2365 = vadd.f32 %v2309, %v2356
    %v2366 = vmax.f32 %v2358, 0.0
    %v2367 = vmax.f32 %v2359, 0.0
    %v2368 = vmax.f32 %v2360, 0.0
    %v2369 = vmax.f32 %v2361, 0.0
    %v2370 = vmax.f32 %v2362, 0.0
    %v2371 = vmax.f32 %v2363, 0.0
    %v2372 = vmax.f32 %v2364, 0.0
    %v2373 = vmax.f32 %v2365, 0.0
    %v2374 = vadd.f32 %v2366, %v1442
    %v2375 = vadd.f32 %v2367, %v1447
    %v2376 = vadd.f32 %v2368, %v1452
    %v2377 = vadd.f32 %v2369, %v1457
    %v2378 = vadd.f32 %v2370, %v1462
    %v2379 = vadd.f32 %v2371, %v1467
    %v2380 = vadd.f32 %v2372, %v1472
    %v2381 = vadd.f32 %v2373, %v1477
    %v2382 = vld [vmem:[%s2 + $0x160] sm:$0xff]
    %v2383 = vld [vmem:[%s2 + $0x168] sm:$0xff]
    %v2384 = vld [vmem:[%s2 + $0x170] sm:$0xff]
    %v2385 = vld [vmem:[%s2 + $0x178] sm:$0xff]
    %v2386 = vld [vmem:[%s2 + $0x180] sm:$0xff]
    %v2387 = vld [vmem:[%s2 + $0x188] sm:$0xff]
    %v2388 = vld [vmem:[%s2 + $0x190] sm:$0xff]
    %v2389 = vld [vmem:[%s2 + $0x198] sm:$0xff]
    %v2390 = vld [vmem:[%s2 + $0x1a0] sm:$0xff]
    %v2391 = vld [vmem:[%s2 + $0x1a8] sm:$0xff]
    %v2392 = vld [vmem:[%s2 + $0x1b0] sm:$0xff]
    %v2393 = vld [vmem:[%s2 + $0x1b8] sm:$0xff]
    %v2394 = vld [vmem:[%s2 + $0x1c0] sm:$0xff]
    %v2395 = vld [vmem:[%s2 + $0x1c8] sm:$0xff]
    %v2396 = vld [vmem:[%s2 + $0x1d0] sm:$0xff]
    %v2397 = vld [vmem:[%s2 + $0x1d8] sm:$0xff]
    %vm2398 = vcmask 523264
    %v2400 = vsel %vm2398, %v2382, 0
    %v2403 = vsel %vm2398, %v2383, 0
    %v2406 = vsel %vm2398, %v2384, 0
    %v2409 = vsel %vm2398, %v2385, 0
    %v2412 = vsel %vm2398, %v2386, 0
    %v2415 = vsel %vm2398, %v2387, 0
    %v2418 = vsel %vm2398, %v2388, 0
    %v2421 = vsel %vm2398, %v2389, 0
    %v2424 = vsel %vm2398, %v2390, 0
    %v2427 = vsel %vm2398, %v2391, 0
    %v2430 = vsel %vm2398, %v2392, 0
    %v2433 = vsel %vm2398, %v2393, 0
    %v2436 = vsel %vm2398, %v2394, 0
    %v2439 = vsel %vm2398, %v2395, 0
    %v2442 = vsel %vm2398, %v2396, 0
    %v2445 = vsel %vm2398, %v2397, 0
    %2447 = vmatprep.subr.mxu0 0.0
    %2448 = vmatpush1.msra.mxu0 0.0
    %2449 = vmatprep.subr.mxu0 0.0
    %2450 = vmatpush1.msra.mxu0 0.0
    %2451 = vmatprep.subr.mxu0 0.0
    %2452 = vmatpush1.msra.mxu0 0.0
    %2453 = vmatprep.subr.mxu0 0.0
    %2454 = vmatpush1.msra.mxu0 0.0
    %2455 = vmatprep.subr.mxu0 0.0
    %2456 = vmatpush1.msra.mxu0 0.0
    %2457 = vmatprep.subr.mxu0 0.0
    %2458 = vmatpush1.msra.mxu0 0.0
    %2459 = vmatprep.subr.mxu0 0.0
    %2460 = vmatpush1.msra.mxu0 0.0
    %2461 = vmatprep.subr.mxu0 0.0
    %2462 = vmatpush1.msra.mxu0 0.0
    %2463 = vmatprep.subr.mxu0 0.0
    %2464 = vmatpush1.msra.mxu0 %v2381
    %2465 = vmatprep.subr.mxu0 0.0
    %2466 = vmatpush1.msra.mxu0 %v2380
    %2467 = vmatprep.subr.mxu0 0.0
    %2468 = vmatpush1.msra.mxu0 %v2379
    %2469 = vmatprep.subr.mxu0 0.0
    %2470 = vmatpush1.msra.mxu0 %v2378
    %2471 = vmatprep.subr.mxu0 0.0
    %2472 = vmatpush1.msra.mxu0 %v2377
    %2473 = vmatprep.subr.mxu0 0.0
    %2474 = vmatpush1.msra.mxu0 %v2376
    %2475 = vmatprep.subr.mxu0 0.0
    %2476 = vmatpush1.msra.mxu0 %v2375
    %2477 = vmatprep.subr.mxu0 0.0
    %2478 = vmatpush1.msra.mxu0 %v2374
    %2479 = vmatprep.subr.mxu0 0.0
    %2480 = vmatpush2.msra.mxu0 0.0
    %2481 = vmatprep.subr.mxu0 0.0
    %2482 = vmatpush2.msra.mxu0 0.0
    %2483 = vmatprep.subr.mxu0 0.0
    %2484 = vmatpush2.msra.mxu0 0.0
    %2485 = vmatprep.subr.mxu0 0.0
    %2486 = vmatpush2.msra.mxu0 0.0
    %2487 = vmatprep.subr.mxu0 0.0
    %2488 = vmatpush2.msra.mxu0 0.0
    %2489 = vmatprep.subr.mxu0 0.0
    %2490 = vmatpush2.msra.mxu0 0.0
    %2491 = vmatprep.subr.mxu0 0.0
    %2492 = vmatpush2.msra.mxu0 0.0
    %2493 = vmatprep.subr.mxu0 0.0
    %2494 = vmatpush2.msra.mxu0 0.0
    %2495 = vmatprep.subr.mxu0 0.0
    %2496 = vmatpush2.msra.mxu0 0.0
    %2497 = vmatprep.subr.mxu0 0.0
    %2498 = vmatpush2.msra.mxu0 0.0
    %2499 = vmatprep.subr.mxu0 0.0
    %2500 = vmatpush2.msra.mxu0 0.0
    %2501 = vmatprep.subr.mxu0 0.0
    %2502 = vmatpush2.msra.mxu0 0.0
    %2503 = vmatprep.subr.mxu0 0.0
    %2504 = vmatpush2.msra.mxu0 0.0
    %2505 = vmatprep.subr.mxu0 0.0
    %2506 = vmatpush2.msra.mxu0 0.0
    %2507 = vmatprep.subr.mxu0 0.0
    %2508 = vmatpush2.msra.mxu0 0.0
    %2509 = vmatprep.subr.mxu0 0.0
    %2510 = vmatpush2.msra.mxu0 0.0
    %2511 = vmatprep.mubr.f32.mxu0 0.0
    %2512 = vmatmul.mubr.f32.gmra.mxu0 %v2400
    %v2513 = vpop.f32.mrf.mxu0
    %v2514 = vadd.f32 0.0, %v2513
    %v2515 = vpop.f32.mrf.mxu0
    %2516 = vmatprep.mubr.f32.mxu0 0.0
    %2517 = vmatmul.mubr.f32.gmra.mxu0 %v2403
    %v2518 = vpop.f32.mrf.mxu0
    %v2519 = vadd.f32 0.0, %v2518
    %v2520 = vpop.f32.mrf.mxu0
    %2521 = vmatprep.mubr.f32.mxu0 0.0
    %2522 = vmatmul.mubr.f32.gmra.mxu0 %v2406
    %v2523 = vpop.f32.mrf.mxu0
    %v2524 = vadd.f32 0.0, %v2523
    %v2525 = vpop.f32.mrf.mxu0
    %2526 = vmatprep.mubr.f32.mxu0 0.0
    %2527 = vmatmul.mubr.f32.gmra.mxu0 %v2409
    %v2528 = vpop.f32.mrf.mxu0
    %v2529 = vadd.f32 0.0, %v2528
    %v2530 = vpop.f32.mrf.mxu0
    %2531 = vmatprep.mubr.f32.mxu0 0.0
    %2532 = vmatmul.mubr.f32.gmra.mxu0 %v2412
    %v2533 = vpop.f32.mrf.mxu0
    %v2534 = vadd.f32 0.0, %v2533
    %v2535 = vpop.f32.mrf.mxu0
    %2536 = vmatprep.mubr.f32.mxu0 0.0
    %2537 = vmatmul.mubr.f32.gmra.mxu0 %v2415
    %v2538 = vpop.f32.mrf.mxu0
    %v2539 = vadd.f32 0.0, %v2538
    %v2540 = vpop.f32.mrf.mxu0
    %2541 = vmatprep.mubr.f32.mxu0 0.0
    %2542 = vmatmul.mubr.f32.gmra.mxu0 %v2418
    %v2543 = vpop.f32.mrf.mxu0
    %v2544 = vadd.f32 0.0, %v2543
    %v2545 = vpop.f32.mrf.mxu0
    %2546 = vmatprep.mubr.f32.mxu0 0.0
    %2547 = vmatmul.mubr.f32.gmra.mxu0 %v2421
    %v2548 = vpop.f32.mrf.mxu0
    %v2549 = vadd.f32 0.0, %v2548
    %v2550 = vpop.f32.mrf.mxu0
    %2551 = vmatprep.mubr.f32.mxu0 0.0
    %2552 = vmatmul.mubr.f32.gmra.mxu0 %v2424
    %v2553 = vpop.f32.mrf.mxu0
    %v2554 = vadd.f32 0.0, %v2553
    %v2555 = vpop.f32.mrf.mxu0
    %2556 = vmatprep.mubr.f32.mxu0 0.0
    %2557 = vmatmul.mubr.f32.gmra.mxu0 %v2427
    %v2558 = vpop.f32.mrf.mxu0
    %v2559 = vadd.f32 0.0, %v2558
    %v2560 = vpop.f32.mrf.mxu0
    %2561 = vmatprep.mubr.f32.mxu0 0.0
    %2562 = vmatmul.mubr.f32.gmra.mxu0 %v2430
    %v2563 = vpop.f32.mrf.mxu0
    %v2564 = vadd.f32 0.0, %v2563
    %v2565 = vpop.f32.mrf.mxu0
    %2566 = vmatprep.mubr.f32.mxu0 0.0
    %2567 = vmatmul.mubr.f32.gmra.mxu0 %v2433
    %v2568 = vpop.f32.mrf.mxu0
    %v2569 = vadd.f32 0.0, %v2568
    %v2570 = vpop.f32.mrf.mxu0
    %2571 = vmatprep.mubr.f32.mxu0 0.0
    %2572 = vmatmul.mubr.f32.gmra.mxu0 %v2436
    %v2573 = vpop.f32.mrf.mxu0
    %v2574 = vadd.f32 0.0, %v2573
    %v2575 = vpop.f32.mrf.mxu0
    %2576 = vmatprep.mubr.f32.mxu0 0.0
    %2577 = vmatmul.mubr.f32.gmra.mxu0 %v2439
    %v2578 = vpop.f32.mrf.mxu0
    %v2579 = vadd.f32 0.0, %v2578
    %v2580 = vpop.f32.mrf.mxu0
    %2581 = vmatprep.mubr.f32.mxu0 0.0
    %2582 = vmatmul.mubr.f32.gmra.mxu0 %v2442
    %v2583 = vpop.f32.mrf.mxu0
    %v2584 = vadd.f32 0.0, %v2583
    %v2585 = vpop.f32.mrf.mxu0
    %2586 = vmatprep.mubr.f32.mxu0 0.0
    %2587 = vmatmul.mubr.f32.gmra.mxu0 %v2445
    %v2588 = vpop.f32.mrf.mxu0
    %v2589 = vadd.f32 0.0, %v2588
    %v2590 = vpop.f32.mrf.mxu0
    %2591 = vdwg.mxu0
    %2592 = vrot.lane.b32.xlu0 %v2514, 1
    %v2593 = vpop.permute.xlu0 %2592
    %2594 = vrot.lane.b32.xlu0 %v2519, 1
    %v2595 = vpop.permute.xlu0 %2594
    %2596 = vrot.lane.b32.xlu0 %v2524, 1
    %v2597 = vpop.permute.xlu0 %2596
    %2598 = vrot.lane.b32.xlu0 %v2529, 1
    %v2599 = vpop.permute.xlu0 %2598
    %2600 = vrot.lane.b32.xlu0 %v2534, 1
    %v2601 = vpop.permute.xlu0 %2600
    %2602 = vrot.lane.b32.xlu0 %v2539, 1
    %v2603 = vpop.permute.xlu0 %2602
    %2604 = vrot.lane.b32.xlu0 %v2544, 1
    %v2605 = vpop.permute.xlu0 %2604
    %2606 = vrot.lane.b32.xlu0 %v2549, 1
    %v2607 = vpop.permute.xlu0 %2606
    %v2608 = vmul.f32 %v2593, %v1731
    %v2609 = vmul.f32 %v2595, %v1731
    %v2610 = vmul.f32 %v2597, %v1731
    %v2611 = vmul.f32 %v2599, %v1731
    %v2612 = vmul.f32 %v2601, %v1731
    %v2613 = vmul.f32 %v2603, %v1731
    %v2614 = vmul.f32 %v2605, %v1731
    %v2615 = vmul.f32 %v2607, %v1731
    %v2616 = vadd.f32 %v2608, %v2554
    %v2617 = vadd.f32 %v2609, %v2559
    %v2618 = vadd.f32 %v2610, %v2564
    %v2619 = vadd.f32 %v2611, %v2569
    %v2620 = vadd.f32 %v2612, %v2574
    %v2621 = vadd.f32 %v2613, %v2579
    %v2622 = vadd.f32 %v2614, %v2584
    %v2623 = vadd.f32 %v2615, %v2589
    %v2624 = vld [vmem:[%s6 + $0x200] sm:$0xff]
    %v2625 = vld [vmem:[%s6 + $0x208] sm:$0xff]
    %v2626 = vld [vmem:[%s6 + $0x210] sm:$0xff]
    %v2627 = vld [vmem:[%s6 + $0x218] sm:$0xff]
    %v2628 = vld [vmem:[%s6 + $0x220] sm:$0xff]
    %v2629 = vld [vmem:[%s6 + $0x228] sm:$0xff]
    %v2630 = vld [vmem:[%s6 + $0x230] sm:$0xff]
    %v2631 = vld [vmem:[%s6 + $0x238] sm:$0xff]
    %2633 = vset.pattern.permute.xlu0 0
    %2634 = vperm.xlu0 %2633, %v2624
    %v2635 = vpop.permute.xlu0 %2634
    %2638 = vset.pattern.permute.xlu0 0
    %2639 = vperm.xlu0 %2638, %v2625
    %v2640 = vpop.permute.xlu0 %2639
    %2643 = vset.pattern.permute.xlu0 0
    %2644 = vperm.xlu0 %2643, %v2626
    %v2645 = vpop.permute.xlu0 %2644
    %2648 = vset.pattern.permute.xlu0 0
    %2649 = vperm.xlu0 %2648, %v2627
    %v2650 = vpop.permute.xlu0 %2649
    %2653 = vset.pattern.permute.xlu0 0
    %2654 = vperm.xlu0 %2653, %v2628
    %v2655 = vpop.permute.xlu0 %2654
    %2658 = vset.pattern.permute.xlu0 0
    %2659 = vperm.xlu0 %2658, %v2629
    %v2660 = vpop.permute.xlu0 %2659
    %2663 = vset.pattern.permute.xlu0 0
    %2664 = vperm.xlu0 %2663, %v2630
    %v2665 = vpop.permute.xlu0 %2664
    %2668 = vset.pattern.permute.xlu0 0
    %2669 = vperm.xlu0 %2668, %v2631
    %v2670 = vpop.permute.xlu0 %2669
    %v2672 = vadd.f32 %v2616, %v2635
    %v2673 = vadd.f32 %v2617, %v2640
    %v2674 = vadd.f32 %v2618, %v2645
    %v2675 = vadd.f32 %v2619, %v2650
    %v2676 = vadd.f32 %v2620, %v2655
    %v2677 = vadd.f32 %v2621, %v2660
    %v2678 = vadd.f32 %v2622, %v2665
    %v2679 = vadd.f32 %v2623, %v2670
    %v2680 = vmax.f32 %v2672, 0.0
    %v2681 = vmax.f32 %v2673, 0.0
    %v2682 = vmax.f32 %v2674, 0.0
    %v2683 = vmax.f32 %v2675, 0.0
    %v2684 = vmax.f32 %v2676, 0.0
    %v2685 = vmax.f32 %v2677, 0.0
    %v2686 = vmax.f32 %v2678, 0.0
    %v2687 = vmax.f32 %v2679, 0.0
    %v2688 = vld [vmem:[%s6 + $0x240] sm:$0xff]
    %v2689 = vld [vmem:[%s6 + $0x248] sm:$0xff]
    %v2690 = vld [vmem:[%s6 + $0x250] sm:$0xff]
    %v2691 = vld [vmem:[%s6 + $0x258] sm:$0xff]
    %v2692 = vld [vmem:[%s6 + $0x260] sm:$0xff]
    %v2693 = vld [vmem:[%s6 + $0x268] sm:$0xff]
    %v2694 = vld [vmem:[%s6 + $0x270] sm:$0xff]
    %v2695 = vld [vmem:[%s6 + $0x278] sm:$0xff]
    %2697 = vset.pattern.permute.xlu0 0
    %2698 = vperm.xlu0 %2697, %v2688
    %v2699 = vpop.permute.xlu0 %2698
    %2702 = vset.pattern.permute.xlu0 0
    %2703 = vperm.xlu0 %2702, %v2689
    %v2704 = vpop.permute.xlu0 %2703
    %2707 = vset.pattern.permute.xlu0 0
    %2708 = vperm.xlu0 %2707, %v2690
    %v2709 = vpop.permute.xlu0 %2708
    %2712 = vset.pattern.permute.xlu0 0
    %2713 = vperm.xlu0 %2712, %v2691
    %v2714 = vpop.permute.xlu0 %2713
    %2717 = vset.pattern.permute.xlu0 0
    %2718 = vperm.xlu0 %2717, %v2692
    %v2719 = vpop.permute.xlu0 %2718
    %2722 = vset.pattern.permute.xlu0 0
    %2723 = vperm.xlu0 %2722, %v2693
    %v2724 = vpop.permute.xlu0 %2723
    %2727 = vset.pattern.permute.xlu0 0
    %2728 = vperm.xlu0 %2727, %v2694
    %v2729 = vpop.permute.xlu0 %2728
    %2732 = vset.pattern.permute.xlu0 0
    %2733 = vperm.xlu0 %2732, %v2695
    %v2734 = vpop.permute.xlu0 %2733
    %v2736 = vadd.f32 %v2240, %v2699
    %v2737 = vadd.f32 %v2245, %v2704
    %v2738 = vadd.f32 %v2250, %v2709
    %v2739 = vadd.f32 %v2255, %v2714
    %v2740 = vadd.f32 %v2260, %v2719
    %v2741 = vadd.f32 %v2265, %v2724
    %v2742 = vadd.f32 %v2270, %v2729
    %v2743 = vadd.f32 %v2275, %v2734
    %v2744 = vadd.f32 %v2680, %v2736
    %v2745 = vadd.f32 %v2681, %v2737
    %v2746 = vadd.f32 %v2682, %v2738
    %v2747 = vadd.f32 %v2683, %v2739
    %v2748 = vadd.f32 %v2684, %v2740
    %v2749 = vadd.f32 %v2685, %v2741
    %v2750 = vadd.f32 %v2686, %v2742
    %v2751 = vadd.f32 %v2687, %v2743
    %v2752 = vmax.f32 %v2744, 0.0
    %v2753 = vmax.f32 %v2745, 0.0
    %v2754 = vmax.f32 %v2746, 0.0
    %v2755 = vmax.f32 %v2747, 0.0
    %v2756 = vmax.f32 %v2748, 0.0
    %v2757 = vmax.f32 %v2749, 0.0
    %v2758 = vmax.f32 %v2750, 0.0
    %v2759 = vmax.f32 %v2751, 0.0
    %v2760 = vld [vmem:[%s7 + $0x28] sm:$0x1]
    %v2761 = vld [vmem:[%s2 + $0x1e0] sm:$0xff]
    %v2762 = vld [vmem:[%s2 + $0x1e8] sm:$0xff]
    %v2763 = vld [vmem:[%s2 + $0x1f0] sm:$0xff]
    %v2764 = vld [vmem:[%s2 + $0x1f8] sm:$0xff]
    %v2765 = vld [vmem:[%s2 + $0x200] sm:$0xff]
    %v2766 = vld [vmem:[%s2 + $0x208] sm:$0xff]
    %v2767 = vld [vmem:[%s2 + $0x210] sm:$0xff]
    %v2768 = vld [vmem:[%s2 + $0x218] sm:$0xff]
    %v2769 = vld [vmem:[%s2 + $0x220] sm:$0xff]
    %v2770 = vld [vmem:[%s2 + $0x228] sm:$0xff]
    %v2771 = vld [vmem:[%s2 + $0x230] sm:$0xff]
    %v2772 = vld [vmem:[%s2 + $0x238] sm:$0xff]
    %v2773 = vld [vmem:[%s2 + $0x240] sm:$0xff]
    %v2774 = vld [vmem:[%s2 + $0x248] sm:$0xff]
    %v2775 = vld [vmem:[%s2 + $0x250] sm:$0xff]
    %v2776 = vld [vmem:[%s2 + $0x258] sm:$0xff]
    %v2778 = vsel %vm2398, %v2761, 0
    %v2781 = vsel %vm2398, %v2762, 0
    %v2784 = vsel %vm2398, %v2763, 0
    %v2787 = vsel %vm2398, %v2764, 0
    %v2790 = vsel %vm2398, %v2765, 0
    %v2793 = vsel %vm2398, %v2766, 0
    %v2796 = vsel %vm2398, %v2767, 0
    %v2799 = vsel %vm2398, %v2768, 0
    %v2802 = vsel %vm2398, %v2769, 0
    %v2805 = vsel %vm2398, %v2770, 0
    %v2808 = vsel %vm2398, %v2771, 0
    %v2811 = vsel %vm2398, %v2772, 0
    %v2814 = vsel %vm2398, %v2773, 0
    %v2817 = vsel %vm2398, %v2774, 0
    %v2820 = vsel %vm2398, %v2775, 0
    %v2823 = vsel %vm2398, %v2776, 0
    %2825 = vmatprep.subr.mxu0 0.0
    %2826 = vmatpush1.msra.mxu0 0.0
    %2827 = vmatprep.subr.mxu0 0.0
    %2828 = vmatpush1.msra.mxu0 0.0
    %2829 = vmatprep.subr.mxu0 0.0
    %2830 = vmatpush1.msra.mxu0 0.0
    %2831 = vmatprep.subr.mxu0 0.0
    %2832 = vmatpush1.msra.mxu0 0.0
    %2833 = vmatprep.subr.mxu0 0.0
    %2834 = vmatpush1.msra.mxu0 0.0
    %2835 = vmatprep.subr.mxu0 0.0
    %2836 = vmatpush1.msra.mxu0 0.0
    %2837 = vmatprep.subr.mxu0 0.0
    %2838 = vmatpush1.msra.mxu0 0.0
    %2839 = vmatprep.subr.mxu0 0.0
    %2840 = vmatpush1.msra.mxu0 0.0
    %2841 = vmatprep.subr.mxu0 0.0
    %2842 = vmatpush1.msra.mxu0 %v2759
    %2843 = vmatprep.subr.mxu0 0.0
    %2844 = vmatpush1.msra.mxu0 %v2758
    %2845 = vmatprep.subr.mxu0 0.0
    %2846 = vmatpush1.msra.mxu0 %v2757
    %2847 = vmatprep.subr.mxu0 0.0
    %2848 = vmatpush1.msra.mxu0 %v2756
    %2849 = vmatprep.subr.mxu0 0.0
    %2850 = vmatpush1.msra.mxu0 %v2755
    %2851 = vmatprep.subr.mxu0 0.0
    %2852 = vmatpush1.msra.mxu0 %v2754
    %2853 = vmatprep.subr.mxu0 0.0
    %2854 = vmatpush1.msra.mxu0 %v2753
    %2855 = vmatprep.subr.mxu0 0.0
    %2856 = vmatpush1.msra.mxu0 %v2752
    %2857 = vmatprep.subr.mxu0 0.0
    %2858 = vmatpush2.msra.mxu0 0.0
    %2859 = vmatprep.subr.mxu0 0.0
    %2860 = vmatpush2.msra.mxu0 0.0
    %2861 = vmatprep.subr.mxu0 0.0
    %2862 = vmatpush2.msra.mxu0 0.0
    %2863 = vmatprep.subr.mxu0 0.0
    %2864 = vmatpush2.msra.mxu0 0.0
    %2865 = vmatprep.subr.mxu0 0.0
    %2866 = vmatpush2.msra.mxu0 0.0
    %2867 = vmatprep.subr.mxu0 0.0
    %2868 = vmatpush2.msra.mxu0 0.0
    %2869 = vmatprep.subr.mxu0 0.0
    %2870 = vmatpush2.msra.mxu0 0.0
    %2871 = vmatprep.subr.mxu0 0.0
    %2872 = vmatpush2.msra.mxu0 0.0
    %2873 = vmatprep.subr.mxu0 0.0
    %2874 = vmatpush2.msra.mxu0 0.0
    %2875 = vmatprep.subr.mxu0 0.0
    %2876 = vmatpush2.msra.mxu0 0.0
    %2877 = vmatprep.subr.mxu0 0.0
    %2878 = vmatpush2.msra.mxu0 0.0
    %2879 = vmatprep.subr.mxu0 0.0
    %2880 = vmatpush2.msra.mxu0 0.0
    %2881 = vmatprep.subr.mxu0 0.0
    %2882 = vmatpush2.msra.mxu0 0.0
    %2883 = vmatprep.subr.mxu0 0.0
    %2884 = vmatpush2.msra.mxu0 0.0
    %2885 = vmatprep.subr.mxu0 0.0
    %2886 = vmatpush2.msra.mxu0 0.0
    %2887 = vmatprep.subr.mxu0 0.0
    %2888 = vmatpush2.msra.mxu0 0.0
    %2889 = vmatprep.mubr.f32.mxu0 0.0
    %2890 = vmatmul.mubr.f32.gmra.mxu0 %v2778
    %v2891 = vpop.f32.mrf.mxu0
    %v2892 = vadd.f32 0.0, %v2891
    %v2893 = vpop.f32.mrf.mxu0
    %2894 = vmatprep.mubr.f32.mxu0 0.0
    %2895 = vmatmul.mubr.f32.gmra.mxu0 %v2781
    %v2896 = vpop.f32.mrf.mxu0
    %v2897 = vadd.f32 0.0, %v2896
    %v2898 = vpop.f32.mrf.mxu0
    %2899 = vmatprep.mubr.f32.mxu0 0.0
    %2900 = vmatmul.mubr.f32.gmra.mxu0 %v2784
    %v2901 = vpop.f32.mrf.mxu0
    %v2902 = vadd.f32 0.0, %v2901
    %v2903 = vpop.f32.mrf.mxu0
    %2904 = vmatprep.mubr.f32.mxu0 0.0
    %2905 = vmatmul.mubr.f32.gmra.mxu0 %v2787
    %v2906 = vpop.f32.mrf.mxu0
    %v2907 = vadd.f32 0.0, %v2906
    %v2908 = vpop.f32.mrf.mxu0
    %2909 = vmatprep.mubr.f32.mxu0 0.0
    %2910 = vmatmul.mubr.f32.gmra.mxu0 %v2790
    %v2911 = vpop.f32.mrf.mxu0
    %v2912 = vadd.f32 0.0, %v2911
    %v2913 = vpop.f32.mrf.mxu0
    %2914 = vmatprep.mubr.f32.mxu0 0.0
    %2915 = vmatmul.mubr.f32.gmra.mxu0 %v2793
    %v2916 = vpop.f32.mrf.mxu0
    %v2917 = vadd.f32 0.0, %v2916
    %v2918 = vpop.f32.mrf.mxu0
    %2919 = vmatprep.mubr.f32.mxu0 0.0
    %2920 = vmatmul.mubr.f32.gmra.mxu0 %v2796
    %v2921 = vpop.f32.mrf.mxu0
    %v2922 = vadd.f32 0.0, %v2921
    %v2923 = vpop.f32.mrf.mxu0
    %2924 = vmatprep.mubr.f32.mxu0 0.0
    %2925 = vmatmul.mubr.f32.gmra.mxu0 %v2799
    %v2926 = vpop.f32.mrf.mxu0
    %v2927 = vadd.f32 0.0, %v2926
    %v2928 = vpop.f32.mrf.mxu0
    %2929 = vmatprep.mubr.f32.mxu0 0.0
    %2930 = vmatmul.mubr.f32.gmra.mxu0 %v2802
    %v2931 = vpop.f32.mrf.mxu0
    %v2932 = vadd.f32 0.0, %v2931
    %v2933 = vpop.f32.mrf.mxu0
    %2934 = vmatprep.mubr.f32.mxu0 0.0
    %2935 = vmatmul.mubr.f32.gmra.mxu0 %v2805
    %v2936 = vpop.f32.mrf.mxu0
    %v2937 = vadd.f32 0.0, %v2936
    %v2938 = vpop.f32.mrf.mxu0
    %2939 = vmatprep.mubr.f32.mxu0 0.0
    %2940 = vmatmul.mubr.f32.gmra.mxu0 %v2808
    %v2941 = vpop.f32.mrf.mxu0
    %v2942 = vadd.f32 0.0, %v2941
    %v2943 = vpop.f32.mrf.mxu0
    %2944 = vmatprep.mubr.f32.mxu0 0.0
    %2945 = vmatmul.mubr.f32.gmra.mxu0 %v2811
    %v2946 = vpop.f32.mrf.mxu0
    %v2947 = vadd.f32 0.0, %v2946
    %v2948 = vpop.f32.mrf.mxu0
    %2949 = vmatprep.mubr.f32.mxu0 0.0
    %2950 = vmatmul.mubr.f32.gmra.mxu0 %v2814
    %v2951 = vpop.f32.mrf.mxu0
    %v2952 = vadd.f32 0.0, %v2951
    %v2953 = vpop.f32.mrf.mxu0
    %2954 = vmatprep.mubr.f32.mxu0 0.0
    %2955 = vmatmul.mubr.f32.gmra.mxu0 %v2817
    %v2956 = vpop.f32.mrf.mxu0
    %v2957 = vadd.f32 0.0, %v2956
    %v2958 = vpop.f32.mrf.mxu0
    %2959 = vmatprep.mubr.f32.mxu0 0.0
    %2960 = vmatmul.mubr.f32.gmra.mxu0 %v2820
    %v2961 = vpop.f32.mrf.mxu0
    %v2962 = vadd.f32 0.0, %v2961
    %v2963 = vpop.f32.mrf.mxu0
    %2964 = vmatprep.mubr.f32.mxu0 0.0
    %2965 = vmatmul.mubr.f32.gmra.mxu0 %v2823
    %v2966 = vpop.f32.mrf.mxu0
    %v2967 = vadd.f32 0.0, %v2966
    %v2968 = vpop.f32.mrf.mxu0
    %2969 = vdwg.mxu0
    %2970 = vrot.lane.b32.xlu0 %v2892, 2
    %v2971 = vpop.permute.xlu0 %2970
    %2972 = vrot.lane.b32.xlu0 %v2897, 2
    %v2973 = vpop.permute.xlu0 %2972
    %2974 = vrot.lane.b32.xlu0 %v2902, 2
    %v2975 = vpop.permute.xlu0 %2974
    %2976 = vrot.lane.b32.xlu0 %v2907, 2
    %v2977 = vpop.permute.xlu0 %2976
    %2978 = vrot.lane.b32.xlu0 %v2912, 2
    %v2979 = vpop.permute.xlu0 %2978
    %2980 = vrot.lane.b32.xlu0 %v2917, 2
    %v2981 = vpop.permute.xlu0 %2980
    %2982 = vrot.lane.b32.xlu0 %v2922, 2
    %v2983 = vpop.permute.xlu0 %2982
    %2984 = vrot.lane.b32.xlu0 %v2927, 2
    %v2985 = vpop.permute.xlu0 %2984
    %v2986 = vlaneseq
    %v2987 = vshrl.u32 %v2986, 7
    %v2988 = vsub.s32 0, %v2987
    %v2989 = vrot.slane %v2760, %v2988
    %v2990 = vmul.f32 %v2971, %v2989
    %v2991 = vmul.f32 %v2973, %v2989
    %v2992 = vmul.f32 %v2975, %v2989
    %v2993 = vmul.f32 %v2977, %v2989
    %v2994 = vmul.f32 %v2979, %v2989
    %v2995 = vmul.f32 %v2981, %v2989
    %v2996 = vmul.f32 %v2983, %v2989
    %v2997 = vmul.f32 %v2985, %v2989
    %v2998 = vadd.f32 %v2990, %v2932
    %v2999 = vadd.f32 %v2991, %v2937
    %v3000 = vadd.f32 %v2992, %v2942
    %v3001 = vadd.f32 %v2993, %v2947
    %v3002 = vadd.f32 %v2994, %v2952
    %v3003 = vadd.f32 %v2995, %v2957
    %v3004 = vadd.f32 %v2996, %v2962
    %v3005 = vadd.f32 %v2997, %v2967
    %v3006 = vld [vmem:[%s6 + $0x280] sm:$0xff]
    %v3007 = vld [vmem:[%s6 + $0x288] sm:$0xff]
    %v3008 = vld [vmem:[%s6 + $0x290] sm:$0xff]
    %v3009 = vld [vmem:[%s6 + $0x298] sm:$0xff]
    %v3010 = vld [vmem:[%s6 + $0x2a0] sm:$0xff]
    %v3011 = vld [vmem:[%s6 + $0x2a8] sm:$0xff]
    %v3012 = vld [vmem:[%s6 + $0x2b0] sm:$0xff]
    %v3013 = vld [vmem:[%s6 + $0x2b8] sm:$0xff]
    %3015 = vset.pattern.permute.xlu0 0
    %3016 = vperm.xlu0 %3015, %v3006
    %v3017 = vpop.permute.xlu0 %3016
    %3020 = vset.pattern.permute.xlu0 0
    %3021 = vperm.xlu0 %3020, %v3007
    %v3022 = vpop.permute.xlu0 %3021
    %3025 = vset.pattern.permute.xlu0 0
    %3026 = vperm.xlu0 %3025, %v3008
    %v3027 = vpop.permute.xlu0 %3026
    %3030 = vset.pattern.permute.xlu0 0
    %3031 = vperm.xlu0 %3030, %v3009
    %v3032 = vpop.permute.xlu0 %3031
    %3035 = vset.pattern.permute.xlu0 0
    %3036 = vperm.xlu0 %3035, %v3010
    %v3037 = vpop.permute.xlu0 %3036
    %3040 = vset.pattern.permute.xlu0 0
    %3041 = vperm.xlu0 %3040, %v3011
    %v3042 = vpop.permute.xlu0 %3041
    %3045 = vset.pattern.permute.xlu0 0
    %3046 = vperm.xlu0 %3045, %v3012
    %v3047 = vpop.permute.xlu0 %3046
    %3050 = vset.pattern.permute.xlu0 0
    %3051 = vperm.xlu0 %3050, %v3013
    %v3052 = vpop.permute.xlu0 %3051
    %v3054 = vadd.f32 %v2998, %v3017
    %v3055 = vadd.f32 %v2999, %v3022
    %v3056 = vadd.f32 %v3000, %v3027
    %v3057 = vadd.f32 %v3001, %v3032
    %v3058 = vadd.f32 %v3002, %v3037
    %v3059 = vadd.f32 %v3003, %v3042
    %v3060 = vadd.f32 %v3004, %v3047
    %v3061 = vadd.f32 %v3005, %v3052
    %v3062 = vmax.f32 %v3054, 0.0
    %v3063 = vmax.f32 %v3055, 0.0
    %v3064 = vmax.f32 %v3056, 0.0
    %v3065 = vmax.f32 %v3057, 0.0
    %v3066 = vmax.f32 %v3058, 0.0
    %v3067 = vmax.f32 %v3059, 0.0
    %v3068 = vmax.f32 %v3060, 0.0
    %v3069 = vmax.f32 %v3061, 0.0
    %v3070 = vadd.f32 %v3062, %v1482
    %v3071 = vadd.f32 %v3063, %v1487
    %v3072 = vadd.f32 %v3064, %v1492
    %v3073 = vadd.f32 %v3065, %v1497
    %v3074 = vadd.f32 %v3066, %v1502
    %v3075 = vadd.f32 %v3067, %v1507
    %v3076 = vadd.f32 %v3068, %v1512
    %v3077 = vadd.f32 %v3069, %v1517
    %v3078 = vld [vmem:[%s2 + $0x260] sm:$0xff]
    %v3079 = vld [vmem:[%s2 + $0x268] sm:$0xff]
    %v3080 = vld [vmem:[%s2 + $0x270] sm:$0xff]
    %v3081 = vld [vmem:[%s2 + $0x278] sm:$0xff]
    %v3082 = vld [vmem:[%s2 + $0x280] sm:$0xff]
    %v3083 = vld [vmem:[%s2 + $0x288] sm:$0xff]
    %v3084 = vld [vmem:[%s2 + $0x290] sm:$0xff]
    %v3085 = vld [vmem:[%s2 + $0x298] sm:$0xff]
    %v3086 = vld [vmem:[%s2 + $0x2a0] sm:$0xff]
    %v3087 = vld [vmem:[%s2 + $0x2a8] sm:$0xff]
    %v3088 = vld [vmem:[%s2 + $0x2b0] sm:$0xff]
    %v3089 = vld [vmem:[%s2 + $0x2b8] sm:$0xff]
    %v3090 = vld [vmem:[%s2 + $0x2c0] sm:$0xff]
    %v3091 = vld [vmem:[%s2 + $0x2c8] sm:$0xff]
    %v3092 = vld [vmem:[%s2 + $0x2d0] sm:$0xff]
    %v3093 = vld [vmem:[%s2 + $0x2d8] sm:$0xff]
    %v3095 = vsel %vm2398, %v3078, 0
    %v3098 = vsel %vm2398, %v3079, 0
    %v3101 = vsel %vm2398, %v3080, 0
    %v3104 = vsel %vm2398, %v3081, 0
    %v3107 = vsel %vm2398, %v3082, 0
    %v3110 = vsel %vm2398, %v3083, 0
    %v3113 = vsel %vm2398, %v3084, 0
    %v3116 = vsel %vm2398, %v3085, 0
    %v3119 = vsel %vm2398, %v3086, 0
    %v3122 = vsel %vm2398, %v3087, 0
    %v3125 = vsel %vm2398, %v3088, 0
    %v3128 = vsel %vm2398, %v3089, 0
    %v3131 = vsel %vm2398, %v3090, 0
    %v3134 = vsel %vm2398, %v3091, 0
    %v3137 = vsel %vm2398, %v3092, 0
    %v3140 = vsel %vm2398, %v3093, 0
    %3142 = vmatprep.subr.mxu0 0.0
    %3143 = vmatpush1.msra.mxu0 0.0
    %3144 = vmatprep.subr.mxu0 0.0
    %3145 = vmatpush1.msra.mxu0 0.0
    %3146 = vmatprep.subr.mxu0 0.0
    %3147 = vmatpush1.msra.mxu0 0.0
    %3148 = vmatprep.subr.mxu0 0.0
    %3149 = vmatpush1.msra.mxu0 0.0
    %3150 = vmatprep.subr.mxu0 0.0
    %3151 = vmatpush1.msra.mxu0 0.0
    %3152 = vmatprep.subr.mxu0 0.0
    %3153 = vmatpush1.msra.mxu0 0.0
    %3154 = vmatprep.subr.mxu0 0.0
    %3155 = vmatpush1.msra.mxu0 0.0
    %3156 = vmatprep.subr.mxu0 0.0
    %3157 = vmatpush1.msra.mxu0 0.0
    %3158 = vmatprep.subr.mxu0 0.0
    %3159 = vmatpush1.msra.mxu0 %v3077
    %3160 = vmatprep.subr.mxu0 0.0
    %3161 = vmatpush1.msra.mxu0 %v3076
    %3162 = vmatprep.subr.mxu0 0.0
    %3163 = vmatpush1.msra.mxu0 %v3075
    %3164 = vmatprep.subr.mxu0 0.0
    %3165 = vmatpush1.msra.mxu0 %v3074
    %3166 = vmatprep.subr.mxu0 0.0
    %3167 = vmatpush1.msra.mxu0 %v3073
    %3168 = vmatprep.subr.mxu0 0.0
    %3169 = vmatpush1.msra.mxu0 %v3072
    %3170 = vmatprep.subr.mxu0 0.0
    %3171 = vmatpush1.msra.mxu0 %v3071
    %3172 = vmatprep.subr.mxu0 0.0
    %3173 = vmatpush1.msra.mxu0 %v3070
    %3174 = vmatprep.subr.mxu0 0.0
    %3175 = vmatpush2.msra.mxu0 0.0
    %3176 = vmatprep.subr.mxu0 0.0
    %3177 = vmatpush2.msra.mxu0 0.0
    %3178 = vmatprep.subr.mxu0 0.0
    %3179 = vmatpush2.msra.mxu0 0.0
    %3180 = vmatprep.subr.mxu0 0.0
    %3181 = vmatpush2.msra.mxu0 0.0
    %3182 = vmatprep.subr.mxu0 0.0
    %3183 = vmatpush2.msra.mxu0 0.0
    %3184 = vmatprep.subr.mxu0 0.0
    %3185 = vmatpush2.msra.mxu0 0.0
    %3186 = vmatprep.subr.mxu0 0.0
    %3187 = vmatpush2.msra.mxu0 0.0
    %3188 = vmatprep.subr.mxu0 0.0
    %3189 = vmatpush2.msra.mxu0 0.0
    %3190 = vmatprep.subr.mxu0 0.0
    %3191 = vmatpush2.msra.mxu0 0.0
    %3192 = vmatprep.subr.mxu0 0.0
    %3193 = vmatpush2.msra.mxu0 0.0
    %3194 = vmatprep.subr.mxu0 0.0
    %3195 = vmatpush2.msra.mxu0 0.0
    %3196 = vmatprep.subr.mxu0 0.0
    %3197 = vmatpush2.msra.mxu0 0.0
    %3198 = vmatprep.subr.mxu0 0.0
    %3199 = vmatpush2.msra.mxu0 0.0
    %3200 = vmatprep.subr.mxu0 0.0
    %3201 = vmatpush2.msra.mxu0 0.0
    %3202 = vmatprep.subr.mxu0 0.0
    %3203 = vmatpush2.msra.mxu0 0.0
    %3204 = vmatprep.subr.mxu0 0.0
    %3205 = vmatpush2.msra.mxu0 0.0
    %3206 = vmatprep.mubr.f32.mxu0 0.0
    %3207 = vmatmul.mubr.f32.gmra.mxu0 %v3095
    %v3208 = vpop.f32.mrf.mxu0
    %v3209 = vadd.f32 0.0, %v3208
    %v3210 = vpop.f32.mrf.mxu0
    %3211 = vmatprep.mubr.f32.mxu0 0.0
    %3212 = vmatmul.mubr.f32.gmra.mxu0 %v3098
    %v3213 = vpop.f32.mrf.mxu0
    %v3214 = vadd.f32 0.0, %v3213
    %v3215 = vpop.f32.mrf.mxu0
    %3216 = vmatprep.mubr.f32.mxu0 0.0
    %3217 = vmatmul.mubr.f32.gmra.mxu0 %v3101
    %v3218 = vpop.f32.mrf.mxu0
    %v3219 = vadd.f32 0.0, %v3218
    %v3220 = vpop.f32.mrf.mxu0
    %3221 = vmatprep.mubr.f32.mxu0 0.0
    %3222 = vmatmul.mubr.f32.gmra.mxu0 %v3104
    %v3223 = vpop.f32.mrf.mxu0
    %v3224 = vadd.f32 0.0, %v3223
    %v3225 = vpop.f32.mrf.mxu0
    %3226 = vmatprep.mubr.f32.mxu0 0.0
    %3227 = vmatmul.mubr.f32.gmra.mxu0 %v3107
    %v3228 = vpop.f32.mrf.mxu0
    %v3229 = vadd.f32 0.0, %v3228
    %v3230 = vpop.f32.mrf.mxu0
    %3231 = vmatprep.mubr.f32.mxu0 0.0
    %3232 = vmatmul.mubr.f32.gmra.mxu0 %v3110
    %v3233 = vpop.f32.mrf.mxu0
    %v3234 = vadd.f32 0.0, %v3233
    %v3235 = vpop.f32.mrf.mxu0
    %3236 = vmatprep.mubr.f32.mxu0 0.0
    %3237 = vmatmul.mubr.f32.gmra.mxu0 %v3113
    %v3238 = vpop.f32.mrf.mxu0
    %v3239 = vadd.f32 0.0, %v3238
    %v3240 = vpop.f32.mrf.mxu0
    %3241 = vmatprep.mubr.f32.mxu0 0.0
    %3242 = vmatmul.mubr.f32.gmra.mxu0 %v3116
    %v3243 = vpop.f32.mrf.mxu0
    %v3244 = vadd.f32 0.0, %v3243
    %v3245 = vpop.f32.mrf.mxu0
    %3246 = vmatprep.mubr.f32.mxu0 0.0
    %3247 = vmatmul.mubr.f32.gmra.mxu0 %v3119
    %v3248 = vpop.f32.mrf.mxu0
    %v3249 = vadd.f32 0.0, %v3248
    %v3250 = vpop.f32.mrf.mxu0
    %3251 = vmatprep.mubr.f32.mxu0 0.0
    %3252 = vmatmul.mubr.f32.gmra.mxu0 %v3122
    %v3253 = vpop.f32.mrf.mxu0
    %v3254 = vadd.f32 0.0, %v3253
    %v3255 = vpop.f32.mrf.mxu0
    %3256 = vmatprep.mubr.f32.mxu0 0.0
    %3257 = vmatmul.mubr.f32.gmra.mxu0 %v3125
    %v3258 = vpop.f32.mrf.mxu0
    %v3259 = vadd.f32 0.0, %v3258
    %v3260 = vpop.f32.mrf.mxu0
    %3261 = vmatprep.mubr.f32.mxu0 0.0
    %3262 = vmatmul.mubr.f32.gmra.mxu0 %v3128
    %v3263 = vpop.f32.mrf.mxu0
    %v3264 = vadd.f32 0.0, %v3263
    %v3265 = vpop.f32.mrf.mxu0
    %3266 = vmatprep.mubr.f32.mxu0 0.0
    %3267 = vmatmul.mubr.f32.gmra.mxu0 %v3131
    %v3268 = vpop.f32.mrf.mxu0
    %v3269 = vadd.f32 0.0, %v3268
    %v3270 = vpop.f32.mrf.mxu0
    %3271 = vmatprep.mubr.f32.mxu0 0.0
    %3272 = vmatmul.mubr.f32.gmra.mxu0 %v3134
    %v3273 = vpop.f32.mrf.mxu0
    %v3274 = vadd.f32 0.0, %v3273
    %v3275 = vpop.f32.mrf.mxu0
    %3276 = vmatprep.mubr.f32.mxu0 0.0
    %3277 = vmatmul.mubr.f32.gmra.mxu0 %v3137
    %v3278 = vpop.f32.mrf.mxu0
    %v3279 = vadd.f32 0.0, %v3278
    %v3280 = vpop.f32.mrf.mxu0
    %3281 = vmatprep.mubr.f32.mxu0 0.0
    %3282 = vmatmul.mubr.f32.gmra.mxu0 %v3140
    %v3283 = vpop.f32.mrf.mxu0
    %v3284 = vadd.f32 0.0, %v3283
    %v3285 = vpop.f32.mrf.mxu0
    %3286 = vdwg.mxu0
    %3287 = vrot.lane.b32.xlu0 %v3209, 2
    %v3288 = vpop.permute.xlu0 %3287
    %3289 = vrot.lane.b32.xlu0 %v3214, 2
    %v3290 = vpop.permute.xlu0 %3289
    %3291 = vrot.lane.b32.xlu0 %v3219, 2
    %v3292 = vpop.permute.xlu0 %3291
    %3293 = vrot.lane.b32.xlu0 %v3224, 2
    %v3294 = vpop.permute.xlu0 %3293
    %3295 = vrot.lane.b32.xlu0 %v3229, 2
    %v3296 = vpop.permute.xlu0 %3295
    %3297 = vrot.lane.b32.xlu0 %v3234, 2
    %v3298 = vpop.permute.xlu0 %3297
    %3299 = vrot.lane.b32.xlu0 %v3239, 2
    %v3300 = vpop.permute.xlu0 %3299
    %3301 = vrot.lane.b32.xlu0 %v3244, 2
    %v3302 = vpop.permute.xlu0 %3301
    %v3303 = vmul.f32 %v3288, %v2989
    %v3304 = vmul.f32 %v3290, %v2989
    %v3305 = vmul.f32 %v3292, %v2989
    %v3306 = vmul.f32 %v3294, %v2989
    %v3307 = vmul.f32 %v3296, %v2989
    %v3308 = vmul.f32 %v3298, %v2989
    %v3309 = vmul.f32 %v3300, %v2989
    %v3310 = vmul.f32 %v3302, %v2989
    %v3311 = vadd.f32 %v3303, %v3249
    %v3312 = vadd.f32 %v3304, %v3254
    %v3313 = vadd.f32 %v3305, %v3259
    %v3314 = vadd.f32 %v3306, %v3264
    %v3315 = vadd.f32 %v3307, %v3269
    %v3316 = vadd.f32 %v3308, %v3274
    %v3317 = vadd.f32 %v3309, %v3279
    %v3318 = vadd.f32 %v3310, %v3284
    %v3319 = vld [vmem:[%s6 + $0x2c0] sm:$0xff]
    %v3320 = vld [vmem:[%s6 + $0x2c8] sm:$0xff]
    %v3321 = vld [vmem:[%s6 + $0x2d0] sm:$0xff]
    %v3322 = vld [vmem:[%s6 + $0x2d8] sm:$0xff]
    %v3323 = vld [vmem:[%s6 + $0x2e0] sm:$0xff]
    %v3324 = vld [vmem:[%s6 + $0x2e8] sm:$0xff]
    %v3325 = vld [vmem:[%s6 + $0x2f0] sm:$0xff]
    %v3326 = vld [vmem:[%s6 + $0x2f8] sm:$0xff]
    %3328 = vset.pattern.permute.xlu0 0
    %3329 = vperm.xlu0 %3328, %v3319
    %v3330 = vpop.permute.xlu0 %3329
    %3333 = vset.pattern.permute.xlu0 0
    %3334 = vperm.xlu0 %3333, %v3320
    %v3335 = vpop.permute.xlu0 %3334
    %3338 = vset.pattern.permute.xlu0 0
    %3339 = vperm.xlu0 %3338, %v3321
    %v3340 = vpop.permute.xlu0 %3339
    %3343 = vset.pattern.permute.xlu0 0
    %3344 = vperm.xlu0 %3343, %v3322
    %v3345 = vpop.permute.xlu0 %3344
    %3348 = vset.pattern.permute.xlu0 0
    %3349 = vperm.xlu0 %3348, %v3323
    %v3350 = vpop.permute.xlu0 %3349
    %3353 = vset.pattern.permute.xlu0 0
    %3354 = vperm.xlu0 %3353, %v3324
    %v3355 = vpop.permute.xlu0 %3354
    %3358 = vset.pattern.permute.xlu0 0
    %3359 = vperm.xlu0 %3358, %v3325
    %v3360 = vpop.permute.xlu0 %3359
    %3363 = vset.pattern.permute.xlu0 0
    %3364 = vperm.xlu0 %3363, %v3326
    %v3365 = vpop.permute.xlu0 %3364
    %v3367 = vadd.f32 %v3311, %v3330
    %v3368 = vadd.f32 %v3312, %v3335
    %v3369 = vadd.f32 %v3313, %v3340
    %v3370 = vadd.f32 %v3314, %v3345
    %v3371 = vadd.f32 %v3315, %v3350
    %v3372 = vadd.f32 %v3316, %v3355
    %v3373 = vadd.f32 %v3317, %v3360
    %v3374 = vadd.f32 %v3318, %v3365
    %v3375 = vmax.f32 %v3367, 0.0
    %v3376 = vmax.f32 %v3368, 0.0
    %v3377 = vmax.f32 %v3369, 0.0
    %v3378 = vmax.f32 %v3370, 0.0
    %v3379 = vmax.f32 %v3371, 0.0
    %v3380 = vmax.f32 %v3372, 0.0
    %v3381 = vmax.f32 %v3373, 0.0
    %v3382 = vmax.f32 %v3374, 0.0
    %v3383 = vadd.f32 %v3375, %v2752
    %v3384 = vadd.f32 %v3376, %v2753
    %v3385 = vadd.f32 %v3377, %v2754
    %v3386 = vadd.f32 %v3378, %v2755
    %v3387 = vadd.f32 %v3379, %v2756
    %v3388 = vadd.f32 %v3380, %v2757
    %v3389 = vadd.f32 %v3381, %v2758
    %v3390 = vadd.f32 %v3382, %v2759
    %v3391 = vmax.f32 %v3383, 0.0
    %v3392 = vmax.f32 %v3384, 0.0
    %v3393 = vmax.f32 %v3385, 0.0
    %v3394 = vmax.f32 %v3386, 0.0
    %v3395 = vmax.f32 %v3387, 0.0
    %v3396 = vmax.f32 %v3388, 0.0
    %v3397 = vmax.f32 %v3389, 0.0
    %v3398 = vmax.f32 %v3390, 0.0
    %v3399 = vld [vmem:[%s2 + $0x2e0] sm:$0xff]
    %v3400 = vld [vmem:[%s2 + $0x2e8] sm:$0xff]
    %v3401 = vld [vmem:[%s2 + $0x2f0] sm:$0xff]
    %v3402 = vld [vmem:[%s2 + $0x2f8] sm:$0xff]
    %v3403 = vld [vmem:[%s2 + $0x300] sm:$0xff]
    %v3404 = vld [vmem:[%s2 + $0x308] sm:$0xff]
    %v3405 = vld [vmem:[%s2 + $0x310] sm:$0xff]
    %v3406 = vld [vmem:[%s2 + $0x318] sm:$0xff]
    %v3407 = vld [vmem:[%s2 + $0x320] sm:$0xff]
    %v3408 = vld [vmem:[%s2 + $0x328] sm:$0xff]
    %v3409 = vld [vmem:[%s2 + $0x330] sm:$0xff]
    %v3410 = vld [vmem:[%s2 + $0x338] sm:$0xff]
    %v3412 = vsel %vm2398, %v3399, 0
    %v3415 = vsel %vm2398, %v3400, 0
    %v3418 = vsel %vm2398, %v3401, 0
    %v3421 = vsel %vm2398, %v3402, 0
    %v3424 = vsel %vm2398, %v3403, 0
    %v3427 = vsel %vm2398, %v3404, 0
    %v3430 = vsel %vm2398, %v3405, 0
    %v3433 = vsel %vm2398, %v3406, 0
    %v3436 = vsel %vm2398, %v3407, 0
    %v3439 = vsel %vm2398, %v3408, 0
    %v3442 = vsel %vm2398, %v3409, 0
    %v3445 = vsel %vm2398, %v3410, 0
    %3447 = vmatprep.subr.mxu0 0.0
    %3448 = vmatpush1.msra.mxu0 0.0
    %3449 = vmatprep.subr.mxu0 0.0
    %3450 = vmatpush1.msra.mxu0 0.0
    %3451 = vmatprep.subr.mxu0 0.0
    %3452 = vmatpush1.msra.mxu0 0.0
    %3453 = vmatprep.subr.mxu0 0.0
    %3454 = vmatpush1.msra.mxu0 0.0
    %3455 = vmatprep.subr.mxu0 0.0
    %3456 = vmatpush1.msra.mxu0 0.0
    %3457 = vmatprep.subr.mxu0 0.0
    %3458 = vmatpush1.msra.mxu0 0.0
    %3459 = vmatprep.subr.mxu0 0.0
    %3460 = vmatpush1.msra.mxu0 0.0
    %3461 = vmatprep.subr.mxu0 0.0
    %3462 = vmatpush1.msra.mxu0 0.0
    %3463 = vmatprep.subr.mxu0 0.0
    %3464 = vmatpush1.msra.mxu0 %v3398
    %3465 = vmatprep.subr.mxu0 0.0
    %3466 = vmatpush1.msra.mxu0 %v3397
    %3467 = vmatprep.subr.mxu0 0.0
    %3468 = vmatpush1.msra.mxu0 %v3396
    %3469 = vmatprep.subr.mxu0 0.0
    %3470 = vmatpush1.msra.mxu0 %v3395
    %3471 = vmatprep.subr.mxu0 0.0
    %3472 = vmatpush1.msra.mxu0 %v3394
    %3473 = vmatprep.subr.mxu0 0.0
    %3474 = vmatpush1.msra.mxu0 %v3393
    %3475 = vmatprep.subr.mxu0 0.0
    %3476 = vmatpush1.msra.mxu0 %v3392
    %3477 = vmatprep.subr.mxu0 0.0
    %3478 = vmatpush1.msra.mxu0 %v3391
    %3479 = vmatprep.subr.mxu0 0.0
    %3480 = vmatpush2.msra.mxu0 0.0
    %3481 = vmatprep.subr.mxu0 0.0
    %3482 = vmatpush2.msra.mxu0 0.0
    %3483 = vmatprep.subr.mxu0 0.0
    %3484 = vmatpush2.msra.mxu0 0.0
    %3485 = vmatprep.subr.mxu0 0.0
    %3486 = vmatpush2.msra.mxu0 0.0
    %3487 = vmatprep.subr.mxu0 0.0
    %3488 = vmatpush2.msra.mxu0 0.0
    %3489 = vmatprep.subr.mxu0 0.0
    %3490 = vmatpush2.msra.mxu0 0.0
    %3491 = vmatprep.subr.mxu0 0.0
    %3492 = vmatpush2.msra.mxu0 0.0
    %3493 = vmatprep.subr.mxu0 0.0
    %3494 = vmatpush2.msra.mxu0 0.0
    %3495 = vmatprep.subr.mxu0 0.0
    %3496 = vmatpush2.msra.mxu0 0.0
    %3497 = vmatprep.subr.mxu0 0.0
    %3498 = vmatpush2.msra.mxu0 0.0
    %3499 = vmatprep.subr.mxu0 0.0
    %3500 = vmatpush2.msra.mxu0 0.0
    %3501 = vmatprep.subr.mxu0 0.0
    %3502 = vmatpush2.msra.mxu0 0.0
    %3503 = vmatprep.subr.mxu0 0.0
    %3504 = vmatpush2.msra.mxu0 0.0
    %3505 = vmatprep.subr.mxu0 0.0
    %3506 = vmatpush2.msra.mxu0 0.0
    %3507 = vmatprep.subr.mxu0 0.0
    %3508 = vmatpush2.msra.mxu0 0.0
    %3509 = vmatprep.subr.mxu0 0.0
    %3510 = vmatpush2.msra.mxu0 0.0
    %3511 = vmatprep.mubr.f32.mxu0 0.0
    %3512 = vmatmul.mubr.f32.gmra.mxu0 %v3412
    %v3513 = vpop.f32.mrf.mxu0
    %v3514 = vadd.f32 0.0, %v3513
    %v3515 = vpop.f32.mrf.mxu0
    %3516 = vmatprep.mubr.f32.mxu0 0.0
    %3517 = vmatmul.mubr.f32.gmra.mxu0 %v3415
    %v3518 = vpop.f32.mrf.mxu0
    %v3519 = vadd.f32 0.0, %v3518
    %v3520 = vpop.f32.mrf.mxu0
    %3521 = vmatprep.mubr.f32.mxu0 0.0
    %3522 = vmatmul.mubr.f32.gmra.mxu0 %v3418
    %v3523 = vpop.f32.mrf.mxu0
    %v3524 = vadd.f32 0.0, %v3523
    %v3525 = vpop.f32.mrf.mxu0
    %3526 = vmatprep.mubr.f32.mxu0 0.0
    %3527 = vmatmul.mubr.f32.gmra.mxu0 %v3421
    %v3528 = vpop.f32.mrf.mxu0
    %v3529 = vadd.f32 0.0, %v3528
    %v3530 = vpop.f32.mrf.mxu0
    %3531 = vmatprep.mubr.f32.mxu0 0.0
    %3532 = vmatmul.mubr.f32.gmra.mxu0 %v3424
    %v3533 = vpop.f32.mrf.mxu0
    %v3534 = vadd.f32 0.0, %v3533
    %v3535 = vpop.f32.mrf.mxu0
    %3536 = vmatprep.mubr.f32.mxu0 0.0
    %3537 = vmatmul.mubr.f32.gmra.mxu0 %v3427
    %v3538 = vpop.f32.mrf.mxu0
    %v3539 = vadd.f32 0.0, %v3538
    %v3540 = vpop.f32.mrf.mxu0
    %3541 = vmatprep.mubr.f32.mxu0 0.0
    %3542 = vmatmul.mubr.f32.gmra.mxu0 %v3430
    %v3543 = vpop.f32.mrf.mxu0
    %v3544 = vadd.f32 0.0, %v3543
    %v3545 = vpop.f32.mrf.mxu0
    %3546 = vmatprep.mubr.f32.mxu0 0.0
    %3547 = vmatmul.mubr.f32.gmra.mxu0 %v3433
    %v3548 = vpop.f32.mrf.mxu0
    %v3549 = vadd.f32 0.0, %v3548
    %v3550 = vpop.f32.mrf.mxu0
    %3551 = vmatprep.mubr.f32.mxu0 0.0
    %3552 = vmatmul.mubr.f32.gmra.mxu0 %v3436
    %v3553 = vpop.f32.mrf.mxu0
    %v3554 = vadd.f32 0.0, %v3553
    %v3555 = vpop.f32.mrf.mxu0
    %3556 = vmatprep.mubr.f32.mxu0 0.0
    %3557 = vmatmul.mubr.f32.gmra.mxu0 %v3439
    %v3558 = vpop.f32.mrf.mxu0
    %v3559 = vadd.f32 0.0, %v3558
    %v3560 = vpop.f32.mrf.mxu0
    %3561 = vmatprep.mubr.f32.mxu0 0.0
    %3562 = vmatmul.mubr.f32.gmra.mxu0 %v3442
    %v3563 = vpop.f32.mrf.mxu0
    %v3564 = vadd.f32 0.0, %v3563
    %v3565 = vpop.f32.mrf.mxu0
    %3566 = vmatprep.mubr.f32.mxu0 0.0
    %3567 = vmatmul.mubr.f32.gmra.mxu0 %v3445
    %v3568 = vpop.f32.mrf.mxu0
    %v3569 = vadd.f32 0.0, %v3568
    %v3570 = vpop.f32.mrf.mxu0
    %3571 = vdwg.mxu0
    %3572 = vrot.lane.b32.xlu0 %v3514, 2
    %v3573 = vpop.permute.xlu0 %3572
    %3574 = vrot.lane.b32.xlu0 %v3519, 2
    %v3575 = vpop.permute.xlu0 %3574
    %3576 = vrot.lane.b32.xlu0 %v3524, 2
    %v3577 = vpop.permute.xlu0 %3576
    %3578 = vrot.lane.b32.xlu0 %v3529, 2
    %v3579 = vpop.permute.xlu0 %3578
    %v3580 = vmul.f32 %v3573, %v2989
    %v3581 = vmul.f32 %v3575, %v2989
    %v3582 = vmul.f32 %v3577, %v2989
    %v3583 = vmul.f32 %v3579, %v2989
    %v3584 = vadd.f32 %v3580, %v3534
    %v3585 = vadd.f32 %v3581, %v3539
    %v3586 = vadd.f32 %v3582, %v3544
    %v3587 = vadd.f32 %v3583, %v3549
    %v3588 = vld [vmem:[%s6 + $0x300] sm:$0xff]
    %v3589 = vld [vmem:[%s6 + $0x308] sm:$0xff]
    %v3590 = vld [vmem:[%s6 + $0x310] sm:$0xff]
    %v3591 = vld [vmem:[%s6 + $0x318] sm:$0xff]
    %3593 = vset.pattern.permute.xlu0 0
    %3594 = vperm.xlu0 %3593, %v3588
    %v3595 = vpop.permute.xlu0 %3594
    %3598 = vset.pattern.permute.xlu0 0
    %3599 = vperm.xlu0 %3598, %v3589
    %v3600 = vpop.permute.xlu0 %3599
    %3603 = vset.pattern.permute.xlu0 0
    %3604 = vperm.xlu0 %3603, %v3590
    %v3605 = vpop.permute.xlu0 %3604
    %3608 = vset.pattern.permute.xlu0 0
    %3609 = vperm.xlu0 %3608, %v3591
    %v3610 = vpop.permute.xlu0 %3609
    %v3612 = vadd.f32 %v3584, %v3595
    %v3613 = vadd.f32 %v3585, %v3600
    %v3614 = vadd.f32 %v3586, %v3605
    %v3615 = vadd.f32 %v3587, %v3610
    %v3616 = vmax.f32 %v3612, 0.0
    %v3617 = vmax.f32 %v3613, 0.0
    %v3618 = vmax.f32 %v3614, 0.0
    %v3619 = vmax.f32 %v3615, 0.0
    %v3620 = vadd.f32 %v3616, %v1522
    %v3621 = vadd.f32 %v3617, %v1527
    %v3622 = vadd.f32 %v3618, %v1532
    %v3623 = vadd.f32 %v3619, %v1537
    %v3624 = vld [vmem:[%s2 + $0x340] sm:$0xff]
    %v3625 = vld [vmem:[%s2 + $0x348] sm:$0xff]
    %v3626 = vld [vmem:[%s2 + $0x350] sm:$0xff]
    %v3627 = vld [vmem:[%s2 + $0x358] sm:$0xff]
    %v3628 = vld [vmem:[%s2 + $0x360] sm:$0xff]
    %v3629 = vld [vmem:[%s2 + $0x368] sm:$0xff]
    %v3630 = vld [vmem:[%s2 + $0x370] sm:$0xff]
    %v3631 = vld [vmem:[%s2 + $0x378] sm:$0xff]
    %v3633 = vsel %vm149, %v3624, 0
    %v3636 = vsel %vm149, %v3625, 0
    %v3639 = vsel %vm149, %v3626, 0
    %v3642 = vsel %vm149, %v3627, 0
    %v3645 = vsel %vm149, %v3628, 0
    %v3648 = vsel %vm149, %v3629, 0
    %v3651 = vsel %vm149, %v3630, 0
    %v3654 = vsel %vm149, %v3631, 0
    %3656 = vmatprep.subr.mxu0 0.0
    %3657 = vmatpush1.msra.mxu0 0.0
    %3658 = vmatprep.subr.mxu0 0.0
    %3659 = vmatpush1.msra.mxu0 0.0
    %3660 = vmatprep.subr.mxu0 0.0
    %3661 = vmatpush1.msra.mxu0 0.0
    %3662 = vmatprep.subr.mxu0 0.0
    %3663 = vmatpush1.msra.mxu0 0.0
    %3664 = vmatprep.subr.mxu0 0.0
    %3665 = vmatpush1.msra.mxu0 0.0
    %3666 = vmatprep.subr.mxu0 0.0
    %3667 = vmatpush1.msra.mxu0 0.0
    %3668 = vmatprep.subr.mxu0 0.0
    %3669 = vmatpush1.msra.mxu0 0.0
    %3670 = vmatprep.subr.mxu0 0.0
    %3671 = vmatpush1.msra.mxu0 0.0
    %3672 = vmatprep.subr.mxu0 0.0
    %3673 = vmatpush1.msra.mxu0 0.0
    %3674 = vmatprep.subr.mxu0 0.0
    %3675 = vmatpush1.msra.mxu0 0.0
    %3676 = vmatprep.subr.mxu0 0.0
    %3677 = vmatpush1.msra.mxu0 0.0
    %3678 = vmatprep.subr.mxu0 0.0
    %3679 = vmatpush1.msra.mxu0 0.0
    %3680 = vmatprep.subr.mxu0 0.0
    %3681 = vmatpush1.msra.mxu0 %v3623
    %3682 = vmatprep.subr.mxu0 0.0
    %3683 = vmatpush1.msra.mxu0 %v3622
    %3684 = vmatprep.subr.mxu0 0.0
    %3685 = vmatpush1.msra.mxu0 %v3621
    %3686 = vmatprep.subr.mxu0 0.0
    %3687 = vmatpush1.msra.mxu0 %v3620
    %3688 = vmatprep.subr.mxu0 0.0
    %3689 = vmatpush2.msra.mxu0 0.0
    %3690 = vmatprep.subr.mxu0 0.0
    %3691 = vmatpush2.msra.mxu0 0.0
    %3692 = vmatprep.subr.mxu0 0.0
    %3693 = vmatpush2.msra.mxu0 0.0
    %3694 = vmatprep.subr.mxu0 0.0
    %3695 = vmatpush2.msra.mxu0 0.0
    %3696 = vmatprep.subr.mxu0 0.0
    %3697 = vmatpush2.msra.mxu0 0.0
    %3698 = vmatprep.subr.mxu0 0.0
    %3699 = vmatpush2.msra.mxu0 0.0
    %3700 = vmatprep.subr.mxu0 0.0
    %3701 = vmatpush2.msra.mxu0 0.0
    %3702 = vmatprep.subr.mxu0 0.0
    %3703 = vmatpush2.msra.mxu0 0.0
    %3704 = vmatprep.subr.mxu0 0.0
    %3705 = vmatpush2.msra.mxu0 0.0
    %3706 = vmatprep.subr.mxu0 0.0
    %3707 = vmatpush2.msra.mxu0 0.0
    %3708 = vmatprep.subr.mxu0 0.0
    %3709 = vmatpush2.msra.mxu0 0.0
    %3710 = vmatprep.subr.mxu0 0.0
    %3711 = vmatpush2.msra.mxu0 0.0
    %3712 = vmatprep.subr.mxu0 0.0
    %3713 = vmatpush2.msra.mxu0 0.0
    %3714 = vmatprep.subr.mxu0 0.0
    %3715 = vmatpush2.msra.mxu0 0.0
    %3716 = vmatprep.subr.mxu0 0.0
    %3717 = vmatpush2.msra.mxu0 0.0
    %3718 = vmatprep.subr.mxu0 0.0
    %3719 = vmatpush2.msra.mxu0 0.0
    %3720 = vmatprep.mubr.f32.mxu0 0.0
    %3721 = vmatmul.mubr.f32.gmra.mxu0 %v3633
    %v3722 = vpop.f32.mrf.mxu0
    %v3723 = vadd.f32 0.0, %v3722
    %v3724 = vpop.f32.mrf.mxu0
    %3725 = vmatprep.mubr.f32.mxu0 0.0
    %3726 = vmatmul.mubr.f32.gmra.mxu0 %v3636
    %v3727 = vpop.f32.mrf.mxu0
    %v3728 = vadd.f32 0.0, %v3727
    %v3729 = vpop.f32.mrf.mxu0
    %3730 = vmatprep.mubr.f32.mxu0 0.0
    %3731 = vmatmul.mubr.f32.gmra.mxu0 %v3639
    %v3732 = vpop.f32.mrf.mxu0
    %v3733 = vadd.f32 0.0, %v3732
    %v3734 = vpop.f32.mrf.mxu0
    %3735 = vmatprep.mubr.f32.mxu0 0.0
    %3736 = vmatmul.mubr.f32.gmra.mxu0 %v3642
    %v3737 = vpop.f32.mrf.mxu0
    %v3738 = vadd.f32 0.0, %v3737
    %v3739 = vpop.f32.mrf.mxu0
    %3740 = vmatprep.mubr.f32.mxu0 0.0
    %3741 = vmatmul.mubr.f32.gmra.mxu0 %v3645
    %v3742 = vpop.f32.mrf.mxu0
    %v3743 = vadd.f32 0.0, %v3742
    %v3744 = vpop.f32.mrf.mxu0
    %3745 = vmatprep.mubr.f32.mxu0 0.0
    %3746 = vmatmul.mubr.f32.gmra.mxu0 %v3648
    %v3747 = vpop.f32.mrf.mxu0
    %v3748 = vadd.f32 0.0, %v3747
    %v3749 = vpop.f32.mrf.mxu0
    %3750 = vmatprep.mubr.f32.mxu0 0.0
    %3751 = vmatmul.mubr.f32.gmra.mxu0 %v3651
    %v3752 = vpop.f32.mrf.mxu0
    %v3753 = vadd.f32 0.0, %v3752
    %v3754 = vpop.f32.mrf.mxu0
    %3755 = vmatprep.mubr.f32.mxu0 0.0
    %3756 = vmatmul.mubr.f32.gmra.mxu0 %v3654
    %v3757 = vpop.f32.mrf.mxu0
    %v3758 = vadd.f32 0.0, %v3757
    %v3759 = vpop.f32.mrf.mxu0
    %3760 = vdwg.mxu0
    %3761 = vrot.lane.b32.xlu0 %v3723, 2
    %v3762 = vpop.permute.xlu0 %3761
    %3763 = vrot.lane.b32.xlu0 %v3728, 2
    %v3764 = vpop.permute.xlu0 %3763
    %3765 = vrot.lane.b32.xlu0 %v3733, 2
    %v3766 = vpop.permute.xlu0 %3765
    %3767 = vrot.lane.b32.xlu0 %v3738, 2
    %v3768 = vpop.permute.xlu0 %3767
    %v3769 = vmul.f32 %v3762, %v2989
    %v3770 = vmul.f32 %v3764, %v2989
    %v3771 = vmul.f32 %v3766, %v2989
    %v3772 = vmul.f32 %v3768, %v2989
    %v3773 = vadd.f32 %v3769, %v3743
    %v3774 = vadd.f32 %v3770, %v3748
    %v3775 = vadd.f32 %v3771, %v3753
    %v3776 = vadd.f32 %v3772, %v3758
    %v3777 = vld [vmem:[%s6 + $0x320] sm:$0xff]
    %v3778 = vld [vmem:[%s6 + $0x328] sm:$0xff]
    %v3779 = vld [vmem:[%s6 + $0x330] sm:$0xff]
    %v3780 = vld [vmem:[%s6 + $0x338] sm:$0xff]
    %3782 = vset.pattern.permute.xlu0 0
    %3783 = vperm.xlu0 %3782, %v3777
    %v3784 = vpop.permute.xlu0 %3783
    %3787 = vset.pattern.permute.xlu0 0
    %3788 = vperm.xlu0 %3787, %v3778
    %v3789 = vpop.permute.xlu0 %3788
    %3792 = vset.pattern.permute.xlu0 0
    %3793 = vperm.xlu0 %3792, %v3779
    %v3794 = vpop.permute.xlu0 %3793
    %3797 = vset.pattern.permute.xlu0 0
    %3798 = vperm.xlu0 %3797, %v3780
    %v3799 = vpop.permute.xlu0 %3798
    %v3801 = vadd.f32 %v3773, %v3784
    %v3802 = vadd.f32 %v3774, %v3789
    %v3803 = vadd.f32 %v3775, %v3794
    %v3804 = vadd.f32 %v3776, %v3799
    %v3805 = vmax.f32 %v3801, 0.0
    %v3806 = vmax.f32 %v3802, 0.0
    %v3807 = vmax.f32 %v3803, 0.0
    %v3808 = vmax.f32 %v3804, 0.0
    %v3809 = vld [vmem:[%s6 + $0x340] sm:$0xff]
    %v3810 = vld [vmem:[%s6 + $0x348] sm:$0xff]
    %v3811 = vld [vmem:[%s6 + $0x350] sm:$0xff]
    %v3812 = vld [vmem:[%s6 + $0x358] sm:$0xff]
    %3814 = vset.pattern.permute.xlu0 0
    %3815 = vperm.xlu0 %3814, %v3809
    %v3816 = vpop.permute.xlu0 %3815
    %3819 = vset.pattern.permute.xlu0 0
    %3820 = vperm.xlu0 %3819, %v3810
    %v3821 = vpop.permute.xlu0 %3820
    %3824 = vset.pattern.permute.xlu0 0
    %3825 = vperm.xlu0 %3824, %v3811
    %v3826 = vpop.permute.xlu0 %3825
    %3829 = vset.pattern.permute.xlu0 0
    %3830 = vperm.xlu0 %3829, %v3812
    %v3831 = vpop.permute.xlu0 %3830
    %v3833 = vadd.f32 %v3554, %v3816
    %v3834 = vadd.f32 %v3559, %v3821
    %v3835 = vadd.f32 %v3564, %v3826
    %v3836 = vadd.f32 %v3569, %v3831
    %v3837 = vadd.f32 %v3805, %v3833
    %v3838 = vadd.f32 %v3806, %v3834
    %v3839 = vadd.f32 %v3807, %v3835
    %v3840 = vadd.f32 %v3808, %v3836
    %v3841 = vmax.f32 %v3837, 0.0
    %v3842 = vmax.f32 %v3838, 0.0
    %v3843 = vmax.f32 %v3839, 0.0
    %v3844 = vmax.f32 %v3840, 0.0
    %v3845 = vld [vmem:[%s7] sm:$0xff]
    %v3846 = vld [vmem:[%s7 + $0x8] sm:$0xff]
    %v3847 = vld [vmem:[%s7 + $0x10] sm:$0xff]
    %v3848 = vld [vmem:[%s7 + $0x18] sm:$0xff]
    %v3849 = vmul.f32 %v3841, %v3845
    %v3850 = vmul.f32 %v3842, %v3846
    %v3851 = vmul.f32 %v3843, %v3847
    %v3852 = vmul.f32 %v3844, %v3848
    %v3853 = vld [vmem:[%s8] sm:$0xff]
    %v3854 = vld [vmem:[%s8 + $0x8] sm:$0xff]
    %v3855 = vld [vmem:[%s8 + $0x10] sm:$0xff]
    %v3856 = vld [vmem:[%s8 + $0x18] sm:$0xff]
    %v3857 = vld [vmem:[%s8 + $0x20] sm:$0xff]
    %v3858 = vld [vmem:[%s8 + $0x28] sm:$0xff]
    %v3859 = vld [vmem:[%s8 + $0x30] sm:$0xff]
    %v3860 = vld [vmem:[%s8 + $0x38] sm:$0xff]
    %v3861 = vld [vmem:[%s8 + $0x40] sm:$0xff]
    %v3862 = vld [vmem:[%s8 + $0x48] sm:$0xff]
    %v3863 = vld [vmem:[%s8 + $0x50] sm:$0xff]
    %v3864 = vld [vmem:[%s8 + $0x58] sm:$0xff]
    %v3865 = vld [vmem:[%s8 + $0x60] sm:$0xff]
    %v3866 = vld [vmem:[%s8 + $0x68] sm:$0xff]
    %v3867 = vld [vmem:[%s8 + $0x70] sm:$0xff]
    %v3868 = vld [vmem:[%s8 + $0x78] sm:$0xff]
    %3869 = vmatprep.subr.mxu0 0.0
    %3870 = vmatpush1.msra.mxu0 %v3868
    %3871 = vmatprep.subr.mxu0 0.0
    %3872 = vmatpush1.msra.mxu0 %v3867
    %3873 = vmatprep.subr.mxu0 0.0
    %3874 = vmatpush1.msra.mxu0 %v3866
    %3875 = vmatprep.subr.mxu0 0.0
    %3876 = vmatpush1.msra.mxu0 %v3865
    %3877 = vmatprep.subr.mxu0 0.0
    %3878 = vmatpush1.msra.mxu0 %v3864
    %3879 = vmatprep.subr.mxu0 0.0
    %3880 = vmatpush1.msra.mxu0 %v3863
    %3881 = vmatprep.subr.mxu0 0.0
    %3882 = vmatpush1.msra.mxu0 %v3862
    %3883 = vmatprep.subr.mxu0 0.0
    %3884 = vmatpush1.msra.mxu0 %v3861
    %3885 = vmatprep.subr.mxu0 0.0
    %3886 = vmatpush1.msra.mxu0 %v3860
    %3887 = vmatprep.subr.mxu0 0.0
    %3888 = vmatpush1.msra.mxu0 %v3859
    %3889 = vmatprep.subr.mxu0 0.0
    %3890 = vmatpush1.msra.mxu0 %v3858
    %3891 = vmatprep.subr.mxu0 0.0
    %3892 = vmatpush1.msra.mxu0 %v3857
    %3893 = vmatprep.subr.mxu0 0.0
    %3894 = vmatpush1.msra.mxu0 %v3856
    %3895 = vmatprep.subr.mxu0 0.0
    %3896 = vmatpush1.msra.mxu0 %v3855
    %3897 = vmatprep.subr.mxu0 0.0
    %3898 = vmatpush1.msra.mxu0 %v3854
    %3899 = vmatprep.subr.mxu0 0.0
    %3900 = vmatpush1.msra.mxu0 %v3853
    %3901 = vmatprep.subr.mxu0 0.0
    %3902 = vmatpush2.msra.mxu0 0.0
    %3903 = vmatprep.subr.mxu0 0.0
    %3904 = vmatpush2.msra.mxu0 0.0
    %3905 = vmatprep.subr.mxu0 0.0
    %3906 = vmatpush2.msra.mxu0 0.0
    %3907 = vmatprep.subr.mxu0 0.0
    %3908 = vmatpush2.msra.mxu0 0.0
    %3909 = vmatprep.subr.mxu0 0.0
    %3910 = vmatpush2.msra.mxu0 0.0
    %3911 = vmatprep.subr.mxu0 0.0
    %3912 = vmatpush2.msra.mxu0 0.0
    %3913 = vmatprep.subr.mxu0 0.0
    %3914 = vmatpush2.msra.mxu0 0.0
    %3915 = vmatprep.subr.mxu0 0.0
    %3916 = vmatpush2.msra.mxu0 0.0
    %3917 = vmatprep.subr.mxu0 0.0
    %3918 = vmatpush2.msra.mxu0 0.0
    %3919 = vmatprep.subr.mxu0 0.0
    %3920 = vmatpush2.msra.mxu0 0.0
    %3921 = vmatprep.subr.mxu0 0.0
    %3922 = vmatpush2.msra.mxu0 0.0
    %3923 = vmatprep.subr.mxu0 0.0
    %3924 = vmatpush2.msra.mxu0 0.0
    %3925 = vmatprep.subr.mxu0 0.0
    %3926 = vmatpush2.msra.mxu0 0.0
    %3927 = vmatprep.subr.mxu0 0.0
    %3928 = vmatpush2.msra.mxu0 0.0
    %3929 = vmatprep.subr.mxu0 0.0
    %3930 = vmatpush2.msra.mxu0 0.0
    %3931 = vmatprep.subr.mxu0 0.0
    %3932 = vmatpush2.msra.mxu0 0.0
    %3933 = vmatprep.mubr.f32.mxu0 0.0
    %3934 = vmatmul.mubr.f32.gmra.mxu0 %v3849
    %v3935 = vpop.f32.mrf.mxu0
    %v3936 = vadd.f32 0.0, %v3935
    %v3937 = vpop.f32.mrf.mxu0
    %3938 = vmatprep.mubr.f32.mxu0 0.0
    %3939 = vmatmul.mubr.f32.gmra.mxu0 %v3850
    %v3940 = vpop.f32.mrf.mxu0
    %v3941 = vadd.f32 0.0, %v3940
    %v3942 = vpop.f32.mrf.mxu0
    %3943 = vmatprep.mubr.f32.mxu0 0.0
    %3944 = vmatmul.mubr.f32.gmra.mxu0 %v3851
    %v3945 = vpop.f32.mrf.mxu0
    %v3946 = vadd.f32 0.0, %v3945
    %v3947 = vpop.f32.mrf.mxu0
    %3948 = vmatprep.mubr.f32.mxu0 0.0
    %3949 = vmatmul.mubr.f32.gmra.mxu0 %v3852
    %v3950 = vpop.f32.mrf.mxu0
    %v3951 = vadd.f32 0.0, %v3950
    %v3952 = vpop.f32.mrf.mxu0
    %3953 = vdwg.mxu0
    %v3954 = vsel %vm1282, %v3936, 0.0
    %v3955 = vsel %vm1282, %v3941, 0.0
    %v3956 = vadd.f32 %v3954, %v3955
    %v3957 = vsel %vm1282, %v3946, 0.0
    %v3958 = vadd.f32 %v3956, %v3957
    %v3959 = vsel %vm1282, %v3951, 0.0
    %v3960 = vadd.f32 %v3958, %v3959
    %v3961 = vrot.slane %v3960, 4
    %v3962 = vadd.f32 %v3960, %v3961
    %v3963 = vrot.slane %v3962, 2
    %v3964 = vadd.f32 %v3962, %v3963
    %v3965 = vrot.slane %v3964, 1
    %v3966 = vadd.f32 %v3964, %v3965
    %v3967 = vld [vmem:[%s6 + $0x360] sm:$0x1]
    %3969 = vset.pattern.permute.xlu0 0
    %3970 = vperm.xlu0 %3969, %v3967
    %v3971 = vpop.permute.xlu0 %3970
    %v3973 = vadd.f32 %v3966, %v3971
    %vm3974 = vcmask 57344
    %3975 = vst.msk [vmem:[#allocation2] sm:$0x1] %vm3974, %v3973
    // Predicated region
    $region38: #{tpu_custom_call.1} parent=1 // pred_check
      _
    $region39: #{tpu_custom_call.1} parent=1 // pred_check_branch
      %3977 = sbr.rel (0) target = $region41
    $region40: #{tpu_custom_call.1} parent=1 // pred_region
      %s3979 = ssub.s32 16, 16
      %3980 = vsyncadd [#allocation3], %s3979
      %s3982 = sshll.u32 [#allocation2], 4
      %s3983 = int_to_ptr.vmem [resolvable:$true] %s3982
      %3985 = dma.vmem_to_hbm [thread:$0]  %s3983, 16, %s9, [#allocation3]
    $region41: #{tpu_custom_call.1} parent=1 // pred_fallthru
      _
    // Predicated region
    $region42: #{tpu_custom_call.1} parent=1 // pred_check
      _
    $region43: #{tpu_custom_call.1} parent=1 // pred_check_branch
      %3987 = sbr.rel (0) target = $region45
    $region44: #{tpu_custom_call.1} parent=1 // pred_region
      %3988 = dma.done [#allocation3], 16
    $region45: #{tpu_custom_call.1} parent=1 // pred_fallthru
      _
    %3989 = vsyncpa [#allocation3], 1

</llo_original>
